<compile_context>
chip_gen: v6e
topology: v6e:2x2x1
jax: 0.10.0
libtpu: 0.0.40
codegen_flags: <defaults>
</compile_context>

<pallas_src>
import functools
import math

import numpy as np
import jax
import jax.numpy as jnp
from jax.experimental import pallas as pl
from jax.experimental.pallas import tpu as pltpu


# ----------------------------------------------------------------------------
# Pallas kernels
# ----------------------------------------------------------------------------
def _matmul_affine_kernel(x_ref, w_ref, s_ref, b_ref, o_ref, *, relu):
    """o = relu?( (x @ w) * scale + shift )  -- conv-as-matmul (+ eval BatchNorm).

    x arrives f32 and is cast to bf16 at the MXU boundary; w is stored bf16;
    accumulation and the affine/ReLU epilogue stay in f32.
    """
    y = jnp.dot(x_ref[...].astype(jnp.bfloat16), w_ref[...],
                preferred_element_type=jnp.float32)
    y = y * s_ref[...] + b_ref[...]
    if relu:
        y = jnp.maximum(y, 0.0)
    o_ref[...] = y


def matmul_affine(x, w_bf16, scale, shift, *, relu, block_m=512):
    """Conv-as-matmul with fused eval-BatchNorm + ReLU.  M is tiled (parallel
    grid) once it grows past `block_m`; at toy sizes this is a single block."""
    M, K = x.shape
    N = w_bf16.shape[1]
    bm = min(block_m, M)
    if M % bm != 0:            # ragged M at small sizes -> single full block
        bm = M
    return pl.pallas_call(
        functools.partial(_matmul_affine_kernel, relu=relu),
        out_shape=jax.ShapeDtypeStruct((M, N), jnp.float32),
        grid=(M // bm,),
        in_specs=[
            pl.BlockSpec((bm, K), lambda i: (i, 0)),
            pl.BlockSpec((K, N), lambda i: (0, 0)),
            pl.BlockSpec((1, N), lambda i: (0, 0)),
            pl.BlockSpec((1, N), lambda i: (0, 0)),
        ],
        out_specs=pl.BlockSpec((bm, N), lambda i: (i, 0)),
        compiler_params=pltpu.CompilerParams(dimension_semantics=("parallel",)),
    )(x, w_bf16, scale, shift)


def _erf(x):
    # Abramowitz & Stegun 7.1.26 (|err| <= 1.5e-7 -> float32-exact for GELU);
    # avoids relying on an erf lowering inside Mosaic.
    a1, a2, a3, a4, a5 = 0.254829592, -0.284496736, 1.421413741, -1.453152027, 1.061405429
    p = 0.3275911
    sgn = jnp.where(x >= 0.0, 1.0, -1.0)
    ax = jnp.abs(x)
    t = 1.0 / (1.0 + p * ax)
    poly = ((((a5 * t + a4) * t + a3) * t + a2) * t + a1) * t
    return sgn * (1.0 - poly * jnp.exp(-ax * ax))


def _gelu_exact(x):
    # matches torch.nn.GELU() (approximate='none')
    return 0.5 * x * (1.0 + _erf(x * 0.7071067811865476))


def _s4d_stack_kernel(x_ref, k_ref, w_ref, b_ref, g_ref, be_ref,
                      dw_ref, db_ref, o_ref, *, B, L):
    """All S4D layers + residual + post-LN + mean-pool + decoder, whole batch.

    Batch is folded onto the row (sublane) axis; H = d_model = 128 lives on the
    128-lane axis:
      x_ref  (B*L, H)    activations (f32), batch-major blocks of L rows
      k_ref  (NL, L, H)  SSM kernels, time-major, D-skip folded into tap 0 (f32)
      w_ref  (NL, H, 2H) 1x1-conv weights W^T (bf16);  b_ref (NL, 1, 2H) bias
      g_ref / be_ref (NL, 1, H)  LayerNorm affine
      dw_ref (H, O)      decoder weight;  db_ref (1, O) decoder bias
      o_ref  (B, O)
    """
    n_layers, _, H = k_ref.shape
    BL = x_ref.shape[0]
    x = x_ref[...]                                           # (B*L, H) f32
    # time index within each batch element; hoisted once, reused by all masks
    l_idx = jax.lax.broadcasted_iota(jnp.int32, (BL, 1), 0) % L

    for layer in range(n_layers):
        k = k_ref[layer]                                     # (L, H), k[0] includes D
        # causal depthwise convolution along time: y[l] = sum_{s<=l} k[s] * x[l-s]
        # (== the rfft/irfft path of S4D).  Time shifts are XLU sublane rotates;
        # the mask kills both the causal wrap-around and cross-batch leakage.
        y = x * k[0:1, :]
        for s in range(1, L):
            shifted = pltpu.roll(x, shift=s, axis=0)
            shifted = jnp.where(l_idx >= s, shifted, 0.0)
            y = y + shifted * k[s:s + 1, :]
        y = _gelu_exact(y)                                   # GELU (dropout = id, eval)

        # output_linear: Conv1d(H, 2H, 1) as (B*L,H)@(H,2H) on the MXU, then GLU
        z = jnp.dot(y.astype(jnp.bfloat16), w_ref[layer],
                    preferred_element_type=jnp.float32) + b_ref[layer]   # (B*L, 2H)
        zg = z[:, :H] * jax.nn.sigmoid(z[:, H:])             # GLU over channels

        # residual + post-norm LayerNorm over the channel (lane) axis
        xr = zg + x
        mu = jnp.mean(xr, axis=1, keepdims=True)
        var = jnp.mean(jnp.square(xr - mu), axis=1, keepdims=True)
        x = (xr - mu) * jax.lax.rsqrt(var + 1e-5) * g_ref[layer] + be_ref[layer]

    # mean over sequence (per batch element) + decoder Linear(H -> d_output)
    pooled = jnp.concatenate(
        [jnp.mean(x[b * L:(b + 1) * L, :], axis=0, keepdims=True) for b in range(B)],
        axis=0)                                              # (B, H)
    o_ref[...] = jnp.dot(pooled, dw_ref[...],
                         preferred_element_type=jnp.float32) + db_ref[...]


def s4d_stack(x, k_all, w_all, b_all, g_all, be_all, dec_w, dec_b, *, B, L):
    BL, H = x.shape
    NL = k_all.shape[0]
    O = dec_w.shape[1]
    return pl.pallas_call(
        functools.partial(_s4d_stack_kernel, B=B, L=L),
        out_shape=jax.ShapeDtypeStruct((B, O), jnp.float32),
        grid=(1,),
        in_specs=[
            pl.BlockSpec((BL, H), lambda i: (0, 0)),
            pl.BlockSpec((NL, L, H), lambda i: (0, 0, 0)),
            pl.BlockSpec((NL, H, 2 * H), lambda i: (0, 0, 0)),
            pl.BlockSpec((NL, 1, 2 * H), lambda i: (0, 0, 0)),
            pl.BlockSpec((NL, 1, H), lambda i: (0, 0, 0)),
            pl.BlockSpec((NL, 1, H), lambda i: (0, 0, 0)),
            pl.BlockSpec((H, O), lambda i: (0, 0)),
            pl.BlockSpec((1, O), lambda i: (0, 0)),
        ],
        out_specs=pl.BlockSpec((B, O), lambda i: (0, 0)),
    )(x, k_all, w_all, b_all, g_all, be_all, dec_w, dec_b)


# ----------------------------------------------------------------------------
# Plain-JAX glue: parameter setup, channel-last im2col, SSM kernel generation
# ----------------------------------------------------------------------------
def im2col_nlc(x, k, stride):
    """x: (B, L, C) -> (B, L_out, k*C); patch inner order (kw, c) matches the
    weight matrices built in init_params (channel-last everywhere)."""
    B, L, C = x.shape
    L_out = (L - k) // stride + 1
    idx = jnp.arange(L_out)[:, None] * stride + jnp.arange(k)[None, :]   # (L_out, k)
    patches = x[:, idx, :]                                               # (B, L_out, k, C)
    return patches.reshape(B, L_out, k * C)


def make_sinc_filters(out_channels=16, kernel_size=251, sample_rate=30225,
                      min_low_hz=50.0, min_band_hz=50.0):
    """SincConv_fast band-pass filters at their deterministic mel-spaced init."""
    to_mel = lambda hz: 2595.0 * np.log10(1.0 + hz / 700.0)
    to_hz = lambda mel: 700.0 * (10.0 ** (mel / 2595.0) - 1.0)
    low_hz, high_hz = 30.0, sample_rate / 2.0 - (min_low_hz + min_band_hz)
    hz = to_hz(np.linspace(to_mel(low_hz), to_mel(high_hz), out_channels + 1))
    low_hz_ = hz[:-1].reshape(-1, 1)
    band_hz_ = np.diff(hz).reshape(-1, 1)
    n_lin = np.linspace(0.0, kernel_size / 2.0 - 1.0, int(kernel_size / 2))
    window_ = 0.54 - 0.46 * np.cos(2.0 * np.pi * n_lin / kernel_size)
    n_half = (kernel_size - 1) / 2.0
    n_ = 2.0 * np.pi * np.arange(-n_half, 0.0).reshape(1, -1) / sample_rate
    low = min_low_hz + np.abs(low_hz_)
    high = np.clip(low + min_band_hz + np.abs(band_hz_), min_low_hz, sample_rate / 2.0)
    band = (high - low)[:, 0]
    bp_left = ((np.sin(high @ n_) - np.sin(low @ n_)) / (n_ / 2.0)) * window_
    bp_center = 2.0 * band.reshape(-1, 1)
    bp_right = bp_left[:, ::-1]
    band_pass = np.concatenate([bp_left, bp_center, bp_right], axis=1)
    band_pass = band_pass / (2.0 * band[:, None])
    return band_pass.astype(np.float32)                       # (out_channels, kernel_size)


def s4d_ssm_kernel(log_dt, C_re, C_im, log_A_real, A_imag, L):
    """Replicates S4DKernel.forward(L) -> K of shape (H, L)."""
    dt = jnp.exp(log_dt)[:, None]                              # (H, 1)
    A = -jnp.exp(log_A_real) + 1j * A_imag                     # (H, N/2) complex
    dtA = A * dt
    C = (C_re + 1j * C_im) * (jnp.exp(dtA) - 1.0) / A
    t = jnp.arange(L, dtype=jnp.float32)
    K = jnp.exp(dtA[:, :, None] * t[None, None, :])            # (H, N/2, L)
    return (2.0 * jnp.einsum('hn,hnl->hl', C, K).real).astype(jnp.float32)


def init_params(key, d_output=10, d_model=128, n_layers=4, d_state=64):
    keys = iter(jax.random.split(key, 64))
    p = {}
    # SincConv_fast(16, 251) and SFEB conv1 (64,16,1,15) have no nonlinearity
    # between them -> compose into a single conv 1->64, k=251+15-1=265, stride 8.
    sinc = jnp.asarray(make_sinc_filters())                     # (16, 251)
    w1 = jax.random.normal(next(keys), (64, 16, 15), jnp.float32) * np.sqrt(2.0 / (16 * 15))
    w2 = jax.random.normal(next(keys), (128, 64, 6), jnp.float32) * np.sqrt(2.0 / (64 * 6))
    comb = jnp.zeros((64, 251 + 15 - 1), jnp.float32)
    for kw in range(15):
        comb = comb.at[:, kw:kw + 251].add(jnp.einsum('oc,ct->ot', w1[:, :, kw], sinc))
    # Zero-pad conv1's 64 output channels to 128 so every Pallas matmul writes a
    # lane-dense (multiple-of-128) output; the padded channels are exactly 0 and
    # the padded conv2 input weights are 0, so results are unchanged.
    comb_pad = jnp.zeros((128, 265), jnp.float32).at[:64].set(comb)
    p['w_comb_T'] = comb_pad.T.astype(jnp.bfloat16)             # (265, 128), bf16 MXU operand
    w2_pad = jnp.zeros((128, 128, 6), jnp.float32).at[:, :64, :].set(w2)
    # conv2 weight in (kw, c_in) inner order to match channel-last im2col
    p['w2_T'] = jnp.transpose(w2_pad, (2, 1, 0)).reshape(6 * 128, 128).astype(jnp.bfloat16)
    eps = 1e-5
    p['bn1_scale'] = jnp.concatenate(
        [jnp.full((1, 64), 1.0 / np.sqrt(1.0 + eps), jnp.float32),
         jnp.ones((1, 64), jnp.float32)], axis=1)               # pad channels: identity
    p['bn1_shift'] = jnp.zeros((1, 128), jnp.float32)
    p['bn2_scale'] = jnp.full((1, 128), 1.0 / np.sqrt(1.0 + eps), jnp.float32)
    p['bn2_shift'] = jnp.zeros((1, 128), jnp.float32)
    # S4D layers: SSM params kept per layer (kernel is L-dependent, built in glue),
    # all other per-layer tensors stacked along a leading layer axis for the fused kernel.
    H, N2 = d_model, d_state // 2
    layers, Ds, Ws, bs, gs, bes = [], [], [], [], [], []
    for _ in range(n_layers):
        lk = {}
        lk['log_dt'] = (jax.random.uniform(next(keys), (H,), jnp.float32)
                        * (math.log(0.1) - math.log(0.001)) + math.log(0.001))
        c = jax.random.normal(next(keys), (H, N2, 2), jnp.float32) * np.sqrt(0.5)
        lk['C_re'], lk['C_im'] = c[..., 0], c[..., 1]
        lk['log_A_real'] = jnp.log(0.5 * jnp.ones((H, N2), jnp.float32))
        lk['A_imag'] = jnp.tile(np.pi * jnp.arange(N2, dtype=jnp.float32)[None, :], (H, 1))
        layers.append(lk)
        Ds.append(jax.random.normal(next(keys), (1, H), jnp.float32))
        w_out = jax.random.normal(next(keys), (2 * H, H), jnp.float32) / np.sqrt(H)
        Ws.append(w_out.T)                                      # (H, 2H) = W^T
        bs.append((jax.random.uniform(next(keys), (1, 2 * H), jnp.float32) - 0.5)
                  * (2.0 / np.sqrt(H)))
        gs.append(jnp.ones((1, H), jnp.float32))
        bes.append(jnp.zeros((1, H), jnp.float32))
    p['layers'] = layers
    p['D_all'] = jnp.stack(Ds)                                  # (NL, 1, H)
    p['Wlin_all'] = jnp.stack(Ws).astype(jnp.bfloat16)          # (NL, H, 2H) bf16
    p['blin_all'] = jnp.stack(bs)                               # (NL, 1, 2H)
    p['gamma_all'] = jnp.stack(gs)                              # (NL, 1, H)
    p['beta_all'] = jnp.stack(bes)                              # (NL, 1, H)
    # decoder Linear(d_model, d_output)
    p['dec_w_T'] = jax.random.normal(next(keys), (d_model, d_output), jnp.float32) / np.sqrt(d_model)
    p['dec_b'] = (jax.random.uniform(next(keys), (1, d_output), jnp.float32) - 0.5) * (2.0 / np.sqrt(d_model))
    return p


# ----------------------------------------------------------------------------
# Full forward pass (prenorm=False, i.e. the module's default post-norm path)
# ----------------------------------------------------------------------------
def s4model_forward(x, params):
    B, L, _ = x.shape
    x = x.astype(jnp.float32)                                   # (B, L, 1), channel-last

    # fused SincConv(1->16,k=251,s=1) o Conv1(16->64,k=15,s=8) + BN1 + ReLU
    # (output channel-padded 64->128 with zeros; lane-dense stores)
    p1 = im2col_nlc(x, 265, 8)                                  # (B, L2, 265)
    L2 = p1.shape[1]
    h1 = matmul_affine(p1.reshape(B * L2, -1), params['w_comb_T'],
                       params['bn1_scale'], params['bn1_shift'], relu=True)
    h1 = h1.reshape(B, L2, 128)

    # SFEB conv2: Conv2d(64->128, (1,6), stride (1,2)) + BN2 + ReLU
    p2 = im2col_nlc(h1, 6, 2)                                   # (B, L3, 768)
    L3 = p2.shape[1]
    h2 = matmul_affine(p2.reshape(B * L3, -1), params['w2_T'],
                       params['bn2_scale'], params['bn2_shift'], relu=True)
    x_seq = h2.reshape(B * L3, 128)                             # (B*L3, H), batch folded onto rows

    # per-layer SSM kernels (tiny complex math; plain JAX), time-major (L3, H);
    # fold the D skip connection into tap 0 of each kernel.
    ks = jnp.stack([
        s4d_ssm_kernel(lp['log_dt'], lp['C_re'], lp['C_im'],
                       lp['log_A_real'], lp['A_imag'], L3).T
        for lp in params['layers']], axis=0)                    # (NL, L3, H)
    ks = ks.at[:, 0, :].add(params['D_all'][:, 0, :])

    # fused: 4x (S4D + residual + post-LN) + mean-pool + decoder in ONE kernel
    return s4d_stack(x_seq, ks, params['Wlin_all'], params['blin_all'],
                     params['gamma_all'], params['beta_all'],
                     params['dec_w_T'], params['dec_b'], B=B, L=L3)


if __name__ == "__main__":
    key = jax.random.PRNGKey(0)
    kx, kp = jax.random.split(key)
    # L=417 -> composed sinc+conv1: 20 -> conv2: 8 time steps, d_model=128
    B, L, d_input = 2, 417, 1
    x = jax.random.normal(kx, (B, L, d_input), dtype=jnp.float32)
    params = init_params(kp)

    out = jax.jit(s4model_forward)(x, params)
    out = jax.block_until_ready(out)
    assert out.shape == (B, 10) and out.dtype == jnp.float32
    assert bool(jnp.all(jnp.isfinite(out)))
    print("KERNEL_OK")
</pallas_src>

<mosaic_0001>
module attributes {stable_mosaic.version = 11 : i64} {
  func.func @_matmul_affine_kernel(%arg0: i32, %arg1: memref<40x265xf32, #tpu.memory_space<vmem>>, %arg2: memref<265x128xbf16, #tpu.memory_space<vmem>>, %arg3: memref<1x128xf32, #tpu.memory_space<vmem>>, %arg4: memref<1x128xf32, #tpu.memory_space<vmem>>, %arg5: memref<40x128xf32, #tpu.memory_space<vmem>>) attributes {dimension_semantics = [#tpu.dimension_semantics<parallel>], iteration_bounds = array<i64: 1>, scalar_prefetch = 0 : i64, scratch_operands = 0 : i64, tpu.core_type = #tpu.core_type<tc>, window_params = [{transform_indices = @transform_0, window_bounds = array<i64: 40, 265>}, {pipeline_mode = #tpu.pipeline_mode<synchronous>, transform_indices = @transform_1, window_bounds = array<i64: 265, 128>}, {pipeline_mode = #tpu.pipeline_mode<synchronous>, transform_indices = @transform_2, window_bounds = array<i64: 1, 128>}, {pipeline_mode = #tpu.pipeline_mode<synchronous>, transform_indices = @transform_3, window_bounds = array<i64: 1, 128>}, {transform_indices = @transform_4, window_bounds = array<i64: 40, 128>}]} {
    %c0 = arith.constant 0 : index
    %c0_0 = arith.constant 0 : index
    %0 = vector.load %arg1[%c0, %c0_0] : memref<40x265xf32, #tpu.memory_space<vmem>>, vector<40x265xf32>
    %1 = arith.truncf %0 : vector<40x265xf32> to vector<40x265xbf16>
    %c0_1 = arith.constant 0 : index
    %c0_2 = arith.constant 0 : index
    %2 = vector.load %arg2[%c0_1, %c0_2] : memref<265x128xbf16, #tpu.memory_space<vmem>>, vector<265x128xbf16>
    %cst = arith.constant dense<0.000000e+00> : vector<40x128xf32>
    %3 = tpu.matmul %1, %2, %cst {dimension_numbers = #tpu.dot_dimension_numbers<[1], [0], [0], [1], [0, 0, 1, 1], [], []>} : vector<40x265xbf16>, vector<265x128xbf16>, vector<40x128xf32> -> vector<40x128xf32>
    %c0_3 = arith.constant 0 : index
    %c0_4 = arith.constant 0 : index
    %4 = vector.load %arg3[%c0_3, %c0_4] : memref<1x128xf32, #tpu.memory_space<vmem>>, vector<1x128xf32>
    %5 = vector.broadcast %4 : vector<1x128xf32> to vector<40x128xf32>
    %6 = arith.mulf %3, %5 : vector<40x128xf32>
    %c0_5 = arith.constant 0 : index
    %c0_6 = arith.constant 0 : index
    %7 = vector.load %arg4[%c0_5, %c0_6] : memref<1x128xf32, #tpu.memory_space<vmem>>, vector<1x128xf32>
    %8 = vector.broadcast %7 : vector<1x128xf32> to vector<40x128xf32>
    %9 = arith.addf %6, %8 : vector<40x128xf32>
    %cst_7 = arith.constant 0.000000e+00 : f32
    %10 = vector.broadcast %cst_7 : f32 to vector<40x128xf32>
    %11 = arith.maximumf %9, %10 : vector<40x128xf32>
    %c0_8 = arith.constant 0 : index
    %c0_9 = arith.constant 0 : index
    %12 = vector.load %arg5[%c0_8, %c0_9] : memref<40x128xf32, #tpu.memory_space<vmem>>, vector<40x128xf32>
    tpu.vector_store %arg5[%c0_8, %c0_9], %11 {strides = array<i32>} : memref<40x128xf32, #tpu.memory_space<vmem>>, vector<40x128xf32>,
    return
  }
  func.func @transform_0(%arg0: i32) -> (i32, i32) {
    %c0_i32 = arith.constant 0 : i32
    %c0_i32_0 = arith.constant 0 : i32
    return %arg0, %c0_i32 : i32, i32
  }
  func.func @transform_1(%arg0: i32) -> (i32, i32) {
    %c0_i32 = arith.constant 0 : i32
    %c0_i32_0 = arith.constant 0 : i32
    %c0_i32_1 = arith.constant 0 : i32
    return %c0_i32, %c0_i32_0 : i32, i32
  }
  func.func @transform_2(%arg0: i32) -> (i32, i32) {
    %c0_i32 = arith.constant 0 : i32
    %c0_i32_0 = arith.constant 0 : i32
    %c0_i32_1 = arith.constant 0 : i32
    return %c0_i32, %c0_i32_0 : i32, i32
  }
  func.func @transform_3(%arg0: i32) -> (i32, i32) {
    %c0_i32 = arith.constant 0 : i32
    %c0_i32_0 = arith.constant 0 : i32
    %c0_i32_1 = arith.constant 0 : i32
    return %c0_i32, %c0_i32_0 : i32, i32
  }
  func.func @transform_4(%arg0: i32) -> (i32, i32) {
    %c0_i32 = arith.constant 0 : i32
    %c0_i32_0 = arith.constant 0 : i32
    return %arg0, %c0_i32 : i32, i32
  }
}

module attributes {stable_mosaic.version = 11 : i64} {
  func.func @_matmul_affine_kernel(%arg0: i32, %arg1: memref<16x768xf32, #tpu.memory_space<vmem>>, %arg2: memref<768x128xbf16, #tpu.memory_space<vmem>>, %arg3: memref<1x128xf32, #tpu.memory_space<vmem>>, %arg4: memref<1x128xf32, #tpu.memory_space<vmem>>, %arg5: memref<16x128xf32, #tpu.memory_space<vmem>>) attributes {dimension_semantics = [#tpu.dimension_semantics<parallel>], iteration_bounds = array<i64: 1>, scalar_prefetch = 0 : i64, scratch_operands = 0 : i64, tpu.core_type = #tpu.core_type<tc>, window_params = [{transform_indices = @transform_0, window_bounds = array<i64: 16, 768>}, {pipeline_mode = #tpu.pipeline_mode<synchronous>, transform_indices = @transform_1, window_bounds = array<i64: 768, 128>}, {pipeline_mode = #tpu.pipeline_mode<synchronous>, transform_indices = @transform_2, window_bounds = array<i64: 1, 128>}, {pipeline_mode = #tpu.pipeline_mode<synchronous>, transform_indices = @transform_3, window_bounds = array<i64: 1, 128>}, {transform_indices = @transform_4, window_bounds = array<i64: 16, 128>}]} {
    %c0 = arith.constant 0 : index
    %c0_0 = arith.constant 0 : index
    %0 = vector.load %arg1[%c0, %c0_0] : memref<16x768xf32, #tpu.memory_space<vmem>>, vector<16x768xf32>
    %1 = arith.truncf %0 : vector<16x768xf32> to vector<16x768xbf16>
    %c0_1 = arith.constant 0 : index
    %c0_2 = arith.constant 0 : index
    %2 = vector.load %arg2[%c0_1, %c0_2] : memref<768x128xbf16, #tpu.memory_space<vmem>>, vector<768x128xbf16>
    %cst = arith.constant dense<0.000000e+00> : vector<16x128xf32>
    %3 = tpu.matmul %1, %2, %cst {dimension_numbers = #tpu.dot_dimension_numbers<[1], [0], [0], [1], [0, 0, 1, 1], [], []>} : vector<16x768xbf16>, vector<768x128xbf16>, vector<16x128xf32> -> vector<16x128xf32>
    %c0_3 = arith.constant 0 : index
    %c0_4 = arith.constant 0 : index
    %4 = vector.load %arg3[%c0_3, %c0_4] : memref<1x128xf32, #tpu.memory_space<vmem>>, vector<1x128xf32>
    %5 = vector.broadcast %4 : vector<1x128xf32> to vector<16x128xf32>
    %6 = arith.mulf %3, %5 : vector<16x128xf32>
    %c0_5 = arith.constant 0 : index
    %c0_6 = arith.constant 0 : index
    %7 = vector.load %arg4[%c0_5, %c0_6] : memref<1x128xf32, #tpu.memory_space<vmem>>, vector<1x128xf32>
    %8 = vector.broadcast %7 : vector<1x128xf32> to vector<16x128xf32>
    %9 = arith.addf %6, %8 : vector<16x128xf32>
    %cst_7 = arith.constant 0.000000e+00 : f32
    %10 = vector.broadcast %cst_7 : f32 to vector<16x128xf32>
    %11 = arith.maximumf %9, %10 : vector<16x128xf32>
    %c0_8 = arith.constant 0 : index
    %c0_9 = arith.constant 0 : index
    %12 = vector.load %arg5[%c0_8, %c0_9] : memref<16x128xf32, #tpu.memory_space<vmem>>, vector<16x128xf32>
    tpu.vector_store %arg5[%c0_8, %c0_9], %11 {strides = array<i32>} : memref<16x128xf32, #tpu.memory_space<vmem>>, vector<16x128xf32>,
    return
  }
  func.func @transform_0(%arg0: i32) -> (i32, i32) {
    %c0_i32 = arith.constant 0 : i32
    %c0_i32_0 = arith.constant 0 : i32
    return %arg0, %c0_i32 : i32, i32
  }
  func.func @transform_1(%arg0: i32) -> (i32, i32) {
    %c0_i32 = arith.constant 0 : i32
    %c0_i32_0 = arith.constant 0 : i32
    %c0_i32_1 = arith.constant 0 : i32
    return %c0_i32, %c0_i32_0 : i32, i32
  }
  func.func @transform_2(%arg0: i32) -> (i32, i32) {
    %c0_i32 = arith.constant 0 : i32
    %c0_i32_0 = arith.constant 0 : i32
    %c0_i32_1 = arith.constant 0 : i32
    return %c0_i32, %c0_i32_0 : i32, i32
  }
  func.func @transform_3(%arg0: i32) -> (i32, i32) {
    %c0_i32 = arith.constant 0 : i32
    %c0_i32_0 = arith.constant 0 : i32
    %c0_i32_1 = arith.constant 0 : i32
    return %c0_i32, %c0_i32_0 : i32, i32
  }
  func.func @transform_4(%arg0: i32) -> (i32, i32) {
    %c0_i32 = arith.constant 0 : i32
    %c0_i32_0 = arith.constant 0 : i32
    return %arg0, %c0_i32 : i32, i32
  }
}

module attributes {stable_mosaic.version = 11 : i64} {
  func.func @_s4d_stack_kernel(%arg0: i32, %arg1: memref<16x128xf32, #tpu.memory_space<vmem>>, %arg2: memref<4x8x128xf32, #tpu.memory_space<vmem>>, %arg3: memref<4x128x256xbf16, #tpu.memory_space<vmem>>, %arg4: memref<4x1x256xf32, #tpu.memory_space<vmem>>, %arg5: memref<4x1x128xf32, #tpu.memory_space<vmem>>, %arg6: memref<4x1x128xf32, #tpu.memory_space<vmem>>, %arg7: memref<128x10xf32, #tpu.memory_space<vmem>>, %arg8: memref<1x10xf32, #tpu.memory_space<vmem>>, %arg9: memref<2x10xf32, #tpu.memory_space<vmem>>) attributes {dimension_semantics = [#tpu.dimension_semantics<arbitrary>], iteration_bounds = array<i64: 1>, scalar_prefetch = 0 : i64, scratch_operands = 0 : i64, tpu.core_type = #tpu.core_type<tc>, window_params = [{pipeline_mode = #tpu.pipeline_mode<synchronous>, transform_indices = @transform_0, window_bounds = array<i64: 16, 128>}, {pipeline_mode = #tpu.pipeline_mode<synchronous>, transform_indices = @transform_1, window_bounds = array<i64: 4, 8, 128>}, {pipeline_mode = #tpu.pipeline_mode<synchronous>, transform_indices = @transform_2, window_bounds = array<i64: 4, 128, 256>}, {pipeline_mode = #tpu.pipeline_mode<synchronous>, transform_indices = @transform_3, window_bounds = array<i64: 4, 1, 256>}, {pipeline_mode = #tpu.pipeline_mode<synchronous>, transform_indices = @transform_4, window_bounds = array<i64: 4, 1, 128>}, {pipeline_mode = #tpu.pipeline_mode<synchronous>, transform_indices = @transform_5, window_bounds = array<i64: 4, 1, 128>}, {pipeline_mode = #tpu.pipeline_mode<synchronous>, transform_indices = @transform_6, window_bounds = array<i64: 128, 10>}, {pipeline_mode = #tpu.pipeline_mode<synchronous>, transform_indices = @transform_7, window_bounds = array<i64: 1, 10>}, {pipeline_mode = #tpu.pipeline_mode<synchronous>, transform_indices = @transform_8, window_bounds = array<i64: 2, 10>}]} {
    %c0 = arith.constant 0 : index
    %c0_0 = arith.constant 0 : index
    %0 = vector.load %arg1[%c0, %c0_0] : memref<16x128xf32, #tpu.memory_space<vmem>>, vector<16x128xf32>
    %1 = tpu.iota {dimensions = array<i32: 0>} : vector<16x1xi32>
    %c8_i32 = arith.constant 8 : i32
    %c0_i32 = arith.constant 0 : i32
    %2 = arith.cmpi eq, %c8_i32, %c0_i32 : i32
    %c1_i32 = arith.constant 1 : i32
    %3 = arith.select %2, %c1_i32, %c8_i32 : i32
    %4 = vector.broadcast %3 : i32 to vector<16x1xi32>
    %5 = arith.remsi %1, %4 : vector<16x1xi32>
    %c0_i32_1 = arith.constant 0 : i32
    %6 = vector.broadcast %c0_i32_1 : i32 to vector<16x1xi32>
    %7 = arith.cmpi ne, %5, %6 : vector<16x1xi32>
    %c0_i32_2 = arith.constant 0 : i32
    %8 = vector.broadcast %c0_i32_2 : i32 to vector<16x1xi32>
    %9 = arith.cmpi slt, %5, %8 : vector<16x1xi32>
    %c0_i32_3 = arith.constant 0 : i32
    %10 = arith.cmpi slt, %3, %c0_i32_3 : i32
    %11 = vector.broadcast %10 : i1 to vector<16x1xi1>
    %12 = vector.broadcast %11 : vector<16x1xi1> to vector<16x1xi1>
    %13 = arith.xori %9, %12 : vector<16x1xi1>
    %14 = arith.andi %13, %7 : vector<16x1xi1>
    %15 = vector.broadcast %3 : i32 to vector<16x1xi32>
    %16 = arith.addi %5, %15 : vector<16x1xi32>
    %17 = arith.select %14, %16, %5 : vector<16x1xi1>, vector<16x1xi32>
    %c0_4 = arith.constant 0 : index
    %c0_5 = arith.constant 0 : index
    %c0_6 = arith.constant 0 : index
    %18 = vector.load %arg2[%c0_4, %c0_5, %c0_6] : memref<4x8x128xf32, #tpu.memory_space<vmem>>, vector<1x8x128xf32>
    %19 = vector.shape_cast %18 : vector<1x8x128xf32> to vector<8x128xf32>
    %20 = vector.extract_strided_slice %19 {offsets = [0, 0], sizes = [1, 128], strides = [1, 1]} : vector<8x128xf32> to vector<1x128xf32>
    %21 = vector.broadcast %20 : vector<1x128xf32> to vector<16x128xf32>
    %22 = arith.mulf %0, %21 : vector<16x128xf32>
    %c1_i32_7 = arith.constant 1 : i32
    %23 = tpu.dynamic_rotate %0 by %c1_i32_7 dim 0 : vector<16x128xf32>, i32 -> vector<16x128xf32>
    %c1_i32_8 = arith.constant 1 : i32
    %24 = vector.broadcast %c1_i32_8 : i32 to vector<16x1xi32>
    %25 = arith.cmpi sge, %17, %24 : vector<16x1xi32>
    %cst = arith.constant 0.000000e+00 : f32
    %26 = vector.shape_cast %25 : vector<16x1xi1> to vector<16x1xi1>
    %27 = vector.broadcast %26 : vector<16x1xi1> to vector<16x128xi1>
    %28 = vector.broadcast %cst : f32 to vector<16x128xf32>
    %29 = arith.select %27, %23, %28 : vector<16x128xi1>, vector<16x128xf32>
    %30 = vector.extract_strided_slice %19 {offsets = [1, 0], sizes = [1, 128], strides = [1, 1]} : vector<8x128xf32> to vector<1x128xf32>
    %31 = vector.broadcast %30 : vector<1x128xf32> to vector<16x128xf32>
    %32 = arith.mulf %29, %31 : vector<16x128xf32>
    %33 = arith.addf %22, %32 : vector<16x128xf32>
    %c2_i32 = arith.constant 2 : i32
    %34 = tpu.dynamic_rotate %0 by %c2_i32 dim 0 : vector<16x128xf32>, i32 -> vector<16x128xf32>
    %c2_i32_9 = arith.constant 2 : i32
    %35 = vector.broadcast %c2_i32_9 : i32 to vector<16x1xi32>
    %36 = arith.cmpi sge, %17, %35 : vector<16x1xi32>
    %cst_10 = arith.constant 0.000000e+00 : f32
    %37 = vector.shape_cast %36 : vector<16x1xi1> to vector<16x1xi1>
    %38 = vector.broadcast %37 : vector<16x1xi1> to vector<16x128xi1>
    %39 = vector.broadcast %cst_10 : f32 to vector<16x128xf32>
    %40 = arith.select %38, %34, %39 : vector<16x128xi1>, vector<16x128xf32>
    %41 = vector.extract_strided_slice %19 {offsets = [2, 0], sizes = [1, 128], strides = [1, 1]} : vector<8x128xf32> to vector<1x128xf32>
    %42 = vector.broadcast %41 : vector<1x128xf32> to vector<16x128xf32>
    %43 = arith.mulf %40, %42 : vector<16x128xf32>
    %44 = arith.addf %33, %43 : vector<16x128xf32>
    %c3_i32 = arith.constant 3 : i32
    %45 = tpu.dynamic_rotate %0 by %c3_i32 dim 0 : vector<16x128xf32>, i32 -> vector<16x128xf32>
    %c3_i32_11 = arith.constant 3 : i32
    %46 = vector.broadcast %c3_i32_11 : i32 to vector<16x1xi32>
    %47 = arith.cmpi sge, %17, %46 : vector<16x1xi32>
    %cst_12 = arith.constant 0.000000e+00 : f32
    %48 = vector.shape_cast %47 : vector<16x1xi1> to vector<16x1xi1>
    %49 = vector.broadcast %48 : vector<16x1xi1> to vector<16x128xi1>
    %50 = vector.broadcast %cst_12 : f32 to vector<16x128xf32>
    %51 = arith.select %49, %45, %50 : vector<16x128xi1>, vector<16x128xf32>
    %52 = vector.extract_strided_slice %19 {offsets = [3, 0], sizes = [1, 128], strides = [1, 1]} : vector<8x128xf32> to vector<1x128xf32>
    %53 = vector.broadcast %52 : vector<1x128xf32> to vector<16x128xf32>
    %54 = arith.mulf %51, %53 : vector<16x128xf32>
    %55 = arith.addf %44, %54 : vector<16x128xf32>
    %c4_i32 = arith.constant 4 : i32
    %56 = tpu.dynamic_rotate %0 by %c4_i32 dim 0 : vector<16x128xf32>, i32 -> vector<16x128xf32>
    %c4_i32_13 = arith.constant 4 : i32
    %57 = vector.broadcast %c4_i32_13 : i32 to vector<16x1xi32>
    %58 = arith.cmpi sge, %17, %57 : vector<16x1xi32>
    %cst_14 = arith.constant 0.000000e+00 : f32
    %59 = vector.shape_cast %58 : vector<16x1xi1> to vector<16x1xi1>
    %60 = vector.broadcast %59 : vector<16x1xi1> to vector<16x128xi1>
    %61 = vector.broadcast %cst_14 : f32 to vector<16x128xf32>
    %62 = arith.select %60, %56, %61 : vector<16x128xi1>, vector<16x128xf32>
    %63 = vector.extract_strided_slice %19 {offsets = [4, 0], sizes = [1, 128], strides = [1, 1]} : vector<8x128xf32> to vector<1x128xf32>
    %64 = vector.broadcast %63 : vector<1x128xf32> to vector<16x128xf32>
    %65 = arith.mulf %62, %64 : vector<16x128xf32>
    %66 = arith.addf %55, %65 : vector<16x128xf32>
    %c5_i32 = arith.constant 5 : i32
    %67 = tpu.dynamic_rotate %0 by %c5_i32 dim 0 : vector<16x128xf32>, i32 -> vector<16x128xf32>
    %c5_i32_15 = arith.constant 5 : i32
    %68 = vector.broadcast %c5_i32_15 : i32 to vector<16x1xi32>
    %69 = arith.cmpi sge, %17, %68 : vector<16x1xi32>
    %cst_16 = arith.constant 0.000000e+00 : f32
    %70 = vector.shape_cast %69 : vector<16x1xi1> to vector<16x1xi1>
    %71 = vector.broadcast %70 : vector<16x1xi1> to vector<16x128xi1>
    %72 = vector.broadcast %cst_16 : f32 to vector<16x128xf32>
    %73 = arith.select %71, %67, %72 : vector<16x128xi1>, vector<16x128xf32>
    %74 = vector.extract_strided_slice %19 {offsets = [5, 0], sizes = [1, 128], strides = [1, 1]} : vector<8x128xf32> to vector<1x128xf32>
    %75 = vector.broadcast %74 : vector<1x128xf32> to vector<16x128xf32>
    %76 = arith.mulf %73, %75 : vector<16x128xf32>
    %77 = arith.addf %66, %76 : vector<16x128xf32>
    %c6_i32 = arith.constant 6 : i32
    %78 = tpu.dynamic_rotate %0 by %c6_i32 dim 0 : vector<16x128xf32>, i32 -> vector<16x128xf32>
    %c6_i32_17 = arith.constant 6 : i32
    %79 = vector.broadcast %c6_i32_17 : i32 to vector<16x1xi32>
    %80 = arith.cmpi sge, %17, %79 : vector<16x1xi32>
    %cst_18 = arith.constant 0.000000e+00 : f32
    %81 = vector.shape_cast %80 : vector<16x1xi1> to vector<16x1xi1>
    %82 = vector.broadcast %81 : vector<16x1xi1> to vector<16x128xi1>
    %83 = vector.broadcast %cst_18 : f32 to vector<16x128xf32>
    %84 = arith.select %82, %78, %83 : vector<16x128xi1>, vector<16x128xf32>
    %85 = vector.extract_strided_slice %19 {offsets = [6, 0], sizes = [1, 128], strides = [1, 1]} : vector<8x128xf32> to vector<1x128xf32>
    %86 = vector.broadcast %85 : vector<1x128xf32> to vector<16x128xf32>
    %87 = arith.mulf %84, %86 : vector<16x128xf32>
    %88 = arith.addf %77, %87 : vector<16x128xf32>
    %c7_i32 = arith.constant 7 : i32
    %89 = tpu.dynamic_rotate %0 by %c7_i32 dim 0 : vector<16x128xf32>, i32 -> vector<16x128xf32>
    %c7_i32_19 = arith.constant 7 : i32
    %90 = vector.broadcast %c7_i32_19 : i32 to vector<16x1xi32>
    %91 = arith.cmpi sge, %17, %90 : vector<16x1xi32>
    %cst_20 = arith.constant 0.000000e+00 : f32
    %92 = vector.shape_cast %91 : vector<16x1xi1> to vector<16x1xi1>
    %93 = vector.broadcast %92 : vector<16x1xi1> to vector<16x128xi1>
    %94 = vector.broadcast %cst_20 : f32 to vector<16x128xf32>
    %95 = arith.select %93, %89, %94 : vector<16x128xi1>, vector<16x128xf32>
    %96 = vector.extract_strided_slice %19 {offsets = [7, 0], sizes = [1, 128], strides = [1, 1]} : vector<8x128xf32> to vector<1x128xf32>
    %97 = vector.broadcast %96 : vector<1x128xf32> to vector<16x128xf32>
    %98 = arith.mulf %95, %97 : vector<16x128xf32>
    %99 = arith.addf %88, %98 : vector<16x128xf32>
    %cst_21 = arith.constant 5.000000e-01 : f32
    %100 = vector.broadcast %cst_21 : f32 to vector<16x128xf32>
    %101 = arith.mulf %100, %99 : vector<16x128xf32>
    %cst_22 = arith.constant 0.707106769 : f32
    %102 = vector.broadcast %cst_22 : f32 to vector<16x128xf32>
    %103 = arith.mulf %99, %102 : vector<16x128xf32>
    %cst_23 = arith.constant 0.000000e+00 : f32
    %104 = vector.broadcast %cst_23 : f32 to vector<16x128xf32>
    %105 = arith.cmpf oge, %103, %104 : vector<16x128xf32>
    %cst_24 = arith.constant 1.000000e+00 : f32
    %cst_25 = arith.constant -1.000000e+00 : f32
    %106 = vector.broadcast %cst_24 : f32 to vector<16x128xf32>
    %107 = vector.broadcast %cst_25 : f32 to vector<16x128xf32>
    %108 = arith.select %105, %106, %107 : vector<16x128xi1>, vector<16x128xf32>
    %109 = math.absf %103 : vector<16x128xf32>
    %cst_26 = arith.constant 0.327591091 : f32
    %110 = vector.broadcast %cst_26 : f32 to vector<16x128xf32>
    %111 = arith.mulf %110, %109 : vector<16x128xf32>
    %cst_27 = arith.constant 1.000000e+00 : f32
    %112 = vector.broadcast %cst_27 : f32 to vector<16x128xf32>
    %113 = arith.addf %112, %111 : vector<16x128xf32>
    %cst_28 = arith.constant 1.000000e+00 : f32
    %114 = vector.broadcast %cst_28 : f32 to vector<16x128xf32>
    %115 = arith.divf %114, %113 : vector<16x128xf32>
    %cst_29 = arith.constant 1.06140542 : f32
    %116 = vector.broadcast %cst_29 : f32 to vector<16x128xf32>
    %117 = arith.mulf %116, %115 : vector<16x128xf32>
    %cst_30 = arith.constant -1.45315206 : f32
    %118 = vector.broadcast %cst_30 : f32 to vector<16x128xf32>
    %119 = arith.addf %117, %118 : vector<16x128xf32>
    %120 = arith.mulf %119, %115 : vector<16x128xf32>
    %cst_31 = arith.constant 1.42141378 : f32
    %121 = vector.broadcast %cst_31 : f32 to vector<16x128xf32>
    %122 = arith.addf %120, %121 : vector<16x128xf32>
    %123 = arith.mulf %122, %115 : vector<16x128xf32>
    %cst_32 = arith.constant -0.284496725 : f32
    %124 = vector.broadcast %cst_32 : f32 to vector<16x128xf32>
    %125 = arith.addf %123, %124 : vector<16x128xf32>
    %126 = arith.mulf %125, %115 : vector<16x128xf32>
    %cst_33 = arith.constant 0.254829586 : f32
    %127 = vector.broadcast %cst_33 : f32 to vector<16x128xf32>
    %128 = arith.addf %126, %127 : vector<16x128xf32>
    %129 = arith.mulf %128, %115 : vector<16x128xf32>
    %cst_34 = arith.constant 0.000000e+00 : f32
    %130 = vector.broadcast %cst_34 : f32 to vector<16x128xf32>
    %131 = arith.subf %130, %109 : vector<16x128xf32>
    %132 = arith.mulf %131, %109 : vector<16x128xf32>
    %133 = math.exp %132 : vector<16x128xf32>
    %134 = arith.mulf %129, %133 : vector<16x128xf32>
    %cst_35 = arith.constant 1.000000e+00 : f32
    %135 = vector.broadcast %cst_35 : f32 to vector<16x128xf32>
    %136 = arith.subf %135, %134 : vector<16x128xf32>
    %137 = arith.mulf %108, %136 : vector<16x128xf32>
    %cst_36 = arith.constant 1.000000e+00 : f32
    %138 = vector.broadcast %cst_36 : f32 to vector<16x128xf32>
    %139 = arith.addf %138, %137 : vector<16x128xf32>
    %140 = arith.mulf %101, %139 : vector<16x128xf32>
    %141 = arith.truncf %140 : vector<16x128xf32> to vector<16x128xbf16>
    %c0_37 = arith.constant 0 : index
    %c0_38 = arith.constant 0 : index
    %c0_39 = arith.constant 0 : index
    %142 = vector.load %arg3[%c0_37, %c0_38, %c0_39] : memref<4x128x256xbf16, #tpu.memory_space<vmem>>, vector<1x128x256xbf16>
    %143 = vector.shape_cast %142 : vector<1x128x256xbf16> to vector<128x256xbf16>
    %cst_40 = arith.constant dense<0.000000e+00> : vector<16x256xf32>
    %144 = tpu.matmul %141, %143, %cst_40 {dimension_numbers = #tpu.dot_dimension_numbers<[1], [0], [0], [1], [0, 0, 1, 1], [], []>} : vector<16x128xbf16>, vector<128x256xbf16>, vector<16x256xf32> -> vector<16x256xf32>
    %c0_41 = arith.constant 0 : index
    %c0_42 = arith.constant 0 : index
    %c0_43 = arith.constant 0 : index
    %145 = vector.load %arg4[%c0_41, %c0_42, %c0_43] : memref<4x1x256xf32, #tpu.memory_space<vmem>>, vector<1x1x256xf32>
    %146 = vector.shape_cast %145 : vector<1x1x256xf32> to vector<1x256xf32>
    %147 = vector.broadcast %146 : vector<1x256xf32> to vector<16x256xf32>
    %148 = arith.addf %144, %147 : vector<16x256xf32>
    %149 = vector.extract_strided_slice %148 {offsets = [0, 0], sizes = [16, 128], strides = [1, 1]} : vector<16x256xf32> to vector<16x128xf32>
    %150 = vector.extract_strided_slice %148 {offsets = [0, 128], sizes = [16, 128], strides = [1, 1]} : vector<16x256xf32> to vector<16x128xf32>
    %151 = arith.negf %150 : vector<16x128xf32>
    %152 = math.exp %151 : vector<16x128xf32>
    %cst_44 = arith.constant 1.000000e+00 : f32
    %153 = vector.broadcast %cst_44 : f32 to vector<16x128xf32>
    %154 = arith.addf %153, %152 : vector<16x128xf32>
    %155 = arith.divf %153, %154 : vector<16x128xf32>
    %156 = arith.mulf %149, %155 : vector<16x128xf32>
    %157 = arith.addf %156, %0 : vector<16x128xf32>
    %cst_45 = arith.constant dense<0.000000e+00> : vector<16xf32>
    %158 = vector.multi_reduction <add>, %157, %cst_45 [1] : vector<16x128xf32> to vector<16xf32>
    %159 = vector.shape_cast %158 : vector<16xf32> to vector<16x1xf32>
    %cst_46 = arith.constant 1.280000e+02 : f32
    %160 = vector.broadcast %cst_46 : f32 to vector<16x1xf32>
    %161 = arith.divf %159, %160 : vector<16x1xf32>
    %162 = vector.broadcast %161 : vector<16x1xf32> to vector<16x128xf32>
    %163 = arith.subf %157, %162 : vector<16x128xf32>
    %164 = arith.mulf %163, %163 : vector<16x128xf32>
    %cst_47 = arith.constant dense<0.000000e+00> : vector<16xf32>
    %165 = vector.multi_reduction <add>, %164, %cst_47 [1] : vector<16x128xf32> to vector<16xf32>
    %166 = vector.shape_cast %165 : vector<16xf32> to vector<16x1xf32>
    %cst_48 = arith.constant 1.280000e+02 : f32
    %167 = vector.broadcast %cst_48 : f32 to vector<16x1xf32>
    %168 = arith.divf %166, %167 : vector<16x1xf32>
    %169 = vector.broadcast %161 : vector<16x1xf32> to vector<16x128xf32>
    %170 = arith.subf %157, %169 : vector<16x128xf32>
    %cst_49 = arith.constant 9.99999974E-6 : f32
    %171 = vector.broadcast %cst_49 : f32 to vector<16x1xf32>
    %172 = arith.addf %168, %171 : vector<16x1xf32>
    %173 = math.rsqrt %172 : vector<16x1xf32>
    %174 = vector.broadcast %173 : vector<16x1xf32> to vector<16x128xf32>
    %175 = arith.mulf %170, %174 : vector<16x128xf32>
    %c0_50 = arith.constant 0 : index
    %c0_51 = arith.constant 0 : index
    %c0_52 = arith.constant 0 : index
    %176 = vector.load %arg5[%c0_50, %c0_51, %c0_52] : memref<4x1x128xf32, #tpu.memory_space<vmem>>, vector<1x1x128xf32>
    %177 = vector.shape_cast %176 : vector<1x1x128xf32> to vector<1x128xf32>
    %178 = vector.broadcast %177 : vector<1x128xf32> to vector<16x128xf32>
    %179 = arith.mulf %175, %178 : vector<16x128xf32>
    %c0_53 = arith.constant 0 : index
    %c0_54 = arith.constant 0 : index
    %c0_55 = arith.constant 0 : index
    %180 = vector.load %arg6[%c0_53, %c0_54, %c0_55] : memref<4x1x128xf32, #tpu.memory_space<vmem>>, vector<1x1x128xf32>
    %181 = vector.shape_cast %180 : vector<1x1x128xf32> to vector<1x128xf32>
    %182 = vector.broadcast %181 : vector<1x128xf32> to vector<16x128xf32>
    %183 = arith.addf %179, %182 : vector<16x128xf32>
    %c1 = arith.constant 1 : index
    %c0_56 = arith.constant 0 : index
    %c0_57 = arith.constant 0 : index
    %184 = vector.load %arg2[%c1, %c0_56, %c0_57] : memref<4x8x128xf32, #tpu.memory_space<vmem>>, vector<1x8x128xf32>
    %185 = vector.shape_cast %184 : vector<1x8x128xf32> to vector<8x128xf32>
    %186 = vector.extract_strided_slice %185 {offsets = [0, 0], sizes = [1, 128], strides = [1, 1]} : vector<8x128xf32> to vector<1x128xf32>
    %187 = vector.broadcast %186 : vector<1x128xf32> to vector<16x128xf32>
    %188 = arith.mulf %183, %187 : vector<16x128xf32>
    %c1_i32_58 = arith.constant 1 : i32
    %189 = tpu.dynamic_rotate %183 by %c1_i32_58 dim 0 : vector<16x128xf32>, i32 -> vector<16x128xf32>
    %c1_i32_59 = arith.constant 1 : i32
    %190 = vector.broadcast %c1_i32_59 : i32 to vector<16x1xi32>
    %191 = arith.cmpi sge, %17, %190 : vector<16x1xi32>
    %cst_60 = arith.constant 0.000000e+00 : f32
    %192 = vector.shape_cast %191 : vector<16x1xi1> to vector<16x1xi1>
    %193 = vector.broadcast %192 : vector<16x1xi1> to vector<16x128xi1>
    %194 = vector.broadcast %cst_60 : f32 to vector<16x128xf32>
    %195 = arith.select %193, %189, %194 : vector<16x128xi1>, vector<16x128xf32>
    %196 = vector.extract_strided_slice %185 {offsets = [1, 0], sizes = [1, 128], strides = [1, 1]} : vector<8x128xf32> to vector<1x128xf32>
    %197 = vector.broadcast %196 : vector<1x128xf32> to vector<16x128xf32>
    %198 = arith.mulf %195, %197 : vector<16x128xf32>
    %199 = arith.addf %188, %198 : vector<16x128xf32>
    %c2_i32_61 = arith.constant 2 : i32
    %200 = tpu.dynamic_rotate %183 by %c2_i32_61 dim 0 : vector<16x128xf32>, i32 -> vector<16x128xf32>
    %c2_i32_62 = arith.constant 2 : i32
    %201 = vector.broadcast %c2_i32_62 : i32 to vector<16x1xi32>
    %202 = arith.cmpi sge, %17, %201 : vector<16x1xi32>
    %cst_63 = arith.constant 0.000000e+00 : f32
    %203 = vector.shape_cast %202 : vector<16x1xi1> to vector<16x1xi1>
    %204 = vector.broadcast %203 : vector<16x1xi1> to vector<16x128xi1>
    %205 = vector.broadcast %cst_63 : f32 to vector<16x128xf32>
    %206 = arith.select %204, %200, %205 : vector<16x128xi1>, vector<16x128xf32>
    %207 = vector.extract_strided_slice %185 {offsets = [2, 0], sizes = [1, 128], strides = [1, 1]} : vector<8x128xf32> to vector<1x128xf32>
    %208 = vector.broadcast %207 : vector<1x128xf32> to vector<16x128xf32>
    %209 = arith.mulf %206, %208 : vector<16x128xf32>
    %210 = arith.addf %199, %209 : vector<16x128xf32>
    %c3_i32_64 = arith.constant 3 : i32
    %211 = tpu.dynamic_rotate %183 by %c3_i32_64 dim 0 : vector<16x128xf32>, i32 -> vector<16x128xf32>
    %c3_i32_65 = arith.constant 3 : i32
    %212 = vector.broadcast %c3_i32_65 : i32 to vector<16x1xi32>
    %213 = arith.cmpi sge, %17, %212 : vector<16x1xi32>
    %cst_66 = arith.constant 0.000000e+00 : f32
    %214 = vector.shape_cast %213 : vector<16x1xi1> to vector<16x1xi1>
    %215 = vector.broadcast %214 : vector<16x1xi1> to vector<16x128xi1>
    %216 = vector.broadcast %cst_66 : f32 to vector<16x128xf32>
    %217 = arith.select %215, %211, %216 : vector<16x128xi1>, vector<16x128xf32>
    %218 = vector.extract_strided_slice %185 {offsets = [3, 0], sizes = [1, 128], strides = [1, 1]} : vector<8x128xf32> to vector<1x128xf32>
    %219 = vector.broadcast %218 : vector<1x128xf32> to vector<16x128xf32>
    %220 = arith.mulf %217, %219 : vector<16x128xf32>
    %221 = arith.addf %210, %220 : vector<16x128xf32>
    %c4_i32_67 = arith.constant 4 : i32
    %222 = tpu.dynamic_rotate %183 by %c4_i32_67 dim 0 : vector<16x128xf32>, i32 -> vector<16x128xf32>
    %c4_i32_68 = arith.constant 4 : i32
    %223 = vector.broadcast %c4_i32_68 : i32 to vector<16x1xi32>
    %224 = arith.cmpi sge, %17, %223 : vector<16x1xi32>
    %cst_69 = arith.constant 0.000000e+00 : f32
    %225 = vector.shape_cast %224 : vector<16x1xi1> to vector<16x1xi1>
    %226 = vector.broadcast %225 : vector<16x1xi1> to vector<16x128xi1>
    %227 = vector.broadcast %cst_69 : f32 to vector<16x128xf32>
    %228 = arith.select %226, %222, %227 : vector<16x128xi1>, vector<16x128xf32>
    %229 = vector.extract_strided_slice %185 {offsets = [4, 0], sizes = [1, 128], strides = [1, 1]} : vector<8x128xf32> to vector<1x128xf32>
    %230 = vector.broadcast %229 : vector<1x128xf32> to vector<16x128xf32>
    %231 = arith.mulf %228, %230 : vector<16x128xf32>
    %232 = arith.addf %221, %231 : vector<16x128xf32>
    %c5_i32_70 = arith.constant 5 : i32
    %233 = tpu.dynamic_rotate %183 by %c5_i32_70 dim 0 : vector<16x128xf32>, i32 -> vector<16x128xf32>
    %c5_i32_71 = arith.constant 5 : i32
    %234 = vector.broadcast %c5_i32_71 : i32 to vector<16x1xi32>
    %235 = arith.cmpi sge, %17, %234 : vector<16x1xi32>
    %cst_72 = arith.constant 0.000000e+00 : f32
    %236 = vector.shape_cast %235 : vector<16x1xi1> to vector<16x1xi1>
    %237 = vector.broadcast %236 : vector<16x1xi1> to vector<16x128xi1>
    %238 = vector.broadcast %cst_72 : f32 to vector<16x128xf32>
    %239 = arith.select %237, %233, %238 : vector<16x128xi1>, vector<16x128xf32>
    %240 = vector.extract_strided_slice %185 {offsets = [5, 0], sizes = [1, 128], strides = [1, 1]} : vector<8x128xf32> to vector<1x128xf32>
    %241 = vector.broadcast %240 : vector<1x128xf32> to vector<16x128xf32>
    %242 = arith.mulf %239, %241 : vector<16x128xf32>
    %243 = arith.addf %232, %242 : vector<16x128xf32>
    %c6_i32_73 = arith.constant 6 : i32
    %244 = tpu.dynamic_rotate %183 by %c6_i32_73 dim 0 : vector<16x128xf32>, i32 -> vector<16x128xf32>
    %c6_i32_74 = arith.constant 6 : i32
    %245 = vector.broadcast %c6_i32_74 : i32 to vector<16x1xi32>
    %246 = arith.cmpi sge, %17, %245 : vector<16x1xi32>
    %cst_75 = arith.constant 0.000000e+00 : f32
    %247 = vector.shape_cast %246 : vector<16x1xi1> to vector<16x1xi1>
    %248 = vector.broadcast %247 : vector<16x1xi1> to vector<16x128xi1>
    %249 = vector.broadcast %cst_75 : f32 to vector<16x128xf32>
    %250 = arith.select %248, %244, %249 : vector<16x128xi1>, vector<16x128xf32>
    %251 = vector.extract_strided_slice %185 {offsets = [6, 0], sizes = [1, 128], strides = [1, 1]} : vector<8x128xf32> to vector<1x128xf32>
    %252 = vector.broadcast %251 : vector<1x128xf32> to vector<16x128xf32>
    %253 = arith.mulf %250, %252 : vector<16x128xf32>
    %254 = arith.addf %243, %253 : vector<16x128xf32>
    %c7_i32_76 = arith.constant 7 : i32
    %255 = tpu.dynamic_rotate %183 by %c7_i32_76 dim 0 : vector<16x128xf32>, i32 -> vector<16x128xf32>
    %c7_i32_77 = arith.constant 7 : i32
    %256 = vector.broadcast %c7_i32_77 : i32 to vector<16x1xi32>
    %257 = arith.cmpi sge, %17, %256 : vector<16x1xi32>
    %cst_78 = arith.constant 0.000000e+00 : f32
    %258 = vector.shape_cast %257 : vector<16x1xi1> to vector<16x1xi1>
    %259 = vector.broadcast %258 : vector<16x1xi1> to vector<16x128xi1>
    %260 = vector.broadcast %cst_78 : f32 to vector<16x128xf32>
    %261 = arith.select %259, %255, %260 : vector<16x128xi1>, vector<16x128xf32>
    %262 = vector.extract_strided_slice %185 {offsets = [7, 0], sizes = [1, 128], strides = [1, 1]} : vector<8x128xf32> to vector<1x128xf32>
    %263 = vector.broadcast %262 : vector<1x128xf32> to vector<16x128xf32>
    %264 = arith.mulf %261, %263 : vector<16x128xf32>
    %265 = arith.addf %254, %264 : vector<16x128xf32>
    %cst_79 = arith.constant 5.000000e-01 : f32
    %266 = vector.broadcast %cst_79 : f32 to vector<16x128xf32>
    %267 = arith.mulf %266, %265 : vector<16x128xf32>
    %cst_80 = arith.constant 0.707106769 : f32
    %268 = vector.broadcast %cst_80 : f32 to vector<16x128xf32>
    %269 = arith.mulf %265, %268 : vector<16x128xf32>
    %cst_81 = arith.constant 0.000000e+00 : f32
    %270 = vector.broadcast %cst_81 : f32 to vector<16x128xf32>
    %271 = arith.cmpf oge, %269, %270 : vector<16x128xf32>
    %cst_82 = arith.constant 1.000000e+00 : f32
    %cst_83 = arith.constant -1.000000e+00 : f32
    %272 = vector.broadcast %cst_82 : f32 to vector<16x128xf32>
    %273 = vector.broadcast %cst_83 : f32 to vector<16x128xf32>
    %274 = arith.select %271, %272, %273 : vector<16x128xi1>, vector<16x128xf32>
    %275 = math.absf %269 : vector<16x128xf32>
    %cst_84 = arith.constant 0.327591091 : f32
    %276 = vector.broadcast %cst_84 : f32 to vector<16x128xf32>
    %277 = arith.mulf %276, %275 : vector<16x128xf32>
    %cst_85 = arith.constant 1.000000e+00 : f32
    %278 = vector.broadcast %cst_85 : f32 to vector<16x128xf32>
    %279 = arith.addf %278, %277 : vector<16x128xf32>
    %cst_86 = arith.constant 1.000000e+00 : f32
    %280 = vector.broadcast %cst_86 : f32 to vector<16x128xf32>
    %281 = arith.divf %280, %279 : vector<16x128xf32>
    %cst_87 = arith.constant 1.06140542 : f32
    %282 = vector.broadcast %cst_87 : f32 to vector<16x128xf32>
    %283 = arith.mulf %282, %281 : vector<16x128xf32>
    %cst_88 = arith.constant -1.45315206 : f32
    %284 = vector.broadcast %cst_88 : f32 to vector<16x128xf32>
    %285 = arith.addf %283, %284 : vector<16x128xf32>
    %286 = arith.mulf %285, %281 : vector<16x128xf32>
    %cst_89 = arith.constant 1.42141378 : f32
    %287 = vector.broadcast %cst_89 : f32 to vector<16x128xf32>
    %288 = arith.addf %286, %287 : vector<16x128xf32>
    %289 = arith.mulf %288, %281 : vector<16x128xf32>
    %cst_90 = arith.constant -0.284496725 : f32
    %290 = vector.broadcast %cst_90 : f32 to vector<16x128xf32>
    %291 = arith.addf %289, %290 : vector<16x128xf32>
    %292 = arith.mulf %291, %281 : vector<16x128xf32>
    %cst_91 = arith.constant 0.254829586 : f32
    %293 = vector.broadcast %cst_91 : f32 to vector<16x128xf32>
    %294 = arith.addf %292, %293 : vector<16x128xf32>
    %295 = arith.mulf %294, %281 : vector<16x128xf32>
    %cst_92 = arith.constant 0.000000e+00 : f32
    %296 = vector.broadcast %cst_92 : f32 to vector<16x128xf32>
    %297 = arith.subf %296, %275 : vector<16x128xf32>
    %298 = arith.mulf %297, %275 : vector<16x128xf32>
    %299 = math.exp %298 : vector<16x128xf32>
    %300 = arith.mulf %295, %299 : vector<16x128xf32>
    %cst_93 = arith.constant 1.000000e+00 : f32
    %301 = vector.broadcast %cst_93 : f32 to vector<16x128xf32>
    %302 = arith.subf %301, %300 : vector<16x128xf32>
    %303 = arith.mulf %274, %302 : vector<16x128xf32>
    %cst_94 = arith.constant 1.000000e+00 : f32
    %304 = vector.broadcast %cst_94 : f32 to vector<16x128xf32>
    %305 = arith.addf %304, %303 : vector<16x128xf32>
    %306 = arith.mulf %267, %305 : vector<16x128xf32>
    %307 = arith.truncf %306 : vector<16x128xf32> to vector<16x128xbf16>
    %c1_95 = arith.constant 1 : index
    %c0_96 = arith.constant 0 : index
    %c0_97 = arith.constant 0 : index
    %308 = vector.load %arg3[%c1_95, %c0_96, %c0_97] : memref<4x128x256xbf16, #tpu.memory_space<vmem>>, vector<1x128x256xbf16>
    %309 = vector.shape_cast %308 : vector<1x128x256xbf16> to vector<128x256xbf16>
    %cst_98 = arith.constant dense<0.000000e+00> : vector<16x256xf32>
    %310 = tpu.matmul %307, %309, %cst_98 {dimension_numbers = #tpu.dot_dimension_numbers<[1], [0], [0], [1], [0, 0, 1, 1], [], []>} : vector<16x128xbf16>, vector<128x256xbf16>, vector<16x256xf32> -> vector<16x256xf32>
    %c1_99 = arith.constant 1 : index
    %c0_100 = arith.constant 0 : index
    %c0_101 = arith.constant 0 : index
    %311 = vector.load %arg4[%c1_99, %c0_100, %c0_101] : memref<4x1x256xf32, #tpu.memory_space<vmem>>, vector<1x1x256xf32>
    %312 = vector.shape_cast %311 : vector<1x1x256xf32> to vector<1x256xf32>
    %313 = vector.broadcast %312 : vector<1x256xf32> to vector<16x256xf32>
    %314 = arith.addf %310, %313 : vector<16x256xf32>
    %315 = vector.extract_strided_slice %314 {offsets = [0, 0], sizes = [16, 128], strides = [1, 1]} : vector<16x256xf32> to vector<16x128xf32>
    %316 = vector.extract_strided_slice %314 {offsets = [0, 128], sizes = [16, 128], strides = [1, 1]} : vector<16x256xf32> to vector<16x128xf32>
    %317 = arith.negf %316 : vector<16x128xf32>
    %318 = math.exp %317 : vector<16x128xf32>
    %cst_102 = arith.constant 1.000000e+00 : f32
    %319 = vector.broadcast %cst_102 : f32 to vector<16x128xf32>
    %320 = arith.addf %319, %318 : vector<16x128xf32>
    %321 = arith.divf %319, %320 : vector<16x128xf32>
    %322 = arith.mulf %315, %321 : vector<16x128xf32>
    %323 = arith.addf %322, %183 : vector<16x128xf32>
    %cst_103 = arith.constant dense<0.000000e+00> : vector<16xf32>
    %324 = vector.multi_reduction <add>, %323, %cst_103 [1] : vector<16x128xf32> to vector<16xf32>
    %325 = vector.shape_cast %324 : vector<16xf32> to vector<16x1xf32>
    %cst_104 = arith.constant 1.280000e+02 : f32
    %326 = vector.broadcast %cst_104 : f32 to vector<16x1xf32>
    %327 = arith.divf %325, %326 : vector<16x1xf32>
    %328 = vector.broadcast %327 : vector<16x1xf32> to vector<16x128xf32>
    %329 = arith.subf %323, %328 : vector<16x128xf32>
    %330 = arith.mulf %329, %329 : vector<16x128xf32>
    %cst_105 = arith.constant dense<0.000000e+00> : vector<16xf32>
    %331 = vector.multi_reduction <add>, %330, %cst_105 [1] : vector<16x128xf32> to vector<16xf32>
    %332 = vector.shape_cast %331 : vector<16xf32> to vector<16x1xf32>
    %cst_106 = arith.constant 1.280000e+02 : f32
    %333 = vector.broadcast %cst_106 : f32 to vector<16x1xf32>
    %334 = arith.divf %332, %333 : vector<16x1xf32>
    %335 = vector.broadcast %327 : vector<16x1xf32> to vector<16x128xf32>
    %336 = arith.subf %323, %335 : vector<16x128xf32>
    %cst_107 = arith.constant 9.99999974E-6 : f32
    %337 = vector.broadcast %cst_107 : f32 to vector<16x1xf32>
    %338 = arith.addf %334, %337 : vector<16x1xf32>
    %339 = math.rsqrt %338 : vector<16x1xf32>
    %340 = vector.broadcast %339 : vector<16x1xf32> to vector<16x128xf32>
    %341 = arith.mulf %336, %340 : vector<16x128xf32>
    %c1_108 = arith.constant 1 : index
    %c0_109 = arith.constant 0 : index
    %c0_110 = arith.constant 0 : index
    %342 = vector.load %arg5[%c1_108, %c0_109, %c0_110] : memref<4x1x128xf32, #tpu.memory_space<vmem>>, vector<1x1x128xf32>
    %343 = vector.shape_cast %342 : vector<1x1x128xf32> to vector<1x128xf32>
    %344 = vector.broadcast %343 : vector<1x128xf32> to vector<16x128xf32>
    %345 = arith.mulf %341, %344 : vector<16x128xf32>
    %c1_111 = arith.constant 1 : index
    %c0_112 = arith.constant 0 : index
    %c0_113 = arith.constant 0 : index
    %346 = vector.load %arg6[%c1_111, %c0_112, %c0_113] : memref<4x1x128xf32, #tpu.memory_space<vmem>>, vector<1x1x128xf32>
    %347 = vector.shape_cast %346 : vector<1x1x128xf32> to vector<1x128xf32>
    %348 = vector.broadcast %347 : vector<1x128xf32> to vector<16x128xf32>
    %349 = arith.addf %345, %348 : vector<16x128xf32>
    %c2 = arith.constant 2 : index
    %c0_114 = arith.constant 0 : index
    %c0_115 = arith.constant 0 : index
    %350 = vector.load %arg2[%c2, %c0_114, %c0_115] : memref<4x8x128xf32, #tpu.memory_space<vmem>>, vector<1x8x128xf32>
    %351 = vector.shape_cast %350 : vector<1x8x128xf32> to vector<8x128xf32>
    %352 = vector.extract_strided_slice %351 {offsets = [0, 0], sizes = [1, 128], strides = [1, 1]} : vector<8x128xf32> to vector<1x128xf32>
    %353 = vector.broadcast %352 : vector<1x128xf32> to vector<16x128xf32>
    %354 = arith.mulf %349, %353 : vector<16x128xf32>
    %c1_i32_116 = arith.constant 1 : i32
    %355 = tpu.dynamic_rotate %349 by %c1_i32_116 dim 0 : vector<16x128xf32>, i32 -> vector<16x128xf32>
    %c1_i32_117 = arith.constant 1 : i32
    %356 = vector.broadcast %c1_i32_117 : i32 to vector<16x1xi32>
    %357 = arith.cmpi sge, %17, %356 : vector<16x1xi32>
    %cst_118 = arith.constant 0.000000e+00 : f32
    %358 = vector.shape_cast %357 : vector<16x1xi1> to vector<16x1xi1>
    %359 = vector.broadcast %358 : vector<16x1xi1> to vector<16x128xi1>
    %360 = vector.broadcast %cst_118 : f32 to vector<16x128xf32>
    %361 = arith.select %359, %355, %360 : vector<16x128xi1>, vector<16x128xf32>
    %362 = vector.extract_strided_slice %351 {offsets = [1, 0], sizes = [1, 128], strides = [1, 1]} : vector<8x128xf32> to vector<1x128xf32>
    %363 = vector.broadcast %362 : vector<1x128xf32> to vector<16x128xf32>
    %364 = arith.mulf %361, %363 : vector<16x128xf32>
    %365 = arith.addf %354, %364 : vector<16x128xf32>
    %c2_i32_119 = arith.constant 2 : i32
    %366 = tpu.dynamic_rotate %349 by %c2_i32_119 dim 0 : vector<16x128xf32>, i32 -> vector<16x128xf32>
    %c2_i32_120 = arith.constant 2 : i32
    %367 = vector.broadcast %c2_i32_120 : i32 to vector<16x1xi32>
    %368 = arith.cmpi sge, %17, %367 : vector<16x1xi32>
    %cst_121 = arith.constant 0.000000e+00 : f32
    %369 = vector.shape_cast %368 : vector<16x1xi1> to vector<16x1xi1>
    %370 = vector.broadcast %369 : vector<16x1xi1> to vector<16x128xi1>
    %371 = vector.broadcast %cst_121 : f32 to vector<16x128xf32>
    %372 = arith.select %370, %366, %371 : vector<16x128xi1>, vector<16x128xf32>
    %373 = vector.extract_strided_slice %351 {offsets = [2, 0], sizes = [1, 128], strides = [1, 1]} : vector<8x128xf32> to vector<1x128xf32>
    %374 = vector.broadcast %373 : vector<1x128xf32> to vector<16x128xf32>
    %375 = arith.mulf %372, %374 : vector<16x128xf32>
    %376 = arith.addf %365, %375 : vector<16x128xf32>
    %c3_i32_122 = arith.constant 3 : i32
    %377 = tpu.dynamic_rotate %349 by %c3_i32_122 dim 0 : vector<16x128xf32>, i32 -> vector<16x128xf32>
    %c3_i32_123 = arith.constant 3 : i32
    %378 = vector.broadcast %c3_i32_123 : i32 to vector<16x1xi32>
    %379 = arith.cmpi sge, %17, %378 : vector<16x1xi32>
    %cst_124 = arith.constant 0.000000e+00 : f32
    %380 = vector.shape_cast %379 : vector<16x1xi1> to vector<16x1xi1>
    %381 = vector.broadcast %380 : vector<16x1xi1> to vector<16x128xi1>
    %382 = vector.broadcast %cst_124 : f32 to vector<16x128xf32>
    %383 = arith.select %381, %377, %382 : vector<16x128xi1>, vector<16x128xf32>
    %384 = vector.extract_strided_slice %351 {offsets = [3, 0], sizes = [1, 128], strides = [1, 1]} : vector<8x128xf32> to vector<1x128xf32>
    %385 = vector.broadcast %384 : vector<1x128xf32> to vector<16x128xf32>
    %386 = arith.mulf %383, %385 : vector<16x128xf32>
    %387 = arith.addf %376, %386 : vector<16x128xf32>
    %c4_i32_125 = arith.constant 4 : i32
    %388 = tpu.dynamic_rotate %349 by %c4_i32_125 dim 0 : vector<16x128xf32>, i32 -> vector<16x128xf32>
    %c4_i32_126 = arith.constant 4 : i32
    %389 = vector.broadcast %c4_i32_126 : i32 to vector<16x1xi32>
    %390 = arith.cmpi sge, %17, %389 : vector<16x1xi32>
    %cst_127 = arith.constant 0.000000e+00 : f32
    %391 = vector.shape_cast %390 : vector<16x1xi1> to vector<16x1xi1>
    %392 = vector.broadcast %391 : vector<16x1xi1> to vector<16x128xi1>
    %393 = vector.broadcast %cst_127 : f32 to vector<16x128xf32>
    %394 = arith.select %392, %388, %393 : vector<16x128xi1>, vector<16x128xf32>
    %395 = vector.extract_strided_slice %351 {offsets = [4, 0], sizes = [1, 128], strides = [1, 1]} : vector<8x128xf32> to vector<1x128xf32>
    %396 = vector.broadcast %395 : vector<1x128xf32> to vector<16x128xf32>
    %397 = arith.mulf %394, %396 : vector<16x128xf32>
    %398 = arith.addf %387, %397 : vector<16x128xf32>
    %c5_i32_128 = arith.constant 5 : i32
    %399 = tpu.dynamic_rotate %349 by %c5_i32_128 dim 0 : vector<16x128xf32>, i32 -> vector<16x128xf32>
    %c5_i32_129 = arith.constant 5 : i32
    %400 = vector.broadcast %c5_i32_129 : i32 to vector<16x1xi32>
    %401 = arith.cmpi sge, %17, %400 : vector<16x1xi32>
    %cst_130 = arith.constant 0.000000e+00 : f32
    %402 = vector.shape_cast %401 : vector<16x1xi1> to vector<16x1xi1>
    %403 = vector.broadcast %402 : vector<16x1xi1> to vector<16x128xi1>
    %404 = vector.broadcast %cst_130 : f32 to vector<16x128xf32>
    %405 = arith.select %403, %399, %404 : vector<16x128xi1>, vector<16x128xf32>
    %406 = vector.extract_strided_slice %351 {offsets = [5, 0], sizes = [1, 128], strides = [1, 1]} : vector<8x128xf32> to vector<1x128xf32>
    %407 = vector.broadcast %406 : vector<1x128xf32> to vector<16x128xf32>
    %408 = arith.mulf %405, %407 : vector<16x128xf32>
    %409 = arith.addf %398, %408 : vector<16x128xf32>
    %c6_i32_131 = arith.constant 6 : i32
    %410 = tpu.dynamic_rotate %349 by %c6_i32_131 dim 0 : vector<16x128xf32>, i32 -> vector<16x128xf32>
    %c6_i32_132 = arith.constant 6 : i32
    %411 = vector.broadcast %c6_i32_132 : i32 to vector<16x1xi32>
    %412 = arith.cmpi sge, %17, %411 : vector<16x1xi32>
    %cst_133 = arith.constant 0.000000e+00 : f32
    %413 = vector.shape_cast %412 : vector<16x1xi1> to vector<16x1xi1>
    %414 = vector.broadcast %413 : vector<16x1xi1> to vector<16x128xi1>
    %415 = vector.broadcast %cst_133 : f32 to vector<16x128xf32>
    %416 = arith.select %414, %410, %415 : vector<16x128xi1>, vector<16x128xf32>
    %417 = vector.extract_strided_slice %351 {offsets = [6, 0], sizes = [1, 128], strides = [1, 1]} : vector<8x128xf32> to vector<1x128xf32>
    %418 = vector.broadcast %417 : vector<1x128xf32> to vector<16x128xf32>
    %419 = arith.mulf %416, %418 : vector<16x128xf32>
    %420 = arith.addf %409, %419 : vector<16x128xf32>
    %c7_i32_134 = arith.constant 7 : i32
    %421 = tpu.dynamic_rotate %349 by %c7_i32_134 dim 0 : vector<16x128xf32>, i32 -> vector<16x128xf32>
    %c7_i32_135 = arith.constant 7 : i32
    %422 = vector.broadcast %c7_i32_135 : i32 to vector<16x1xi32>
    %423 = arith.cmpi sge, %17, %422 : vector<16x1xi32>
    %cst_136 = arith.constant 0.000000e+00 : f32
    %424 = vector.shape_cast %423 : vector<16x1xi1> to vector<16x1xi1>
    %425 = vector.broadcast %424 : vector<16x1xi1> to vector<16x128xi1>
    %426 = vector.broadcast %cst_136 : f32 to vector<16x128xf32>
    %427 = arith.select %425, %421, %426 : vector<16x128xi1>, vector<16x128xf32>
    %428 = vector.extract_strided_slice %351 {offsets = [7, 0], sizes = [1, 128], strides = [1, 1]} : vector<8x128xf32> to vector<1x128xf32>
    %429 = vector.broadcast %428 : vector<1x128xf32> to vector<16x128xf32>
    %430 = arith.mulf %427, %429 : vector<16x128xf32>
    %431 = arith.addf %420, %430 : vector<16x128xf32>
    %cst_137 = arith.constant 5.000000e-01 : f32
    %432 = vector.broadcast %cst_137 : f32 to vector<16x128xf32>
    %433 = arith.mulf %432, %431 : vector<16x128xf32>
    %cst_138 = arith.constant 0.707106769 : f32
    %434 = vector.broadcast %cst_138 : f32 to vector<16x128xf32>
    %435 = arith.mulf %431, %434 : vector<16x128xf32>
    %cst_139 = arith.constant 0.000000e+00 : f32
    %436 = vector.broadcast %cst_139 : f32 to vector<16x128xf32>
    %437 = arith.cmpf oge, %435, %436 : vector<16x128xf32>
    %cst_140 = arith.constant 1.000000e+00 : f32
    %cst_141 = arith.constant -1.000000e+00 : f32
    %438 = vector.broadcast %cst_140 : f32 to vector<16x128xf32>
    %439 = vector.broadcast %cst_141 : f32 to vector<16x128xf32>
    %440 = arith.select %437, %438, %439 : vector<16x128xi1>, vector<16x128xf32>
    %441 = math.absf %435 : vector<16x128xf32>
    %cst_142 = arith.constant 0.327591091 : f32
    %442 = vector.broadcast %cst_142 : f32 to vector<16x128xf32>
    %443 = arith.mulf %442, %441 : vector<16x128xf32>
    %cst_143 = arith.constant 1.000000e+00 : f32
    %444 = vector.broadcast %cst_143 : f32 to vector<16x128xf32>
    %445 = arith.addf %444, %443 : vector<16x128xf32>
    %cst_144 = arith.constant 1.000000e+00 : f32
    %446 = vector.broadcast %cst_144 : f32 to vector<16x128xf32>
    %447 = arith.divf %446, %445 : vector<16x128xf32>
    %cst_145 = arith.constant 1.06140542 : f32
    %448 = vector.broadcast %cst_145 : f32 to vector<16x128xf32>
    %449 = arith.mulf %448, %447 : vector<16x128xf32>
    %cst_146 = arith.constant -1.45315206 : f32
    %450 = vector.broadcast %cst_146 : f32 to vector<16x128xf32>
    %451 = arith.addf %449, %450 : vector<16x128xf32>
    %452 = arith.mulf %451, %447 : vector<16x128xf32>
    %cst_147 = arith.constant 1.42141378 : f32
    %453 = vector.broadcast %cst_147 : f32 to vector<16x128xf32>
    %454 = arith.addf %452, %453 : vector<16x128xf32>
    %455 = arith.mulf %454, %447 : vector<16x128xf32>
    %cst_148 = arith.constant -0.284496725 : f32
    %456 = vector.broadcast %cst_148 : f32 to vector<16x128xf32>
    %457 = arith.addf %455, %456 : vector<16x128xf32>
    %458 = arith.mulf %457, %447 : vector<16x128xf32>
    %cst_149 = arith.constant 0.254829586 : f32
    %459 = vector.broadcast %cst_149 : f32 to vector<16x128xf32>
    %460 = arith.addf %458, %459 : vector<16x128xf32>
    %461 = arith.mulf %460, %447 : vector<16x128xf32>
    %cst_150 = arith.constant 0.000000e+00 : f32
    %462 = vector.broadcast %cst_150 : f32 to vector<16x128xf32>
    %463 = arith.subf %462, %441 : vector<16x128xf32>
    %464 = arith.mulf %463, %441 : vector<16x128xf32>
    %465 = math.exp %464 : vector<16x128xf32>
    %466 = arith.mulf %461, %465 : vector<16x128xf32>
    %cst_151 = arith.constant 1.000000e+00 : f32
    %467 = vector.broadcast %cst_151 : f32 to vector<16x128xf32>
    %468 = arith.subf %467, %466 : vector<16x128xf32>
    %469 = arith.mulf %440, %468 : vector<16x128xf32>
    %cst_152 = arith.constant 1.000000e+00 : f32
    %470 = vector.broadcast %cst_152 : f32 to vector<16x128xf32>
    %471 = arith.addf %470, %469 : vector<16x128xf32>
    %472 = arith.mulf %433, %471 : vector<16x128xf32>
    %473 = arith.truncf %472 : vector<16x128xf32> to vector<16x128xbf16>
    %c2_153 = arith.constant 2 : index
    %c0_154 = arith.constant 0 : index
    %c0_155 = arith.constant 0 : index
    %474 = vector.load %arg3[%c2_153, %c0_154, %c0_155] : memref<4x128x256xbf16, #tpu.memory_space<vmem>>, vector<1x128x256xbf16>
    %475 = vector.shape_cast %474 : vector<1x128x256xbf16> to vector<128x256xbf16>
    %cst_156 = arith.constant dense<0.000000e+00> : vector<16x256xf32>
    %476 = tpu.matmul %473, %475, %cst_156 {dimension_numbers = #tpu.dot_dimension_numbers<[1], [0], [0], [1], [0, 0, 1, 1], [], []>} : vector<16x128xbf16>, vector<128x256xbf16>, vector<16x256xf32> -> vector<16x256xf32>
    %c2_157 = arith.constant 2 : index
    %c0_158 = arith.constant 0 : index
    %c0_159 = arith.constant 0 : index
    %477 = vector.load %arg4[%c2_157, %c0_158, %c0_159] : memref<4x1x256xf32, #tpu.memory_space<vmem>>, vector<1x1x256xf32>
    %478 = vector.shape_cast %477 : vector<1x1x256xf32> to vector<1x256xf32>
    %479 = vector.broadcast %478 : vector<1x256xf32> to vector<16x256xf32>
    %480 = arith.addf %476, %479 : vector<16x256xf32>
    %481 = vector.extract_strided_slice %480 {offsets = [0, 0], sizes = [16, 128], strides = [1, 1]} : vector<16x256xf32> to vector<16x128xf32>
    %482 = vector.extract_strided_slice %480 {offsets = [0, 128], sizes = [16, 128], strides = [1, 1]} : vector<16x256xf32> to vector<16x128xf32>
    %483 = arith.negf %482 : vector<16x128xf32>
    %484 = math.exp %483 : vector<16x128xf32>
    %cst_160 = arith.constant 1.000000e+00 : f32
    %485 = vector.broadcast %cst_160 : f32 to vector<16x128xf32>
    %486 = arith.addf %485, %484 : vector<16x128xf32>
    %487 = arith.divf %485, %486 : vector<16x128xf32>
    %488 = arith.mulf %481, %487 : vector<16x128xf32>
    %489 = arith.addf %488, %349 : vector<16x128xf32>
    %cst_161 = arith.constant dense<0.000000e+00> : vector<16xf32>
    %490 = vector.multi_reduction <add>, %489, %cst_161 [1] : vector<16x128xf32> to vector<16xf32>
    %491 = vector.shape_cast %490 : vector<16xf32> to vector<16x1xf32>
    %cst_162 = arith.constant 1.280000e+02 : f32
    %492 = vector.broadcast %cst_162 : f32 to vector<16x1xf32>
    %493 = arith.divf %491, %492 : vector<16x1xf32>
    %494 = vector.broadcast %493 : vector<16x1xf32> to vector<16x128xf32>
    %495 = arith.subf %489, %494 : vector<16x128xf32>
    %496 = arith.mulf %495, %495 : vector<16x128xf32>
    %cst_163 = arith.constant dense<0.000000e+00> : vector<16xf32>
    %497 = vector.multi_reduction <add>, %496, %cst_163 [1] : vector<16x128xf32> to vector<16xf32>
    %498 = vector.shape_cast %497 : vector<16xf32> to vector<16x1xf32>
    %cst_164 = arith.constant 1.280000e+02 : f32
    %499 = vector.broadcast %cst_164 : f32 to vector<16x1xf32>
    %500 = arith.divf %498, %499 : vector<16x1xf32>
    %501 = vector.broadcast %493 : vector<16x1xf32> to vector<16x128xf32>
    %502 = arith.subf %489, %501 : vector<16x128xf32>
    %cst_165 = arith.constant 9.99999974E-6 : f32
    %503 = vector.broadcast %cst_165 : f32 to vector<16x1xf32>
    %504 = arith.addf %500, %503 : vector<16x1xf32>
    %505 = math.rsqrt %504 : vector<16x1xf32>
    %506 = vector.broadcast %505 : vector<16x1xf32> to vector<16x128xf32>
    %507 = arith.mulf %502, %506 : vector<16x128xf32>
    %c2_166 = arith.constant 2 : index
    %c0_167 = arith.constant 0 : index
    %c0_168 = arith.constant 0 : index
    %508 = vector.load %arg5[%c2_166, %c0_167, %c0_168] : memref<4x1x128xf32, #tpu.memory_space<vmem>>, vector<1x1x128xf32>
    %509 = vector.shape_cast %508 : vector<1x1x128xf32> to vector<1x128xf32>
    %510 = vector.broadcast %509 : vector<1x128xf32> to vector<16x128xf32>
    %511 = arith.mulf %507, %510 : vector<16x128xf32>
    %c2_169 = arith.constant 2 : index
    %c0_170 = arith.constant 0 : index
    %c0_171 = arith.constant 0 : index
    %512 = vector.load %arg6[%c2_169, %c0_170, %c0_171] : memref<4x1x128xf32, #tpu.memory_space<vmem>>, vector<1x1x128xf32>
    %513 = vector.shape_cast %512 : vector<1x1x128xf32> to vector<1x128xf32>
    %514 = vector.broadcast %513 : vector<1x128xf32> to vector<16x128xf32>
    %515 = arith.addf %511, %514 : vector<16x128xf32>
    %c3 = arith.constant 3 : index
    %c0_172 = arith.constant 0 : index
    %c0_173 = arith.constant 0 : index
    %516 = vector.load %arg2[%c3, %c0_172, %c0_173] : memref<4x8x128xf32, #tpu.memory_space<vmem>>, vector<1x8x128xf32>
    %517 = vector.shape_cast %516 : vector<1x8x128xf32> to vector<8x128xf32>
    %518 = vector.extract_strided_slice %517 {offsets = [0, 0], sizes = [1, 128], strides = [1, 1]} : vector<8x128xf32> to vector<1x128xf32>
    %519 = vector.broadcast %518 : vector<1x128xf32> to vector<16x128xf32>
    %520 = arith.mulf %515, %519 : vector<16x128xf32>
    %c1_i32_174 = arith.constant 1 : i32
    %521 = tpu.dynamic_rotate %515 by %c1_i32_174 dim 0 : vector<16x128xf32>, i32 -> vector<16x128xf32>
    %c1_i32_175 = arith.constant 1 : i32
    %522 = vector.broadcast %c1_i32_175 : i32 to vector<16x1xi32>
    %523 = arith.cmpi sge, %17, %522 : vector<16x1xi32>
    %cst_176 = arith.constant 0.000000e+00 : f32
    %524 = vector.shape_cast %523 : vector<16x1xi1> to vector<16x1xi1>
    %525 = vector.broadcast %524 : vector<16x1xi1> to vector<16x128xi1>
    %526 = vector.broadcast %cst_176 : f32 to vector<16x128xf32>
    %527 = arith.select %525, %521, %526 : vector<16x128xi1>, vector<16x128xf32>
    %528 = vector.extract_strided_slice %517 {offsets = [1, 0], sizes = [1, 128], strides = [1, 1]} : vector<8x128xf32> to vector<1x128xf32>
    %529 = vector.broadcast %528 : vector<1x128xf32> to vector<16x128xf32>
    %530 = arith.mulf %527, %529 : vector<16x128xf32>
    %531 = arith.addf %520, %530 : vector<16x128xf32>
    %c2_i32_177 = arith.constant 2 : i32
    %532 = tpu.dynamic_rotate %515 by %c2_i32_177 dim 0 : vector<16x128xf32>, i32 -> vector<16x128xf32>
    %c2_i32_178 = arith.constant 2 : i32
    %533 = vector.broadcast %c2_i32_178 : i32 to vector<16x1xi32>
    %534 = arith.cmpi sge, %17, %533 : vector<16x1xi32>
    %cst_179 = arith.constant 0.000000e+00 : f32
    %535 = vector.shape_cast %534 : vector<16x1xi1> to vector<16x1xi1>
    %536 = vector.broadcast %535 : vector<16x1xi1> to vector<16x128xi1>
    %537 = vector.broadcast %cst_179 : f32 to vector<16x128xf32>
    %538 = arith.select %536, %532, %537 : vector<16x128xi1>, vector<16x128xf32>
    %539 = vector.extract_strided_slice %517 {offsets = [2, 0], sizes = [1, 128], strides = [1, 1]} : vector<8x128xf32> to vector<1x128xf32>
    %540 = vector.broadcast %539 : vector<1x128xf32> to vector<16x128xf32>
    %541 = arith.mulf %538, %540 : vector<16x128xf32>
    %542 = arith.addf %531, %541 : vector<16x128xf32>
    %c3_i32_180 = arith.constant 3 : i32
    %543 = tpu.dynamic_rotate %515 by %c3_i32_180 dim 0 : vector<16x128xf32>, i32 -> vector<16x128xf32>
    %c3_i32_181 = arith.constant 3 : i32
    %544 = vector.broadcast %c3_i32_181 : i32 to vector<16x1xi32>
    %545 = arith.cmpi sge, %17, %544 : vector<16x1xi32>
    %cst_182 = arith.constant 0.000000e+00 : f32
    %546 = vector.shape_cast %545 : vector<16x1xi1> to vector<16x1xi1>
    %547 = vector.broadcast %546 : vector<16x1xi1> to vector<16x128xi1>
    %548 = vector.broadcast %cst_182 : f32 to vector<16x128xf32>
    %549 = arith.select %547, %543, %548 : vector<16x128xi1>, vector<16x128xf32>
    %550 = vector.extract_strided_slice %517 {offsets = [3, 0], sizes = [1, 128], strides = [1, 1]} : vector<8x128xf32> to vector<1x128xf32>
    %551 = vector.broadcast %550 : vector<1x128xf32> to vector<16x128xf32>
    %552 = arith.mulf %549, %551 : vector<16x128xf32>
    %553 = arith.addf %542, %552 : vector<16x128xf32>
    %c4_i32_183 = arith.constant 4 : i32
    %554 = tpu.dynamic_rotate %515 by %c4_i32_183 dim 0 : vector<16x128xf32>, i32 -> vector<16x128xf32>
    %c4_i32_184 = arith.constant 4 : i32
    %555 = vector.broadcast %c4_i32_184 : i32 to vector<16x1xi32>
    %556 = arith.cmpi sge, %17, %555 : vector<16x1xi32>
    %cst_185 = arith.constant 0.000000e+00 : f32
    %557 = vector.shape_cast %556 : vector<16x1xi1> to vector<16x1xi1>
    %558 = vector.broadcast %557 : vector<16x1xi1> to vector<16x128xi1>
    %559 = vector.broadcast %cst_185 : f32 to vector<16x128xf32>
    %560 = arith.select %558, %554, %559 : vector<16x128xi1>, vector<16x128xf32>
    %561 = vector.extract_strided_slice %517 {offsets = [4, 0], sizes = [1, 128], strides = [1, 1]} : vector<8x128xf32> to vector<1x128xf32>
    %562 = vector.broadcast %561 : vector<1x128xf32> to vector<16x128xf32>
    %563 = arith.mulf %560, %562 : vector<16x128xf32>
    %564 = arith.addf %553, %563 : vector<16x128xf32>
    %c5_i32_186 = arith.constant 5 : i32
    %565 = tpu.dynamic_rotate %515 by %c5_i32_186 dim 0 : vector<16x128xf32>, i32 -> vector<16x128xf32>
    %c5_i32_187 = arith.constant 5 : i32
    %566 = vector.broadcast %c5_i32_187 : i32 to vector<16x1xi32>
    %567 = arith.cmpi sge, %17, %566 : vector<16x1xi32>
    %cst_188 = arith.constant 0.000000e+00 : f32
    %568 = vector.shape_cast %567 : vector<16x1xi1> to vector<16x1xi1>
    %569 = vector.broadcast %568 : vector<16x1xi1> to vector<16x128xi1>
    %570 = vector.broadcast %cst_188 : f32 to vector<16x128xf32>
    %571 = arith.select %569, %565, %570 : vector<16x128xi1>, vector<16x128xf32>
    %572 = vector.extract_strided_slice %517 {offsets = [5, 0], sizes = [1, 128], strides = [1, 1]} : vector<8x128xf32> to vector<1x128xf32>
    %573 = vector.broadcast %572 : vector<1x128xf32> to vector<16x128xf32>
    %574 = arith.mulf %571, %573 : vector<16x128xf32>
    %575 = arith.addf %564, %574 : vector<16x128xf32>
    %c6_i32_189 = arith.constant 6 : i32
    %576 = tpu.dynamic_rotate %515 by %c6_i32_189 dim 0 : vector<16x128xf32>, i32 -> vector<16x128xf32>
    %c6_i32_190 = arith.constant 6 : i32
    %577 = vector.broadcast %c6_i32_190 : i32 to vector<16x1xi32>
    %578 = arith.cmpi sge, %17, %577 : vector<16x1xi32>
    %cst_191 = arith.constant 0.000000e+00 : f32
    %579 = vector.shape_cast %578 : vector<16x1xi1> to vector<16x1xi1>
    %580 = vector.broadcast %579 : vector<16x1xi1> to vector<16x128xi1>
    %581 = vector.broadcast %cst_191 : f32 to vector<16x128xf32>
    %582 = arith.select %580, %576, %581 : vector<16x128xi1>, vector<16x128xf32>
    %583 = vector.extract_strided_slice %517 {offsets = [6, 0], sizes = [1, 128], strides = [1, 1]} : vector<8x128xf32> to vector<1x128xf32>
    %584 = vector.broadcast %583 : vector<1x128xf32> to vector<16x128xf32>
    %585 = arith.mulf %582, %584 : vector<16x128xf32>
    %586 = arith.addf %575, %585 : vector<16x128xf32>
    %c7_i32_192 = arith.constant 7 : i32
    %587 = tpu.dynamic_rotate %515 by %c7_i32_192 dim 0 : vector<16x128xf32>, i32 -> vector<16x128xf32>
    %c7_i32_193 = arith.constant 7 : i32
    %588 = vector.broadcast %c7_i32_193 : i32 to vector<16x1xi32>
    %589 = arith.cmpi sge, %17, %588 : vector<16x1xi32>
    %cst_194 = arith.constant 0.000000e+00 : f32
    %590 = vector.shape_cast %589 : vector<16x1xi1> to vector<16x1xi1>
    %591 = vector.broadcast %590 : vector<16x1xi1> to vector<16x128xi1>
    %592 = vector.broadcast %cst_194 : f32 to vector<16x128xf32>
    %593 = arith.select %591, %587, %592 : vector<16x128xi1>, vector<16x128xf32>
    %594 = vector.extract_strided_slice %517 {offsets = [7, 0], sizes = [1, 128], strides = [1, 1]} : vector<8x128xf32> to vector<1x128xf32>
    %595 = vector.broadcast %594 : vector<1x128xf32> to vector<16x128xf32>
    %596 = arith.mulf %593, %595 : vector<16x128xf32>
    %597 = arith.addf %586, %596 : vector<16x128xf32>
    %cst_195 = arith.constant 5.000000e-01 : f32
    %598 = vector.broadcast %cst_195 : f32 to vector<16x128xf32>
    %599 = arith.mulf %598, %597 : vector<16x128xf32>
    %cst_196 = arith.constant 0.707106769 : f32
    %600 = vector.broadcast %cst_196 : f32 to vector<16x128xf32>
    %601 = arith.mulf %597, %600 : vector<16x128xf32>
    %cst_197 = arith.constant 0.000000e+00 : f32
    %602 = vector.broadcast %cst_197 : f32 to vector<16x128xf32>
    %603 = arith.cmpf oge, %601, %602 : vector<16x128xf32>
    %cst_198 = arith.constant 1.000000e+00 : f32
    %cst_199 = arith.constant -1.000000e+00 : f32
    %604 = vector.broadcast %cst_198 : f32 to vector<16x128xf32>
    %605 = vector.broadcast %cst_199 : f32 to vector<16x128xf32>
    %606 = arith.select %603, %604, %605 : vector<16x128xi1>, vector<16x128xf32>
    %607 = math.absf %601 : vector<16x128xf32>
    %cst_200 = arith.constant 0.327591091 : f32
    %608 = vector.broadcast %cst_200 : f32 to vector<16x128xf32>
    %609 = arith.mulf %608, %607 : vector<16x128xf32>
    %cst_201 = arith.constant 1.000000e+00 : f32
    %610 = vector.broadcast %cst_201 : f32 to vector<16x128xf32>
    %611 = arith.addf %610, %609 : vector<16x128xf32>
    %cst_202 = arith.constant 1.000000e+00 : f32
    %612 = vector.broadcast %cst_202 : f32 to vector<16x128xf32>
    %613 = arith.divf %612, %611 : vector<16x128xf32>
    %cst_203 = arith.constant 1.06140542 : f32
    %614 = vector.broadcast %cst_203 : f32 to vector<16x128xf32>
    %615 = arith.mulf %614, %613 : vector<16x128xf32>
    %cst_204 = arith.constant -1.45315206 : f32
    %616 = vector.broadcast %cst_204 : f32 to vector<16x128xf32>
    %617 = arith.addf %615, %616 : vector<16x128xf32>
    %618 = arith.mulf %617, %613 : vector<16x128xf32>
    %cst_205 = arith.constant 1.42141378 : f32
    %619 = vector.broadcast %cst_205 : f32 to vector<16x128xf32>
    %620 = arith.addf %618, %619 : vector<16x128xf32>
    %621 = arith.mulf %620, %613 : vector<16x128xf32>
    %cst_206 = arith.constant -0.284496725 : f32
    %622 = vector.broadcast %cst_206 : f32 to vector<16x128xf32>
    %623 = arith.addf %621, %622 : vector<16x128xf32>
    %624 = arith.mulf %623, %613 : vector<16x128xf32>
    %cst_207 = arith.constant 0.254829586 : f32
    %625 = vector.broadcast %cst_207 : f32 to vector<16x128xf32>
    %626 = arith.addf %624, %625 : vector<16x128xf32>
    %627 = arith.mulf %626, %613 : vector<16x128xf32>
    %cst_208 = arith.constant 0.000000e+00 : f32
    %628 = vector.broadcast %cst_208 : f32 to vector<16x128xf32>
    %629 = arith.subf %628, %607 : vector<16x128xf32>
    %630 = arith.mulf %629, %607 : vector<16x128xf32>
    %631 = math.exp %630 : vector<16x128xf32>
    %632 = arith.mulf %627, %631 : vector<16x128xf32>
    %cst_209 = arith.constant 1.000000e+00 : f32
    %633 = vector.broadcast %cst_209 : f32 to vector<16x128xf32>
    %634 = arith.subf %633, %632 : vector<16x128xf32>
    %635 = arith.mulf %606, %634 : vector<16x128xf32>
    %cst_210 = arith.constant 1.000000e+00 : f32
    %636 = vector.broadcast %cst_210 : f32 to vector<16x128xf32>
    %637 = arith.addf %636, %635 : vector<16x128xf32>
    %638 = arith.mulf %599, %637 : vector<16x128xf32>
    %639 = arith.truncf %638 : vector<16x128xf32> to vector<16x128xbf16>
    %c3_211 = arith.constant 3 : index
    %c0_212 = arith.constant 0 : index
    %c0_213 = arith.constant 0 : index
    %640 = vector.load %arg3[%c3_211, %c0_212, %c0_213] : memref<4x128x256xbf16, #tpu.memory_space<vmem>>, vector<1x128x256xbf16>
    %641 = vector.shape_cast %640 : vector<1x128x256xbf16> to vector<128x256xbf16>
    %cst_214 = arith.constant dense<0.000000e+00> : vector<16x256xf32>
    %642 = tpu.matmul %639, %641, %cst_214 {dimension_numbers = #tpu.dot_dimension_numbers<[1], [0], [0], [1], [0, 0, 1, 1], [], []>} : vector<16x128xbf16>, vector<128x256xbf16>, vector<16x256xf32> -> vector<16x256xf32>
    %c3_215 = arith.constant 3 : index
    %c0_216 = arith.constant 0 : index
    %c0_217 = arith.constant 0 : index
    %643 = vector.load %arg4[%c3_215, %c0_216, %c0_217] : memref<4x1x256xf32, #tpu.memory_space<vmem>>, vector<1x1x256xf32>
    %644 = vector.shape_cast %643 : vector<1x1x256xf32> to vector<1x256xf32>
    %645 = vector.broadcast %644 : vector<1x256xf32> to vector<16x256xf32>
    %646 = arith.addf %642, %645 : vector<16x256xf32>
    %647 = vector.extract_strided_slice %646 {offsets = [0, 0], sizes = [16, 128], strides = [1, 1]} : vector<16x256xf32> to vector<16x128xf32>
    %648 = vector.extract_strided_slice %646 {offsets = [0, 128], sizes = [16, 128], strides = [1, 1]} : vector<16x256xf32> to vector<16x128xf32>
    %649 = arith.negf %648 : vector<16x128xf32>
    %650 = math.exp %649 : vector<16x128xf32>
    %cst_218 = arith.constant 1.000000e+00 : f32
    %651 = vector.broadcast %cst_218 : f32 to vector<16x128xf32>
    %652 = arith.addf %651, %650 : vector<16x128xf32>
    %653 = arith.divf %651, %652 : vector<16x128xf32>
    %654 = arith.mulf %647, %653 : vector<16x128xf32>
    %655 = arith.addf %654, %515 : vector<16x128xf32>
    %cst_219 = arith.constant dense<0.000000e+00> : vector<16xf32>
    %656 = vector.multi_reduction <add>, %655, %cst_219 [1] : vector<16x128xf32> to vector<16xf32>
    %657 = vector.shape_cast %656 : vector<16xf32> to vector<16x1xf32>
    %cst_220 = arith.constant 1.280000e+02 : f32
    %658 = vector.broadcast %cst_220 : f32 to vector<16x1xf32>
    %659 = arith.divf %657, %658 : vector<16x1xf32>
    %660 = vector.broadcast %659 : vector<16x1xf32> to vector<16x128xf32>
    %661 = arith.subf %655, %660 : vector<16x128xf32>
    %662 = arith.mulf %661, %661 : vector<16x128xf32>
    %cst_221 = arith.constant dense<0.000000e+00> : vector<16xf32>
    %663 = vector.multi_reduction <add>, %662, %cst_221 [1] : vector<16x128xf32> to vector<16xf32>
    %664 = vector.shape_cast %663 : vector<16xf32> to vector<16x1xf32>
    %cst_222 = arith.constant 1.280000e+02 : f32
    %665 = vector.broadcast %cst_222 : f32 to vector<16x1xf32>
    %666 = arith.divf %664, %665 : vector<16x1xf32>
    %667 = vector.broadcast %659 : vector<16x1xf32> to vector<16x128xf32>
    %668 = arith.subf %655, %667 : vector<16x128xf32>
    %cst_223 = arith.constant 9.99999974E-6 : f32
    %669 = vector.broadcast %cst_223 : f32 to vector<16x1xf32>
    %670 = arith.addf %666, %669 : vector<16x1xf32>
    %671 = math.rsqrt %670 : vector<16x1xf32>
    %672 = vector.broadcast %671 : vector<16x1xf32> to vector<16x128xf32>
    %673 = arith.mulf %668, %672 : vector<16x128xf32>
    %c3_224 = arith.constant 3 : index
    %c0_225 = arith.constant 0 : index
    %c0_226 = arith.constant 0 : index
    %674 = vector.load %arg5[%c3_224, %c0_225, %c0_226] : memref<4x1x128xf32, #tpu.memory_space<vmem>>, vector<1x1x128xf32>
    %675 = vector.shape_cast %674 : vector<1x1x128xf32> to vector<1x128xf32>
    %676 = vector.broadcast %675 : vector<1x128xf32> to vector<16x128xf32>
    %677 = arith.mulf %673, %676 : vector<16x128xf32>
    %c3_227 = arith.constant 3 : index
    %c0_228 = arith.constant 0 : index
    %c0_229 = arith.constant 0 : index
    %678 = vector.load %arg6[%c3_227, %c0_228, %c0_229] : memref<4x1x128xf32, #tpu.memory_space<vmem>>, vector<1x1x128xf32>
    %679 = vector.shape_cast %678 : vector<1x1x128xf32> to vector<1x128xf32>
    %680 = vector.broadcast %679 : vector<1x128xf32> to vector<16x128xf32>
    %681 = arith.addf %677, %680 : vector<16x128xf32>
    %682 = vector.extract_strided_slice %681 {offsets = [0, 0], sizes = [8, 128], strides = [1, 1]} : vector<16x128xf32> to vector<8x128xf32>
    %cst_230 = arith.constant dense<0.000000e+00> : vector<128xf32>
    %683 = vector.multi_reduction <add>, %682, %cst_230 [0] : vector<8x128xf32> to vector<128xf32>
    %684 = vector.shape_cast %683 : vector<128xf32> to vector<1x128xf32>
    %cst_231 = arith.constant 8.000000e+00 : f32
    %685 = vector.broadcast %cst_231 : f32 to vector<1x128xf32>
    %686 = arith.divf %684, %685 : vector<1x128xf32>
    %687 = vector.extract_strided_slice %681 {offsets = [8, 0], sizes = [8, 128], strides = [1, 1]} : vector<16x128xf32> to vector<8x128xf32>
    %cst_232 = arith.constant dense<0.000000e+00> : vector<128xf32>
    %688 = vector.multi_reduction <add>, %687, %cst_232 [0] : vector<8x128xf32> to vector<128xf32>
    %689 = vector.shape_cast %688 : vector<128xf32> to vector<1x128xf32>
    %cst_233 = arith.constant 8.000000e+00 : f32
    %690 = vector.broadcast %cst_233 : f32 to vector<1x128xf32>
    %691 = arith.divf %689, %690 : vector<1x128xf32>
    %692 = tpu.concatenate %686, %691 in 0 : vector<1x128xf32>, vector<1x128xf32> -> vector<2x128xf32>
    %c0_234 = arith.constant 0 : index
    %c0_235 = arith.constant 0 : index
    %693 = vector.load %arg7[%c0_234, %c0_235] : memref<128x10xf32, #tpu.memory_space<vmem>>, vector<128x10xf32>
    %cst_236 = arith.constant dense<0.000000e+00> : vector<2x10xf32>
    %694 = tpu.matmul %692, %693, %cst_236 {dimension_numbers = #tpu.dot_dimension_numbers<[1], [0], [0], [1], [0, 0, 1, 1], [], []>} : vector<2x128xf32>, vector<128x10xf32>, vector<2x10xf32> -> vector<2x10xf32>
    %c0_237 = arith.constant 0 : index
    %c0_238 = arith.constant 0 : index
    %695 = vector.load %arg8[%c0_237, %c0_238] : memref<1x10xf32, #tpu.memory_space<vmem>>, vector<1x10xf32>
    %696 = vector.broadcast %695 : vector<1x10xf32> to vector<2x10xf32>
    %697 = arith.addf %694, %696 : vector<2x10xf32>
    %c0_239 = arith.constant 0 : index
    %c0_240 = arith.constant 0 : index
    %698 = vector.load %arg9[%c0_239, %c0_240] : memref<2x10xf32, #tpu.memory_space<vmem>>, vector<2x10xf32>
    tpu.vector_store %arg9[%c0_239, %c0_240], %697 {strides = array<i32>} : memref<2x10xf32, #tpu.memory_space<vmem>>, vector<2x10xf32>,
    return
  }
  func.func @transform_0(%arg0: i32) -> (i32, i32) {
    %c0_i32 = arith.constant 0 : i32
    %c0_i32_0 = arith.constant 0 : i32
    %c0_i32_1 = arith.constant 0 : i32
    return %c0_i32, %c0_i32_0 : i32, i32
  }
  func.func @transform_1(%arg0: i32) -> (i32, i32, i32) {
    %c0_i32 = arith.constant 0 : i32
    %c0_i32_0 = arith.constant 0 : i32
    %c0_i32_1 = arith.constant 0 : i32
    %c0_i32_2 = arith.constant 0 : i32
    return %c0_i32, %c0_i32_0, %c0_i32_1 : i32, i32, i32
  }
  func.func @transform_2(%arg0: i32) -> (i32, i32, i32) {
    %c0_i32 = arith.constant 0 : i32
    %c0_i32_0 = arith.constant 0 : i32
    %c0_i32_1 = arith.constant 0 : i32
    %c0_i32_2 = arith.constant 0 : i32
    return %c0_i32, %c0_i32_0, %c0_i32_1 : i32, i32, i32
  }
  func.func @transform_3(%arg0: i32) -> (i32, i32, i32) {
    %c0_i32 = arith.constant 0 : i32
    %c0_i32_0 = arith.constant 0 : i32
    %c0_i32_1 = arith.constant 0 : i32
    %c0_i32_2 = arith.constant 0 : i32
    return %c0_i32, %c0_i32_0, %c0_i32_1 : i32, i32, i32
  }
  func.func @transform_4(%arg0: i32) -> (i32, i32, i32) {
    %c0_i32 = arith.constant 0 : i32
    %c0_i32_0 = arith.constant 0 : i32
    %c0_i32_1 = arith.constant 0 : i32
    %c0_i32_2 = arith.constant 0 : i32
    return %c0_i32, %c0_i32_0, %c0_i32_1 : i32, i32, i32
  }
  func.func @transform_5(%arg0: i32) -> (i32, i32, i32) {
    %c0_i32 = arith.constant 0 : i32
    %c0_i32_0 = arith.constant 0 : i32
    %c0_i32_1 = arith.constant 0 : i32
    %c0_i32_2 = arith.constant 0 : i32
    return %c0_i32, %c0_i32_0, %c0_i32_1 : i32, i32, i32
  }
  func.func @transform_6(%arg0: i32) -> (i32, i32) {
    %c0_i32 = arith.constant 0 : i32
    %c0_i32_0 = arith.constant 0 : i32
    %c0_i32_1 = arith.constant 0 : i32
    return %c0_i32, %c0_i32_0 : i32, i32
  }
  func.func @transform_7(%arg0: i32) -> (i32, i32) {
    %c0_i32 = arith.constant 0 : i32
    %c0_i32_0 = arith.constant 0 : i32
    %c0_i32_1 = arith.constant 0 : i32
    return %c0_i32, %c0_i32_0 : i32, i32
  }
  func.func @transform_8(%arg0: i32) -> (i32, i32) {
    %c0_i32 = arith.constant 0 : i32
    %c0_i32_0 = arith.constant 0 : i32
    %c0_i32_1 = arith.constant 0 : i32
    return %c0_i32, %c0_i32_0 : i32, i32
  }
}

</mosaic_0001>

<llo_original>
// kernel: s4model_forward.3
$region0: #{s4model_forward.3}
  #allocation0 [shape = 'u32[]', space=smem, size = 0x4, offset = 0x4, fixed_abs, tag = 'smem constant byte address 0x4 - core index']
  #allocation1 [shape = 'u32[144,128]{1,0:T(1,128)}', space=vmem, size = 0x12000, scoped, tag = 'internal scratch']
  %s0 = inlined_call_operand.vmem [shape: f32[40,265], index: 0, kind: input, shape index: {}]
  %s1 = inlined_call_operand.vmem [shape: bf16[265,128], index: 1, kind: input, shape index: {}]
  %s2 = inlined_call_operand.vmem [shape: f32[1,128], index: 2, kind: input, shape index: {}]
  %s3 = inlined_call_operand.vmem [shape: f32[1,128], index: 3, kind: input, shape index: {}]
  %s4 = inlined_call_operand.vmem [shape: f32[40,128], index: 4, kind: output, shape index: {}]
  %s5 = sld [smem:[#allocation0]]
  $region26: #{s4model_forward.3} parent=0
    _
  %s7 = ssub.s32 1, %s5
  %s8 = scalar_select 0, %s7, %s5
  // Predicated region
  $region2: #{s4model_forward.3} parent=0 // pred_check
    _
  $region3: #{s4model_forward.3} parent=0 // pred_check_branch
    %10 = sbr.rel (0) target = $region5
  $region4: #{s4model_forward.3} parent=0 // pred_region
    _
  $region5: #{s4model_forward.3} parent=0 // pred_fallthru
    _
  // Predicated region
  $region6: #{s4model_forward.3} parent=0 // pred_check
    _
  $region7: #{s4model_forward.3} parent=0 // pred_check_branch
    %12 = sbr.rel (0) target = $region9
  $region8: #{s4model_forward.3} parent=0 // pred_region
    _
  $region9: #{s4model_forward.3} parent=0 // pred_fallthru
    _
  // Predicated region
  $region10: #{s4model_forward.3} parent=0 // pred_check
    _
  $region11: #{s4model_forward.3} parent=0 // pred_check_branch
    %14 = sbr.rel (0) target = $region13
  $region12: #{s4model_forward.3} parent=0 // pred_region
    _
  $region13: #{s4model_forward.3} parent=0 // pred_fallthru
    _
  // Predicated region
  $region14: #{s4model_forward.3} parent=0 // pred_check
    _
  $region15: #{s4model_forward.3} parent=0 // pred_check_branch
    %16 = sbr.rel (0) target = $region17
  $region16: #{s4model_forward.3} parent=0 // pred_region
    _
  $region17: #{s4model_forward.3} parent=0 // pred_fallthru
    _
  %v18 = vld [vmem:[%s0] sm:$0xff]
  %v19 = vld [vmem:[%s0 + $0x8] sm:$0xff]
  %v20 = vld [vmem:[%s0 + $0x10] sm:$0xff]
  %v21 = vld [vmem:[%s0 + $0x18] sm:$0xff]
  %v22 = vld [vmem:[%s0 + $0x20] sm:$0xff]
  %v23 = vld [vmem:[%s0 + $0x28] sm:$0xff]
  %v24 = vld [vmem:[%s0 + $0x30] sm:$0xff]
  %v25 = vld [vmem:[%s0 + $0x38] sm:$0xff]
  %v26 = vld [vmem:[%s0 + $0x40] sm:$0xff]
  %v27 = vld [vmem:[%s0 + $0x48] sm:$0xff]
  %v28 = vld [vmem:[%s0 + $0x50] sm:$0xff]
  %v29 = vld [vmem:[%s0 + $0x58] sm:$0xff]
  %v30 = vld [vmem:[%s0 + $0x60] sm:$0xff]
  %v31 = vld [vmem:[%s0 + $0x68] sm:$0xff]
  %v32 = vld [vmem:[%s0 + $0x70] sm:$0xff]
  %v33 = vpack.c.bf16 %v21, %v18
  %v34 = vpack.c.bf16 %v22, %v19
  %v35 = vpack.c.bf16 %v23, %v20
  %v36 = vpack.c.bf16 %v27, %v24
  %v37 = vpack.c.bf16 %v28, %v25
  %v38 = vpack.c.bf16 %v29, %v26
  %v39 = vpack.c.bf16 %v30, %v30
  %v40 = vpack.c.bf16 %v31, %v31
  %v41 = vpack.c.bf16 %v32, %v32
  %v42 = vld [vmem:[%s1] sm:$0xf]
  %v43 = vld [vmem:[%s1 + $0x4] sm:$0xf]
  %v44 = vld [vmem:[%s1 + $0x8] sm:$0xf]
  %v45 = vld [vmem:[%s1 + $0xc] sm:$0xf]
  %v46 = vld [vmem:[%s1 + $0x10] sm:$0xf]
  %v47 = vld [vmem:[%s1 + $0x14] sm:$0xf]
  %v48 = vld [vmem:[%s1 + $0x18] sm:$0xf]
  %v49 = vld [vmem:[%s1 + $0x1c] sm:$0xf]
  %v50 = vld [vmem:[%s1 + $0x20] sm:$0xf]
  %v51 = vld [vmem:[%s1 + $0x24] sm:$0xf]
  %v52 = vld [vmem:[%s1 + $0x28] sm:$0xf]
  %v53 = vld [vmem:[%s1 + $0x2c] sm:$0xf]
  %v54 = vld [vmem:[%s1 + $0x30] sm:$0xf]
  %v55 = vld [vmem:[%s1 + $0x34] sm:$0xf]
  %v56 = vld [vmem:[%s1 + $0x38] sm:$0xf]
  %v57 = vld [vmem:[%s1 + $0x3c] sm:$0xf]
  %v58 = vld [vmem:[%s1 + $0x40] sm:$0xf]
  %v59 = vld [vmem:[%s1 + $0x44] sm:$0xf]
  %v60 = vld [vmem:[%s1 + $0x48] sm:$0xf]
  %v61 = vld [vmem:[%s1 + $0x4c] sm:$0xf]
  %v62 = vld [vmem:[%s1 + $0x50] sm:$0xf]
  %v63 = vld [vmem:[%s1 + $0x54] sm:$0xf]
  %v64 = vld [vmem:[%s1 + $0x58] sm:$0xf]
  %v65 = vld [vmem:[%s1 + $0x5c] sm:$0xf]
  %v66 = vld [vmem:[%s1 + $0x60] sm:$0xf]
  %v67 = vld [vmem:[%s1 + $0x64] sm:$0xf]
  %v68 = vld [vmem:[%s1 + $0x68] sm:$0xf]
  %v69 = vld [vmem:[%s1 + $0x6c] sm:$0xf]
  %v70 = vld [vmem:[%s1 + $0x70] sm:$0xf]
  %v71 = vld [vmem:[%s1 + $0x74] sm:$0xf]
  %v72 = vld [vmem:[%s1 + $0x78] sm:$0xf]
  %v73 = vld [vmem:[%s1 + $0x7c] sm:$0xf]
  %v74 = vld [vmem:[%s1 + $0x80] sm:$0xf]
  %v75 = vld [vmem:[%s1 + $0x84] sm:$0x1]
  %v110 = vunpack.c.l.b16 %v42
  %v111 = vunpack.c.l.b16 %v43
  %v112 = vunpack.c.l.b16 %v44
  %v113 = vunpack.c.l.b16 %v45
  %v114 = vunpack.c.l.b16 %v46
  %v115 = vunpack.c.l.b16 %v47
  %v116 = vunpack.c.l.b16 %v48
  %v117 = vunpack.c.l.b16 %v49
  %v118 = vunpack.c.l.b16 %v50
  %v119 = vunpack.c.l.b16 %v51
  %v120 = vunpack.c.l.b16 %v52
  %v121 = vunpack.c.l.b16 %v53
  %v122 = vunpack.c.l.b16 %v54
  %v123 = vunpack.c.l.b16 %v55
  %v124 = vunpack.c.l.b16 %v56
  %v125 = vunpack.c.l.b16 %v57
  %v126 = vunpack.c.l.b16 %v58
  %v127 = vunpack.c.l.b16 %v59
  %v128 = vunpack.c.l.b16 %v60
  %v129 = vunpack.c.l.b16 %v61
  %v130 = vunpack.c.l.b16 %v62
  %v131 = vunpack.c.l.b16 %v63
  %v132 = vunpack.c.l.b16 %v64
  %v133 = vunpack.c.l.b16 %v65
  %v134 = vunpack.c.l.b16 %v66
  %v135 = vunpack.c.l.b16 %v67
  %v136 = vunpack.c.l.b16 %v68
  %v137 = vunpack.c.l.b16 %v69
  %v138 = vunpack.c.l.b16 %v70
  %v139 = vunpack.c.l.b16 %v71
  %v140 = vunpack.c.l.b16 %v72
  %v141 = vunpack.c.l.b16 %v73
  %v142 = vunpack.c.l.b16 %v74
  %v143 = vunpack.c.l.b16 %v75
  %v144 = vpack.c.b16 %v111, %v110
  %v145 = vpack.c.b16 %v113, %v112
  %v146 = vpack.c.b16 %v115, %v114
  %v147 = vpack.c.b16 %v117, %v116
  %v148 = vpack.c.b16 %v119, %v118
  %v149 = vpack.c.b16 %v121, %v120
  %v150 = vpack.c.b16 %v123, %v122
  %v151 = vpack.c.b16 %v125, %v124
  %v152 = vpack.c.b16 %v127, %v126
  %v153 = vpack.c.b16 %v129, %v128
  %v154 = vpack.c.b16 %v131, %v130
  %v155 = vpack.c.b16 %v133, %v132
  %v156 = vpack.c.b16 %v135, %v134
  %v157 = vpack.c.b16 %v137, %v136
  %v158 = vpack.c.b16 %v139, %v138
  %v159 = vpack.c.b16 %v141, %v140
  %v160 = vpack.c.b16 %v143, %v142
  %vm177 = vcmask 72704
  %v179 = vsel %vm177, %v35, 0
  %v182 = vsel %vm177, %v38, 0
  %v185 = vsel %vm177, %v41, 0
  %vm187 = vcmask 1043456
  %vm188 = vcmask 1044480
  %v189 = vsel %vm187, 4294967295, 65535
  %v190 = vsel %vm188, %v189, 0
  %v192 = vand.u32 %v160, %v190
  %194 = vmatprep.subr.bf16.mxu0 0
  %195 = vmatpush1.bf16.msra.mxu0 %v151
  %196 = vmatprep.subr.bf16.mxu0 0
  %197 = vmatpush1.bf16.msra.mxu0 %v150
  %198 = vmatprep.subr.bf16.mxu0 0
  %199 = vmatpush1.bf16.msra.mxu0 %v149
  %200 = vmatprep.subr.bf16.mxu0 0
  %201 = vmatpush1.bf16.msra.mxu0 %v148
  %202 = vmatprep.subr.bf16.mxu0 0
  %203 = vmatpush1.bf16.msra.mxu0 %v147
  %204 = vmatprep.subr.bf16.mxu0 0
  %205 = vmatpush1.bf16.msra.mxu0 %v146
  %206 = vmatprep.subr.bf16.mxu0 0
  %207 = vmatpush1.bf16.msra.mxu0 %v145
  %208 = vmatprep.subr.bf16.mxu0 0
  %209 = vmatpush1.bf16.msra.mxu0 %v144
  %210 = vmatprep.subr.bf16.mxu0 0
  %211 = vmatpush2.bf16.msra.mxu0 %v159
  %212 = vmatprep.subr.bf16.mxu0 0
  %213 = vmatpush2.bf16.msra.mxu0 %v158
  %214 = vmatprep.subr.bf16.mxu0 0
  %215 = vmatpush2.bf16.msra.mxu0 %v157
  %216 = vmatprep.subr.bf16.mxu0 0
  %217 = vmatpush2.bf16.msra.mxu0 %v156
  %218 = vmatprep.subr.bf16.mxu0 0
  %219 = vmatpush2.bf16.msra.mxu0 %v155
  %220 = vmatprep.subr.bf16.mxu0 0
  %221 = vmatpush2.bf16.msra.mxu0 %v154
  %222 = vmatprep.subr.bf16.mxu0 0
  %223 = vmatpush2.bf16.msra.mxu0 %v153
  %224 = vmatprep.subr.bf16.mxu0 0
  %225 = vmatpush2.bf16.msra.mxu0 %v152
  %226 = vmatprep.mubr.bf16.mxu0 %v34
  %227 = vmatmul.mubr.bf16.gmra.mxu0 %v33
  %v228 = vpop.f32.mrf.mxu0
  %v229 = vadd.f32 0.0, %v228
  %v230 = vpop.f32.mrf.mxu0
  %v231 = vpop.f32.mrf.mxu0
  %v232 = vadd.f32 0.0, %v231
  %v233 = vpop.f32.mrf.mxu0
  %234 = vmatprep.mubr.bf16.mxu0 %v37
  %235 = vmatmul.mubr.bf16.gmra.mxu0 %v36
  %v236 = vpop.f32.mrf.mxu0
  %v237 = vadd.f32 0.0, %v236
  %v238 = vpop.f32.mrf.mxu0
  %v239 = vpop.f32.mrf.mxu0
  %v240 = vadd.f32 0.0, %v239
  %v241 = vpop.f32.mrf.mxu0
  %242 = vmatprep.mubr.bf16.mxu0 %v40
  %243 = vmatmul.mubr.bf16.gmra.mxu0 %v39
  %v244 = vpop.f32.mrf.mxu0
  %v245 = vadd.f32 0.0, %v244
  %v246 = vpop.f32.mrf.mxu0
  %v247 = vpop.f32.mrf.mxu0
  %v248 = vpop.f32.mrf.mxu0
  %249 = vdwg.mxu0
  %250 = vmatprep.subr.bf16.mxu0 0
  %251 = vmatpush1.bf16.msra.mxu0 0
  %252 = vmatprep.subr.bf16.mxu0 0
  %253 = vmatpush1.bf16.msra.mxu0 0
  %254 = vmatprep.subr.bf16.mxu0 0
  %255 = vmatpush1.bf16.msra.mxu0 0
  %256 = vmatprep.subr.bf16.mxu0 0
  %257 = vmatpush1.bf16.msra.mxu0 0
  %258 = vmatprep.subr.bf16.mxu0 0
  %259 = vmatpush1.bf16.msra.mxu0 0
  %260 = vmatprep.subr.bf16.mxu0 0
  %261 = vmatpush1.bf16.msra.mxu0 0
  %262 = vmatprep.subr.bf16.mxu0 0
  %263 = vmatpush1.bf16.msra.mxu0 0
  %264 = vmatprep.subr.bf16.mxu0 0
  %265 = vmatpush1.bf16.msra.mxu0 %v192
  %266 = vmatprep.subr.bf16.mxu0 0
  %267 = vmatpush2.bf16.msra.mxu0 0
  %268 = vmatprep.subr.bf16.mxu0 0
  %269 = vmatpush2.bf16.msra.mxu0 0
  %270 = vmatprep.subr.bf16.mxu0 0
  %271 = vmatpush2.bf16.msra.mxu0 0
  %272 = vmatprep.subr.bf16.mxu0 0
  %273 = vmatpush2.bf16.msra.mxu0 0
  %274 = vmatprep.subr.bf16.mxu0 0
  %275 = vmatpush2.bf16.msra.mxu0 0
  %276 = vmatprep.subr.bf16.mxu0 0
  %277 = vmatpush2.bf16.msra.mxu0 0
  %278 = vmatprep.subr.bf16.mxu0 0
  %279 = vmatpush2.bf16.msra.mxu0 0
  %280 = vmatprep.subr.bf16.mxu0 0
  %281 = vmatpush2.bf16.msra.mxu0 0
  %282 = vmatprep.mubr.bf16.mxu0 0
  %283 = vmatmul.mubr.bf16.gmra.mxu0 %v179
  %v284 = vpop.f32.mrf.mxu0
  %v285 = vadd.f32 %v229, %v284
  %v286 = vpop.f32.mrf.mxu0
  %v287 = vpop.f32.mrf.mxu0
  %v288 = vadd.f32 %v232, %v287
  %v289 = vpop.f32.mrf.mxu0
  %290 = vmatprep.mubr.bf16.mxu0 0
  %291 = vmatmul.mubr.bf16.gmra.mxu0 %v182
  %v292 = vpop.f32.mrf.mxu0
  %v293 = vadd.f32 %v237, %v292
  %v294 = vpop.f32.mrf.mxu0
  %v295 = vpop.f32.mrf.mxu0
  %v296 = vadd.f32 %v240, %v295
  %v297 = vpop.f32.mrf.mxu0
  %298 = vmatprep.mubr.bf16.mxu0 0
  %299 = vmatmul.mubr.bf16.gmra.mxu0 %v185
  %v300 = vpop.f32.mrf.mxu0
  %v301 = vadd.f32 %v245, %v300
  %v302 = vpop.f32.mrf.mxu0
  %v303 = vpop.f32.mrf.mxu0
  %v304 = vpop.f32.mrf.mxu0
  %305 = vdwg.mxu0
  %v306 = vld [vmem:[%s2] sm:$0x1]
  %v308 = vlaneseq
  %v309 = vshrl.u32 %v308, 7
  %v310 = vsub.s32 0, %v309
  %v311 = vrot.slane %v306, %v310
  %v313 = vmul.f32 %v285, %v311
  %v314 = vmul.f32 %v288, %v311
  %v315 = vmul.f32 %v293, %v311
  %v316 = vmul.f32 %v296, %v311
  %v317 = vmul.f32 %v301, %v311
  %v318 = vld [vmem:[%s3] sm:$0x1]
  %v320 = vlaneseq
  %v321 = vshrl.u32 %v320, 7
  %v322 = vsub.s32 0, %v321
  %v323 = vrot.slane %v318, %v322
  %v325 = vadd.f32 %v313, %v323
  %v326 = vadd.f32 %v314, %v323
  %v327 = vadd.f32 %v315, %v323
  %v328 = vadd.f32 %v316, %v323
  %v329 = vadd.f32 %v317, %v323
  %v330 = vmax.f32 %v325, 0.0
  %v331 = vmax.f32 %v326, 0.0
  %v332 = vmax.f32 %v327, 0.0
  %v333 = vmax.f32 %v328, 0.0
  %v334 = vmax.f32 %v329, 0.0
  %335 = vst [vmem:[%s4] sm:$0xff] %v330
  %336 = vst [vmem:[%s4 + $0x8] sm:$0xff] %v331
  %337 = vst [vmem:[%s4 + $0x10] sm:$0xff] %v332
  %338 = vst [vmem:[%s4 + $0x18] sm:$0xff] %v333
  %339 = vst [vmem:[%s4 + $0x20] sm:$0xff] %v334
  // Predicated region
  $region18: #{s4model_forward.3} parent=0 // pred_check
    _
  $region19: #{s4model_forward.3} parent=0 // pred_check_branch
    %341 = sbr.rel (0) target = $region21
  $region20: #{s4model_forward.3} parent=0 // pred_region
    _
  $region21: #{s4model_forward.3} parent=0 // pred_fallthru
    _
  // Predicated region
  $region22: #{s4model_forward.3} parent=0 // pred_check
    _
  $region23: #{s4model_forward.3} parent=0 // pred_check_branch
    %343 = sbr.rel (0) target = $region25
  $region24: #{s4model_forward.3} parent=0 // pred_region
    _
  $region25: #{s4model_forward.3} parent=0 // pred_fallthru
    _

// kernel: s4model_forward.4
$region0: #{s4model_forward.4}
  #allocation0 [shape = 'u32[]', space=smem, size = 0x4, offset = 0x4, fixed_abs, tag = 'smem constant byte address 0x4 - core index']
  #allocation1 [shape = 'u32[144,128]{1,0:T(1,128)}', space=vmem, size = 0x12000, scoped, tag = 'internal scratch']
  %s0 = inlined_call_operand.vmem [shape: f32[16,768], index: 0, kind: input, shape index: {}]
  %s1 = inlined_call_operand.vmem [shape: bf16[768,128], index: 1, kind: input, shape index: {}]
  %s2 = inlined_call_operand.vmem [shape: f32[1,128], index: 2, kind: input, shape index: {}]
  %s3 = inlined_call_operand.vmem [shape: f32[1,128], index: 3, kind: input, shape index: {}]
  %s4 = inlined_call_operand.vmem [shape: f32[16,128], index: 4, kind: output, shape index: {}]
  %s5 = sld [smem:[#allocation0]]
  $region26: #{s4model_forward.4} parent=0
    _
  %s7 = ssub.s32 1, %s5
  %s8 = scalar_select 0, %s7, %s5
  // Predicated region
  $region2: #{s4model_forward.4} parent=0 // pred_check
    _
  $region3: #{s4model_forward.4} parent=0 // pred_check_branch
    %10 = sbr.rel (0) target = $region5
  $region4: #{s4model_forward.4} parent=0 // pred_region
    _
  $region5: #{s4model_forward.4} parent=0 // pred_fallthru
    _
  // Predicated region
  $region6: #{s4model_forward.4} parent=0 // pred_check
    _
  $region7: #{s4model_forward.4} parent=0 // pred_check_branch
    %12 = sbr.rel (0) target = $region9
  $region8: #{s4model_forward.4} parent=0 // pred_region
    _
  $region9: #{s4model_forward.4} parent=0 // pred_fallthru
    _
  // Predicated region
  $region10: #{s4model_forward.4} parent=0 // pred_check
    _
  $region11: #{s4model_forward.4} parent=0 // pred_check_branch
    %14 = sbr.rel (0) target = $region13
  $region12: #{s4model_forward.4} parent=0 // pred_region
    _
  $region13: #{s4model_forward.4} parent=0 // pred_fallthru
    _
  // Predicated region
  $region14: #{s4model_forward.4} parent=0 // pred_check
    _
  $region15: #{s4model_forward.4} parent=0 // pred_check_branch
    %16 = sbr.rel (0) target = $region17
  $region16: #{s4model_forward.4} parent=0 // pred_region
    _
  $region17: #{s4model_forward.4} parent=0 // pred_fallthru
    _
  %v18 = vld [vmem:[%s0] sm:$0xff]
  %v19 = vld [vmem:[%s0 + $0x8] sm:$0xff]
  %v20 = vld [vmem:[%s0 + $0x10] sm:$0xff]
  %v21 = vld [vmem:[%s0 + $0x18] sm:$0xff]
  %v22 = vld [vmem:[%s0 + $0x20] sm:$0xff]
  %v23 = vld [vmem:[%s0 + $0x28] sm:$0xff]
  %v24 = vld [vmem:[%s0 + $0x30] sm:$0xff]
  %v25 = vld [vmem:[%s0 + $0x38] sm:$0xff]
  %v26 = vld [vmem:[%s0 + $0x40] sm:$0xff]
  %v27 = vld [vmem:[%s0 + $0x48] sm:$0xff]
  %v28 = vld [vmem:[%s0 + $0x50] sm:$0xff]
  %v29 = vld [vmem:[%s0 + $0x58] sm:$0xff]
  %v30 = vpack.c.bf16 %v24, %v18
  %v31 = vpack.c.bf16 %v25, %v19
  %v32 = vpack.c.bf16 %v26, %v20
  %v33 = vpack.c.bf16 %v27, %v21
  %v34 = vpack.c.bf16 %v28, %v22
  %v35 = vpack.c.bf16 %v29, %v23
  %v36 = vld [vmem:[%s1] sm:$0xf]
  %v37 = vld [vmem:[%s1 + $0x4] sm:$0xf]
  %v38 = vld [vmem:[%s1 + $0x8] sm:$0xf]
  %v39 = vld [vmem:[%s1 + $0xc] sm:$0xf]
  %v40 = vld [vmem:[%s1 + $0x10] sm:$0xf]
  %v41 = vld [vmem:[%s1 + $0x14] sm:$0xf]
  %v42 = vld [vmem:[%s1 + $0x18] sm:$0xf]
  %v43 = vld [vmem:[%s1 + $0x1c] sm:$0xf]
  %v44 = vld [vmem:[%s1 + $0x20] sm:$0xf]
  %v45 = vld [vmem:[%s1 + $0x24] sm:$0xf]
  %v46 = vld [vmem:[%s1 + $0x28] sm:$0xf]
  %v47 = vld [vmem:[%s1 + $0x2c] sm:$0xf]
  %v48 = vld [vmem:[%s1 + $0x30] sm:$0xf]
  %v49 = vld [vmem:[%s1 + $0x34] sm:$0xf]
  %v50 = vld [vmem:[%s1 + $0x38] sm:$0xf]
  %v51 = vld [vmem:[%s1 + $0x3c] sm:$0xf]
  %v52 = vld [vmem:[%s1 + $0x40] sm:$0xf]
  %v53 = vld [vmem:[%s1 + $0x44] sm:$0xf]
  %v54 = vld [vmem:[%s1 + $0x48] sm:$0xf]
  %v55 = vld [vmem:[%s1 + $0x4c] sm:$0xf]
  %v56 = vld [vmem:[%s1 + $0x50] sm:$0xf]
  %v57 = vld [vmem:[%s1 + $0x54] sm:$0xf]
  %v58 = vld [vmem:[%s1 + $0x58] sm:$0xf]
  %v59 = vld [vmem:[%s1 + $0x5c] sm:$0xf]
  %v60 = vld [vmem:[%s1 + $0x60] sm:$0xf]
  %v61 = vld [vmem:[%s1 + $0x64] sm:$0xf]
  %v62 = vld [vmem:[%s1 + $0x68] sm:$0xf]
  %v63 = vld [vmem:[%s1 + $0x6c] sm:$0xf]
  %v64 = vld [vmem:[%s1 + $0x70] sm:$0xf]
  %v65 = vld [vmem:[%s1 + $0x74] sm:$0xf]
  %v66 = vld [vmem:[%s1 + $0x78] sm:$0xf]
  %v67 = vld [vmem:[%s1 + $0x7c] sm:$0xf]
  %v68 = vld [vmem:[%s1 + $0x80] sm:$0xf]
  %v69 = vld [vmem:[%s1 + $0x84] sm:$0xf]
  %v70 = vld [vmem:[%s1 + $0x88] sm:$0xf]
  %v71 = vld [vmem:[%s1 + $0x8c] sm:$0xf]
  %v72 = vld [vmem:[%s1 + $0x90] sm:$0xf]
  %v73 = vld [vmem:[%s1 + $0x94] sm:$0xf]
  %v74 = vld [vmem:[%s1 + $0x98] sm:$0xf]
  %v75 = vld [vmem:[%s1 + $0x9c] sm:$0xf]
  %v76 = vld [vmem:[%s1 + $0xa0] sm:$0xf]
  %v77 = vld [vmem:[%s1 + $0xa4] sm:$0xf]
  %v78 = vld [vmem:[%s1 + $0xa8] sm:$0xf]
  %v79 = vld [vmem:[%s1 + $0xac] sm:$0xf]
  %v80 = vld [vmem:[%s1 + $0xb0] sm:$0xf]
  %v81 = vld [vmem:[%s1 + $0xb4] sm:$0xf]
  %v82 = vld [vmem:[%s1 + $0xb8] sm:$0xf]
  %v83 = vld [vmem:[%s1 + $0xbc] sm:$0xf]
  %v84 = vld [vmem:[%s1 + $0xc0] sm:$0xf]
  %v85 = vld [vmem:[%s1 + $0xc4] sm:$0xf]
  %v86 = vld [vmem:[%s1 + $0xc8] sm:$0xf]
  %v87 = vld [vmem:[%s1 + $0xcc] sm:$0xf]
  %v88 = vld [vmem:[%s1 + $0xd0] sm:$0xf]
  %v89 = vld [vmem:[%s1 + $0xd4] sm:$0xf]
  %v90 = vld [vmem:[%s1 + $0xd8] sm:$0xf]
  %v91 = vld [vmem:[%s1 + $0xdc] sm:$0xf]
  %v92 = vld [vmem:[%s1 + $0xe0] sm:$0xf]
  %v93 = vld [vmem:[%s1 + $0xe4] sm:$0xf]
  %v94 = vld [vmem:[%s1 + $0xe8] sm:$0xf]
  %v95 = vld [vmem:[%s1 + $0xec] sm:$0xf]
  %v96 = vld [vmem:[%s1 + $0xf0] sm:$0xf]
  %v97 = vld [vmem:[%s1 + $0xf4] sm:$0xf]
  %v98 = vld [vmem:[%s1 + $0xf8] sm:$0xf]
  %v99 = vld [vmem:[%s1 + $0xfc] sm:$0xf]
  %v100 = vld [vmem:[%s1 + $0x100] sm:$0xf]
  %v101 = vld [vmem:[%s1 + $0x104] sm:$0xf]
  %v102 = vld [vmem:[%s1 + $0x108] sm:$0xf]
  %v103 = vld [vmem:[%s1 + $0x10c] sm:$0xf]
  %v104 = vld [vmem:[%s1 + $0x110] sm:$0xf]
  %v105 = vld [vmem:[%s1 + $0x114] sm:$0xf]
  %v106 = vld [vmem:[%s1 + $0x118] sm:$0xf]
  %v107 = vld [vmem:[%s1 + $0x11c] sm:$0xf]
  %v108 = vld [vmem:[%s1 + $0x120] sm:$0xf]
  %v109 = vld [vmem:[%s1 + $0x124] sm:$0xf]
  %v110 = vld [vmem:[%s1 + $0x128] sm:$0xf]
  %v111 = vld [vmem:[%s1 + $0x12c] sm:$0xf]
  %v112 = vld [vmem:[%s1 + $0x130] sm:$0xf]
  %v113 = vld [vmem:[%s1 + $0x134] sm:$0xf]
  %v114 = vld [vmem:[%s1 + $0x138] sm:$0xf]
  %v115 = vld [vmem:[%s1 + $0x13c] sm:$0xf]
  %v116 = vld [vmem:[%s1 + $0x140] sm:$0xf]
  %v117 = vld [vmem:[%s1 + $0x144] sm:$0xf]
  %v118 = vld [vmem:[%s1 + $0x148] sm:$0xf]
  %v119 = vld [vmem:[%s1 + $0x14c] sm:$0xf]
  %v120 = vld [vmem:[%s1 + $0x150] sm:$0xf]
  %v121 = vld [vmem:[%s1 + $0x154] sm:$0xf]
  %v122 = vld [vmem:[%s1 + $0x158] sm:$0xf]
  %v123 = vld [vmem:[%s1 + $0x15c] sm:$0xf]
  %v124 = vld [vmem:[%s1 + $0x160] sm:$0xf]
  %v125 = vld [vmem:[%s1 + $0x164] sm:$0xf]
  %v126 = vld [vmem:[%s1 + $0x168] sm:$0xf]
  %v127 = vld [vmem:[%s1 + $0x16c] sm:$0xf]
  %v128 = vld [vmem:[%s1 + $0x170] sm:$0xf]
  %v129 = vld [vmem:[%s1 + $0x174] sm:$0xf]
  %v130 = vld [vmem:[%s1 + $0x178] sm:$0xf]
  %v131 = vld [vmem:[%s1 + $0x17c] sm:$0xf]
  %v228 = vunpack.c.l.b16 %v36
  %v229 = vunpack.c.l.b16 %v37
  %v230 = vunpack.c.l.b16 %v38
  %v231 = vunpack.c.l.b16 %v39
  %v232 = vunpack.c.l.b16 %v40
  %v233 = vunpack.c.l.b16 %v41
  %v234 = vunpack.c.l.b16 %v42
  %v235 = vunpack.c.l.b16 %v43
  %v236 = vunpack.c.l.b16 %v44
  %v237 = vunpack.c.l.b16 %v45
  %v238 = vunpack.c.l.b16 %v46
  %v239 = vunpack.c.l.b16 %v47
  %v240 = vunpack.c.l.b16 %v48
  %v241 = vunpack.c.l.b16 %v49
  %v242 = vunpack.c.l.b16 %v50
  %v243 = vunpack.c.l.b16 %v51
  %v244 = vunpack.c.l.b16 %v52
  %v245 = vunpack.c.l.b16 %v53
  %v246 = vunpack.c.l.b16 %v54
  %v247 = vunpack.c.l.b16 %v55
  %v248 = vunpack.c.l.b16 %v56
  %v249 = vunpack.c.l.b16 %v57
  %v250 = vunpack.c.l.b16 %v58
  %v251 = vunpack.c.l.b16 %v59
  %v252 = vunpack.c.l.b16 %v60
  %v253 = vunpack.c.l.b16 %v61
  %v254 = vunpack.c.l.b16 %v62
  %v255 = vunpack.c.l.b16 %v63
  %v256 = vunpack.c.l.b16 %v64
  %v257 = vunpack.c.l.b16 %v65
  %v258 = vunpack.c.l.b16 %v66
  %v259 = vunpack.c.l.b16 %v67
  %v260 = vunpack.c.l.b16 %v68
  %v261 = vunpack.c.l.b16 %v69
  %v262 = vunpack.c.l.b16 %v70
  %v263 = vunpack.c.l.b16 %v71
  %v264 = vunpack.c.l.b16 %v72
  %v265 = vunpack.c.l.b16 %v73
  %v266 = vunpack.c.l.b16 %v74
  %v267 = vunpack.c.l.b16 %v75
  %v268 = vunpack.c.l.b16 %v76
  %v269 = vunpack.c.l.b16 %v77
  %v270 = vunpack.c.l.b16 %v78
  %v271 = vunpack.c.l.b16 %v79
  %v272 = vunpack.c.l.b16 %v80
  %v273 = vunpack.c.l.b16 %v81
  %v274 = vunpack.c.l.b16 %v82
  %v275 = vunpack.c.l.b16 %v83
  %v276 = vunpack.c.l.b16 %v84
  %v277 = vunpack.c.l.b16 %v85
  %v278 = vunpack.c.l.b16 %v86
  %v279 = vunpack.c.l.b16 %v87
  %v280 = vunpack.c.l.b16 %v88
  %v281 = vunpack.c.l.b16 %v89
  %v282 = vunpack.c.l.b16 %v90
  %v283 = vunpack.c.l.b16 %v91
  %v284 = vunpack.c.l.b16 %v92
  %v285 = vunpack.c.l.b16 %v93
  %v286 = vunpack.c.l.b16 %v94
  %v287 = vunpack.c.l.b16 %v95
  %v288 = vunpack.c.l.b16 %v96
  %v289 = vunpack.c.l.b16 %v97
  %v290 = vunpack.c.l.b16 %v98
  %v291 = vunpack.c.l.b16 %v99
  %v292 = vunpack.c.l.b16 %v100
  %v293 = vunpack.c.l.b16 %v101
  %v294 = vunpack.c.l.b16 %v102
  %v295 = vunpack.c.l.b16 %v103
  %v296 = vunpack.c.l.b16 %v104
  %v297 = vunpack.c.l.b16 %v105
  %v298 = vunpack.c.l.b16 %v106
  %v299 = vunpack.c.l.b16 %v107
  %v300 = vunpack.c.l.b16 %v108
  %v301 = vunpack.c.l.b16 %v109
  %v302 = vunpack.c.l.b16 %v110
  %v303 = vunpack.c.l.b16 %v111
  %v304 = vunpack.c.l.b16 %v112
  %v305 = vunpack.c.l.b16 %v113
  %v306 = vunpack.c.l.b16 %v114
  %v307 = vunpack.c.l.b16 %v115
  %v308 = vunpack.c.l.b16 %v116
  %v309 = vunpack.c.l.b16 %v117
  %v310 = vunpack.c.l.b16 %v118
  %v311 = vunpack.c.l.b16 %v119
  %v312 = vunpack.c.l.b16 %v120
  %v313 = vunpack.c.l.b16 %v121
  %v314 = vunpack.c.l.b16 %v122
  %v315 = vunpack.c.l.b16 %v123
  %v316 = vunpack.c.l.b16 %v124
  %v317 = vunpack.c.l.b16 %v125
  %v318 = vunpack.c.l.b16 %v126
  %v319 = vunpack.c.l.b16 %v127
  %v320 = vunpack.c.l.b16 %v128
  %v321 = vunpack.c.l.b16 %v129
  %v322 = vunpack.c.l.b16 %v130
  %v323 = vunpack.c.l.b16 %v131
  %v324 = vpack.c.b16 %v229, %v228
  %v325 = vpack.c.b16 %v231, %v230
  %v326 = vpack.c.b16 %v233, %v232
  %v327 = vpack.c.b16 %v235, %v234
  %v328 = vpack.c.b16 %v237, %v236
  %v329 = vpack.c.b16 %v239, %v238
  %v330 = vpack.c.b16 %v241, %v240
  %v331 = vpack.c.b16 %v243, %v242
  %v332 = vpack.c.b16 %v245, %v244
  %v333 = vpack.c.b16 %v247, %v246
  %v334 = vpack.c.b16 %v249, %v248
  %v335 = vpack.c.b16 %v251, %v250
  %v336 = vpack.c.b16 %v253, %v252
  %v337 = vpack.c.b16 %v255, %v254
  %v338 = vpack.c.b16 %v257, %v256
  %v339 = vpack.c.b16 %v259, %v258
  %v340 = vpack.c.b16 %v261, %v260
  %v341 = vpack.c.b16 %v263, %v262
  %v342 = vpack.c.b16 %v265, %v264
  %v343 = vpack.c.b16 %v267, %v266
  %v344 = vpack.c.b16 %v269, %v268
  %v345 = vpack.c.b16 %v271, %v270
  %v346 = vpack.c.b16 %v273, %v272
  %v347 = vpack.c.b16 %v275, %v274
  %v348 = vpack.c.b16 %v277, %v276
  %v349 = vpack.c.b16 %v279, %v278
  %v350 = vpack.c.b16 %v281, %v280
  %v351 = vpack.c.b16 %v283, %v282
  %v352 = vpack.c.b16 %v285, %v284
  %v353 = vpack.c.b16 %v287, %v286
  %v354 = vpack.c.b16 %v289, %v288
  %v355 = vpack.c.b16 %v291, %v290
  %v356 = vpack.c.b16 %v293, %v292
  %v357 = vpack.c.b16 %v295, %v294
  %v358 = vpack.c.b16 %v297, %v296
  %v359 = vpack.c.b16 %v299, %v298
  %v360 = vpack.c.b16 %v301, %v300
  %v361 = vpack.c.b16 %v303, %v302
  %v362 = vpack.c.b16 %v305, %v304
  %v363 = vpack.c.b16 %v307, %v306
  %v364 = vpack.c.b16 %v309, %v308
  %v365 = vpack.c.b16 %v311, %v310
  %v366 = vpack.c.b16 %v313, %v312
  %v367 = vpack.c.b16 %v315, %v314
  %v368 = vpack.c.b16 %v317, %v316
  %v369 = vpack.c.b16 %v319, %v318
  %v370 = vpack.c.b16 %v321, %v320
  %v371 = vpack.c.b16 %v323, %v322
  %420 = vmatprep.subr.bf16.mxu0 0
  %421 = vmatpush1.bf16.msra.mxu0 %v331
  %422 = vmatprep.subr.bf16.mxu0 0
  %423 = vmatpush1.bf16.msra.mxu0 %v330
  %424 = vmatprep.subr.bf16.mxu0 0
  %425 = vmatpush1.bf16.msra.mxu0 %v329
  %426 = vmatprep.subr.bf16.mxu0 0
  %427 = vmatpush1.bf16.msra.mxu0 %v328
  %428 = vmatprep.subr.bf16.mxu0 0
  %429 = vmatpush1.bf16.msra.mxu0 %v327
  %430 = vmatprep.subr.bf16.mxu0 0
  %431 = vmatpush1.bf16.msra.mxu0 %v326
  %432 = vmatprep.subr.bf16.mxu0 0
  %433 = vmatpush1.bf16.msra.mxu0 %v325
  %434 = vmatprep.subr.bf16.mxu0 0
  %435 = vmatpush1.bf16.msra.mxu0 %v324
  %436 = vmatprep.subr.bf16.mxu0 0
  %437 = vmatpush2.bf16.msra.mxu0 %v339
  %438 = vmatprep.subr.bf16.mxu0 0
  %439 = vmatpush2.bf16.msra.mxu0 %v338
  %440 = vmatprep.subr.bf16.mxu0 0
  %441 = vmatpush2.bf16.msra.mxu0 %v337
  %442 = vmatprep.subr.bf16.mxu0 0
  %443 = vmatpush2.bf16.msra.mxu0 %v336
  %444 = vmatprep.subr.bf16.mxu0 0
  %445 = vmatpush2.bf16.msra.mxu0 %v335
  %446 = vmatprep.subr.bf16.mxu0 0
  %447 = vmatpush2.bf16.msra.mxu0 %v334
  %448 = vmatprep.subr.bf16.mxu0 0
  %449 = vmatpush2.bf16.msra.mxu0 %v333
  %450 = vmatprep.subr.bf16.mxu0 0
  %451 = vmatpush2.bf16.msra.mxu0 %v332
  %452 = vmatprep.mubr.bf16.mxu0 %v31
  %453 = vmatmul.mubr.bf16.gmra.mxu0 %v30
  %v454 = vpop.f32.mrf.mxu0
  %v455 = vadd.f32 0.0, %v454
  %v456 = vpop.f32.mrf.mxu0
  %v457 = vpop.f32.mrf.mxu0
  %v458 = vadd.f32 0.0, %v457
  %v459 = vpop.f32.mrf.mxu0
  %460 = vdwg.mxu0
  %461 = vmatprep.subr.bf16.mxu0 0
  %462 = vmatpush1.bf16.msra.mxu0 %v347
  %463 = vmatprep.subr.bf16.mxu0 0
  %464 = vmatpush1.bf16.msra.mxu0 %v346
  %465 = vmatprep.subr.bf16.mxu0 0
  %466 = vmatpush1.bf16.msra.mxu0 %v345
  %467 = vmatprep.subr.bf16.mxu0 0
  %468 = vmatpush1.bf16.msra.mxu0 %v344
  %469 = vmatprep.subr.bf16.mxu0 0
  %470 = vmatpush1.bf16.msra.mxu0 %v343
  %471 = vmatprep.subr.bf16.mxu0 0
  %472 = vmatpush1.bf16.msra.mxu0 %v342
  %473 = vmatprep.subr.bf16.mxu0 0
  %474 = vmatpush1.bf16.msra.mxu0 %v341
  %475 = vmatprep.subr.bf16.mxu0 0
  %476 = vmatpush1.bf16.msra.mxu0 %v340
  %477 = vmatprep.subr.bf16.mxu0 0
  %478 = vmatpush2.bf16.msra.mxu0 %v355
  %479 = vmatprep.subr.bf16.mxu0 0
  %480 = vmatpush2.bf16.msra.mxu0 %v354
  %481 = vmatprep.subr.bf16.mxu0 0
  %482 = vmatpush2.bf16.msra.mxu0 %v353
  %483 = vmatprep.subr.bf16.mxu0 0
  %484 = vmatpush2.bf16.msra.mxu0 %v352
  %485 = vmatprep.subr.bf16.mxu0 0
  %486 = vmatpush2.bf16.msra.mxu0 %v351
  %487 = vmatprep.subr.bf16.mxu0 0
  %488 = vmatpush2.bf16.msra.mxu0 %v350
  %489 = vmatprep.subr.bf16.mxu0 0
  %490 = vmatpush2.bf16.msra.mxu0 %v349
  %491 = vmatprep.subr.bf16.mxu0 0
  %492 = vmatpush2.bf16.msra.mxu0 %v348
  %493 = vmatprep.mubr.bf16.mxu0 %v33
  %494 = vmatmul.mubr.bf16.gmra.mxu0 %v32
  %v495 = vpop.f32.mrf.mxu0
  %v496 = vadd.f32 %v455, %v495
  %v497 = vpop.f32.mrf.mxu0
  %v498 = vpop.f32.mrf.mxu0
  %v499 = vadd.f32 %v458, %v498
  %v500 = vpop.f32.mrf.mxu0
  %501 = vdwg.mxu0
  %502 = vmatprep.subr.bf16.mxu0 0
  %503 = vmatpush1.bf16.msra.mxu0 %v363
  %504 = vmatprep.subr.bf16.mxu0 0
  %505 = vmatpush1.bf16.msra.mxu0 %v362
  %506 = vmatprep.subr.bf16.mxu0 0
  %507 = vmatpush1.bf16.msra.mxu0 %v361
  %508 = vmatprep.subr.bf16.mxu0 0
  %509 = vmatpush1.bf16.msra.mxu0 %v360
  %510 = vmatprep.subr.bf16.mxu0 0
  %511 = vmatpush1.bf16.msra.mxu0 %v359
  %512 = vmatprep.subr.bf16.mxu0 0
  %513 = vmatpush1.bf16.msra.mxu0 %v358
  %514 = vmatprep.subr.bf16.mxu0 0
  %515 = vmatpush1.bf16.msra.mxu0 %v357
  %516 = vmatprep.subr.bf16.mxu0 0
  %517 = vmatpush1.bf16.msra.mxu0 %v356
  %518 = vmatprep.subr.bf16.mxu0 0
  %519 = vmatpush2.bf16.msra.mxu0 %v371
  %520 = vmatprep.subr.bf16.mxu0 0
  %521 = vmatpush2.bf16.msra.mxu0 %v370
  %522 = vmatprep.subr.bf16.mxu0 0
  %523 = vmatpush2.bf16.msra.mxu0 %v369
  %524 = vmatprep.subr.bf16.mxu0 0
  %525 = vmatpush2.bf16.msra.mxu0 %v368
  %526 = vmatprep.subr.bf16.mxu0 0
  %527 = vmatpush2.bf16.msra.mxu0 %v367
  %528 = vmatprep.subr.bf16.mxu0 0
  %529 = vmatpush2.bf16.msra.mxu0 %v366
  %530 = vmatprep.subr.bf16.mxu0 0
  %531 = vmatpush2.bf16.msra.mxu0 %v365
  %532 = vmatprep.subr.bf16.mxu0 0
  %533 = vmatpush2.bf16.msra.mxu0 %v364
  %534 = vmatprep.mubr.bf16.mxu0 %v35
  %535 = vmatmul.mubr.bf16.gmra.mxu0 %v34
  %v536 = vpop.f32.mrf.mxu0
  %v537 = vadd.f32 %v496, %v536
  %v538 = vpop.f32.mrf.mxu0
  %v539 = vpop.f32.mrf.mxu0
  %v540 = vadd.f32 %v499, %v539
  %v541 = vpop.f32.mrf.mxu0
  %542 = vdwg.mxu0
  %v543 = vld [vmem:[%s2] sm:$0x1]
  %v545 = vlaneseq
  %v546 = vshrl.u32 %v545, 7
  %v547 = vsub.s32 0, %v546
  %v548 = vrot.slane %v543, %v547
  %v550 = vmul.f32 %v537, %v548
  %v551 = vmul.f32 %v540, %v548
  %v552 = vld [vmem:[%s3] sm:$0x1]
  %v554 = vlaneseq
  %v555 = vshrl.u32 %v554, 7
  %v556 = vsub.s32 0, %v555
  %v557 = vrot.slane %v552, %v556
  %v559 = vadd.f32 %v550, %v557
  %v560 = vadd.f32 %v551, %v557
  %v561 = vmax.f32 %v559, 0.0
  %v562 = vmax.f32 %v560, 0.0
  %563 = vst [vmem:[%s4] sm:$0xff] %v561
  %564 = vst [vmem:[%s4 + $0x8] sm:$0xff] %v562
  // Predicated region
  $region18: #{s4model_forward.4} parent=0 // pred_check
    _
  $region19: #{s4model_forward.4} parent=0 // pred_check_branch
    %566 = sbr.rel (0) target = $region21
  $region20: #{s4model_forward.4} parent=0 // pred_region
    _
  $region21: #{s4model_forward.4} parent=0 // pred_fallthru
    _
  // Predicated region
  $region22: #{s4model_forward.4} parent=0 // pred_check
    _
  $region23: #{s4model_forward.4} parent=0 // pred_check_branch
    %568 = sbr.rel (0) target = $region25
  $region24: #{s4model_forward.4} parent=0 // pred_region
    _
  $region25: #{s4model_forward.4} parent=0 // pred_fallthru
    _

// kernel: s4model_forward.5
$region0: #{s4model_forward.5}
  #allocation0 [shape = 'u32[]', space=smem, size = 0x4, offset = 0x4, fixed_abs, tag = 'smem constant byte address 0x4 - core index']
  #allocation1 [shape = 'u32[144,128]{1,0:T(1,128)}', space=vmem, size = 0x12000, scoped, tag = 'internal scratch']
  %s0 = inlined_call_operand.vmem [shape: f32[16,128], index: 0, kind: input, shape index: {}]
  %s1 = inlined_call_operand.vmem [shape: f32[4,8,128], index: 1, kind: input, shape index: {}]
  %s2 = inlined_call_operand.vmem [shape: bf16[4,128,256], index: 2, kind: input, shape index: {}]
  %s3 = inlined_call_operand.vmem [shape: f32[4,1,256], index: 3, kind: input, shape index: {}]
  %s4 = inlined_call_operand.vmem [shape: f32[4,1,128], index: 4, kind: input, shape index: {}]
  %s5 = inlined_call_operand.vmem [shape: f32[4,1,128], index: 5, kind: input, shape index: {}]
  %s6 = inlined_call_operand.vmem [shape: f32[128,10], index: 6, kind: input, shape index: {}]
  %s7 = inlined_call_operand.vmem [shape: f32[1,10], index: 7, kind: input, shape index: {}]
  %s8 = inlined_call_operand.hbm [shape: f32[2,10], index: 8, kind: output, shape index: {}]
  %s9 = sld [smem:[#allocation0]]
  $region42: #{s4model_forward.5} parent=0
    _
  %s11 = ssub.s32 1, %s9
  %s12 = scalar_select 0, %s11, %s9
  $region1: #{s4model_forward.5} parent=0
    #allocation2 [shape = 'u8[1024]{0}', space=vmem, size = 0x400, scoped, tag = 'output window, operand 0, single buffered']
    #allocation3 [shape = 's32[1]{0}', space=sflag, size = 0x4, scoped, tag = 'scoped memory for s4model_forward.5']
    %13 = vsyncpa [#allocation3], 0
    // Predicated region
    $region2: #{s4model_forward.5} parent=1 // pred_check
      _
    $region3: #{s4model_forward.5} parent=1 // pred_check_branch
      %15 = sbr.rel (0) target = $region5
    $region4: #{s4model_forward.5} parent=1 // pred_region
      _
    $region5: #{s4model_forward.5} parent=1 // pred_fallthru
      _
    // Predicated region
    $region6: #{s4model_forward.5} parent=1 // pred_check
      _
    $region7: #{s4model_forward.5} parent=1 // pred_check_branch
      %17 = sbr.rel (0) target = $region9
    $region8: #{s4model_forward.5} parent=1 // pred_region
      _
    $region9: #{s4model_forward.5} parent=1 // pred_fallthru
      _
    // Predicated region
    $region10: #{s4model_forward.5} parent=1 // pred_check
      _
    $region11: #{s4model_forward.5} parent=1 // pred_check_branch
      %19 = sbr.rel (0) target = $region13
    $region12: #{s4model_forward.5} parent=1 // pred_region
      _
    $region13: #{s4model_forward.5} parent=1 // pred_fallthru
      _
    // Predicated region
    $region14: #{s4model_forward.5} parent=1 // pred_check
      _
    $region15: #{s4model_forward.5} parent=1 // pred_check_branch
      %21 = sbr.rel (0) target = $region17
    $region16: #{s4model_forward.5} parent=1 // pred_region
      _
    $region17: #{s4model_forward.5} parent=1 // pred_fallthru
      _
    // Predicated region
    $region18: #{s4model_forward.5} parent=1 // pred_check
      _
    $region19: #{s4model_forward.5} parent=1 // pred_check_branch
      %23 = sbr.rel (0) target = $region21
    $region20: #{s4model_forward.5} parent=1 // pred_region
      _
    $region21: #{s4model_forward.5} parent=1 // pred_fallthru
      _
    // Predicated region
    $region22: #{s4model_forward.5} parent=1 // pred_check
      _
    $region23: #{s4model_forward.5} parent=1 // pred_check_branch
      %25 = sbr.rel (0) target = $region25
    $region24: #{s4model_forward.5} parent=1 // pred_region
      _
    $region25: #{s4model_forward.5} parent=1 // pred_fallthru
      _
    // Predicated region
    $region26: #{s4model_forward.5} parent=1 // pred_check
      _
    $region27: #{s4model_forward.5} parent=1 // pred_check_branch
      %27 = sbr.rel (0) target = $region29
    $region28: #{s4model_forward.5} parent=1 // pred_region
      _
    $region29: #{s4model_forward.5} parent=1 // pred_fallthru
      _
    // Predicated region
    $region30: #{s4model_forward.5} parent=1 // pred_check
      _
    $region31: #{s4model_forward.5} parent=1 // pred_check_branch
      %29 = sbr.rel (0) target = $region33
    $region32: #{s4model_forward.5} parent=1 // pred_region
      _
    $region33: #{s4model_forward.5} parent=1 // pred_fallthru
      _
    %v31 = vld [vmem:[%s0] sm:$0xff]
    %v32 = vld [vmem:[%s0 + $0x8] sm:$0xff]
    %v33 = vlaneseq
    %v34 = vshrl.u32 %v33, 7
    %v35 = vadd.s32 %v34, 8
    %vm36 = vcmp.lt.s32.totalorder %v34, 0
    %v37 = vsub.s32 0, %v34
    %v38 = vsel %vm36, %v37, %v34
    %v39 = vshrl.u32 %v38, 3
    %v40 = vand.u32 %v38, 7
    %v41 = vsub.s32 0, %v40
    %v42 = vsel %vm36, %v41, %v40
    %vm43 = vcmp.lt.s32.totalorder %v35, 0
    %v44 = vsub.s32 0, %v35
    %v45 = vsel %vm43, %v44, %v35
    %v46 = vshrl.u32 %v45, 3
    %v47 = vand.u32 %v45, 7
    %v48 = vsub.s32 0, %v47
    %v49 = vsel %vm43, %v48, %v47
    %vm50 = vcmp.ne.s32.totalorder %v42, 0
    %vm51 = vcmp.ne.s32.totalorder %v49, 0
    %vm52 = vcmp.lt.s32.totalorder %v42, 0
    %vm53 = vcmp.lt.s32.totalorder %v49, 0
    %vm54 = vmand %vm52, %vm50
    %vm55 = vmand %vm53, %vm51
    %v56 = vadd.s32 %v42, 8
    %v57 = vadd.s32 %v49, 8
    %v58 = vsel %vm54, %v56, %v42
    %v59 = vsel %vm55, %v57, %v49
    %v60 = vld [vmem:[%s1] sm:$0xff]
    %v61 = vlaneseq
    %v62 = vshrl.u32 %v61, 7
    %v63 = vsub.s32 0, %v62
    %v64 = vrot.slane %v60, %v63
    %v65 = vmul.f32 %v31, %v64
    %v66 = vmul.f32 %v32, %v64
    %v67 = vrot.slane %v31, 7
    %v68 = vrot.slane %v32, 7
    %vm69 = vcmp.lt.s32.totalorder %v34, 1
    %v70 = vsel %vm69, %v67, %v68
    %v71 = vsel %vm69, %v68, %v67
    %vm72 = vcmp.ge.s32.totalorder %v58, 1
    %vm73 = vcmp.ge.s32.totalorder %v59, 1
    %v74 = vsel %vm72, 1, 0
    %v75 = vsel %vm73, 1, 0
    %vm76 = vcmp.eq.s32.totalorder %v74, 1
    %vm77 = vcmp.eq.s32.totalorder %v75, 1
    %v78 = vsel %vm76, %v71, 0.0
    %v79 = vsel %vm77, %v70, 0.0
    %v80 = vlaneseq
    %v81 = vshrl.u32 %v80, 7
    %v82 = vsub.s32 1, %v81
    %v83 = vrot.slane %v60, %v82
    %v84 = vmul.f32 %v78, %v83
    %v85 = vmul.f32 %v79, %v83
    %v86 = vadd.f32 %v65, %v84
    %v87 = vadd.f32 %v66, %v85
    %v88 = vrot.slane %v31, 6
    %v89 = vrot.slane %v32, 6
    %vm90 = vcmp.lt.s32.totalorder %v34, 2
    %v91 = vsel %vm90, %v88, %v89
    %v92 = vsel %vm90, %v89, %v88
    %vm93 = vcmp.ge.s32.totalorder %v58, 2
    %vm94 = vcmp.ge.s32.totalorder %v59, 2
    %v95 = vsel %vm93, 1, 0
    %v96 = vsel %vm94, 1, 0
    %vm97 = vcmp.eq.s32.totalorder %v95, 1
    %vm98 = vcmp.eq.s32.totalorder %v96, 1
    %v99 = vsel %vm97, %v92, 0.0
    %v100 = vsel %vm98, %v91, 0.0
    %v101 = vlaneseq
    %v102 = vshrl.u32 %v101, 7
    %v103 = vsub.s32 2, %v102
    %v104 = vrot.slane %v60, %v103
    %v105 = vmul.f32 %v99, %v104
    %v106 = vmul.f32 %v100, %v104
    %v107 = vadd.f32 %v86, %v105
    %v108 = vadd.f32 %v87, %v106
    %v109 = vrot.slane %v31, 5
    %v110 = vrot.slane %v32, 5
    %vm111 = vcmp.lt.s32.totalorder %v34, 3
    %v112 = vsel %vm111, %v109, %v110
    %v113 = vsel %vm111, %v110, %v109
    %vm114 = vcmp.ge.s32.totalorder %v58, 3
    %vm115 = vcmp.ge.s32.totalorder %v59, 3
    %v116 = vsel %vm114, 1, 0
    %v117 = vsel %vm115, 1, 0
    %vm118 = vcmp.eq.s32.totalorder %v116, 1
    %vm119 = vcmp.eq.s32.totalorder %v117, 1
    %v120 = vsel %vm118, %v113, 0.0
    %v121 = vsel %vm119, %v112, 0.0
    %v122 = vlaneseq
    %v123 = vshrl.u32 %v122, 7
    %v124 = vsub.s32 3, %v123
    %v125 = vrot.slane %v60, %v124
    %v126 = vmul.f32 %v120, %v125
    %v127 = vmul.f32 %v121, %v125
    %v128 = vadd.f32 %v107, %v126
    %v129 = vadd.f32 %v108, %v127
    %v130 = vrot.slane %v31, 4
    %v131 = vrot.slane %v32, 4
    %vm132 = vcmp.lt.s32.totalorder %v34, 4
    %v133 = vsel %vm132, %v130, %v131
    %v134 = vsel %vm132, %v131, %v130
    %vm135 = vcmp.ge.s32.totalorder %v58, 4
    %vm136 = vcmp.ge.s32.totalorder %v59, 4
    %v137 = vsel %vm135, 1, 0
    %v138 = vsel %vm136, 1, 0
    %vm139 = vcmp.eq.s32.totalorder %v137, 1
    %vm140 = vcmp.eq.s32.totalorder %v138, 1
    %v141 = vsel %vm139, %v134, 0.0
    %v142 = vsel %vm140, %v133, 0.0
    %v143 = vlaneseq
    %v144 = vshrl.u32 %v143, 7
    %v145 = vsub.s32 4, %v144
    %v146 = vrot.slane %v60, %v145
    %v147 = vmul.f32 %v141, %v146
    %v148 = vmul.f32 %v142, %v146
    %v149 = vadd.f32 %v128, %v147
    %v150 = vadd.f32 %v129, %v148
    %v151 = vrot.slane %v31, 3
    %v152 = vrot.slane %v32, 3
    %vm153 = vcmp.lt.s32.totalorder %v34, 5
    %v154 = vsel %vm153, %v151, %v152
    %v155 = vsel %vm153, %v152, %v151
    %vm156 = vcmp.ge.s32.totalorder %v58, 5
    %vm157 = vcmp.ge.s32.totalorder %v59, 5
    %v158 = vsel %vm156, 1, 0
    %v159 = vsel %vm157, 1, 0
    %vm160 = vcmp.eq.s32.totalorder %v158, 1
    %vm161 = vcmp.eq.s32.totalorder %v159, 1
    %v162 = vsel %vm160, %v155, 0.0
    %v163 = vsel %vm161, %v154, 0.0
    %v164 = vlaneseq
    %v165 = vshrl.u32 %v164, 7
    %v166 = vsub.s32 5, %v165
    %v167 = vrot.slane %v60, %v166
    %v168 = vmul.f32 %v162, %v167
    %v169 = vmul.f32 %v163, %v167
    %v170 = vadd.f32 %v149, %v168
    %v171 = vadd.f32 %v150, %v169
    %v172 = vrot.slane %v31, 2
    %v173 = vrot.slane %v32, 2
    %vm174 = vcmp.lt.s32.totalorder %v34, 6
    %v175 = vsel %vm174, %v172, %v173
    %v176 = vsel %vm174, %v173, %v172
    %vm177 = vcmp.ge.s32.totalorder %v58, 6
    %vm178 = vcmp.ge.s32.totalorder %v59, 6
    %v179 = vsel %vm177, 1, 0
    %v180 = vsel %vm178, 1, 0
    %vm181 = vcmp.eq.s32.totalorder %v179, 1
    %vm182 = vcmp.eq.s32.totalorder %v180, 1
    %v183 = vsel %vm181, %v176, 0.0
    %v184 = vsel %vm182, %v175, 0.0
    %v185 = vlaneseq
    %v186 = vshrl.u32 %v185, 7
    %v187 = vsub.s32 6, %v186
    %v188 = vrot.slane %v60, %v187
    %v189 = vmul.f32 %v183, %v188
    %v190 = vmul.f32 %v184, %v188
    %v191 = vadd.f32 %v170, %v189
    %v192 = vadd.f32 %v171, %v190
    %v193 = vrot.slane %v31, 1
    %v194 = vrot.slane %v32, 1
    %vm195 = vcmp.lt.s32.totalorder %v34, 7
    %v196 = vsel %vm195, %v193, %v194
    %v197 = vsel %vm195, %v194, %v193
    %vm198 = vcmp.ge.s32.totalorder %v58, 7
    %vm199 = vcmp.ge.s32.totalorder %v59, 7
    %v200 = vsel %vm198, 1, 0
    %v201 = vsel %vm199, 1, 0
    %vm202 = vcmp.eq.s32.totalorder %v200, 1
    %vm203 = vcmp.eq.s32.totalorder %v201, 1
    %v204 = vsel %vm202, %v197, 0.0
    %v205 = vsel %vm203, %v196, 0.0
    %v206 = vlaneseq
    %v207 = vshrl.u32 %v206, 7
    %v208 = vsub.s32 7, %v207
    %v209 = vrot.slane %v60, %v208
    %v210 = vmul.f32 %v204, %v209
    %v211 = vmul.f32 %v205, %v209
    %v212 = vadd.f32 %v191, %v210
    %v213 = vadd.f32 %v192, %v211
    %v214 = vmul.f32 %v212, 0.5
    %v215 = vmul.f32 %v213, 0.5
    %v216 = vmul.f32 %v212, 0.70710677
    %v217 = vmul.f32 %v213, 0.70710677
    %vm218 = vcmp.ge.f32.partialorder %v216, 0.0
    %vm219 = vcmp.ge.f32.partialorder %v217, 0.0
    %v220 = vsel %vm218, 1.0, -1.0
    %v221 = vsel %vm219, 1.0, -1.0
    %v222 = vand.u32 2147483647, %v216
    %v223 = vand.u32 2147483647, %v217
    %v224 = vmul.f32 %v222, 0.3275911
    %v225 = vmul.f32 %v223, 0.3275911
    %v226 = vadd.f32 %v224, 1.0
    %v227 = vadd.f32 %v225, 1.0
    %v228 = vrcp.pop %v226
    %v229 = vmul.f32 1.0, %v228
    %v230 = vrcp.pop %v227
    %v231 = vmul.f32 1.0, %v230
    %v232 = vmul.f32 %v229, 1.0614054
    %v233 = vmul.f32 %v231, 1.0614054
    %v234 = vadd.f32 %v232, -1.4531521
    %v235 = vadd.f32 %v233, -1.4531521
    %v236 = vmul.f32 %v234, %v229
    %v237 = vmul.f32 %v235, %v231
    %v238 = vadd.f32 %v236, 1.4214138
    %v239 = vadd.f32 %v237, 1.4214138
    %v240 = vmul.f32 %v238, %v229
    %v241 = vmul.f32 %v239, %v231
    %v242 = vadd.f32 %v240, -0.28449672
    %v243 = vadd.f32 %v241, -0.28449672
    %v244 = vmul.f32 %v242, %v229
    %v245 = vmul.f32 %v243, %v231
    %v246 = vadd.f32 %v244, 0.2548296
    %v247 = vadd.f32 %v245, 0.2548296
    %v248 = vmul.f32 %v246, %v229
    %v249 = vmul.f32 %v247, %v231
    %v250 = vsub.f32 0.0, %v222
    %v251 = vsub.f32 0.0, %v223
    %v252 = vmul.f32 %v250, %v222
    %v253 = vmul.f32 %v251, %v223
    %v254 = vmul.f32 %v252, 1.442695
    %v255 = vpow.pop %v254
    %v256 = vmul.f32 %v253, 1.442695
    %v257 = vpow.pop %v256
    %v258 = vmul.f32 %v248, %v255
    %v259 = vmul.f32 %v249, %v257
    %v260 = vsub.f32 1.0, %v258
    %v261 = vsub.f32 1.0, %v259
    %v262 = vmul.f32 %v220, %v260
    %v263 = vmul.f32 %v221, %v261
    %v264 = vadd.f32 %v262, 1.0
    %v265 = vadd.f32 %v263, 1.0
    %v266 = vmul.f32 %v214, %v264
    %v267 = vmul.f32 %v215, %v265
    %v268 = vpack.c.bf16 %v267, %v266
    %v269 = vld [vmem:[%s2] sm:$0xff]
    %v270 = vld [vmem:[%s2 + $0x8] sm:$0xff]
    %v271 = vld [vmem:[%s2 + $0x10] sm:$0xff]
    %v272 = vld [vmem:[%s2 + $0x18] sm:$0xff]
    %v273 = vld [vmem:[%s2 + $0x20] sm:$0xff]
    %v274 = vld [vmem:[%s2 + $0x28] sm:$0xff]
    %v275 = vld [vmem:[%s2 + $0x30] sm:$0xff]
    %v276 = vld [vmem:[%s2 + $0x38] sm:$0xff]
    %v277 = vld [vmem:[%s2 + $0x40] sm:$0xff]
    %v278 = vld [vmem:[%s2 + $0x48] sm:$0xff]
    %v279 = vld [vmem:[%s2 + $0x50] sm:$0xff]
    %v280 = vld [vmem:[%s2 + $0x58] sm:$0xff]
    %v281 = vld [vmem:[%s2 + $0x60] sm:$0xff]
    %v282 = vld [vmem:[%s2 + $0x68] sm:$0xff]
    %v283 = vld [vmem:[%s2 + $0x70] sm:$0xff]
    %v284 = vld [vmem:[%s2 + $0x78] sm:$0xff]
    %v285 = vld [vmem:[%s3] sm:$0x3]
    %v287 = vlaneseq
    %v288 = vshrl.u32 %v287, 7
    %v289 = vsub.s32 0, %v288
    %v290 = vrot.slane %v285, %v289
    %v291 = vlaneseq
    %v292 = vshrl.u32 %v291, 7
    %v293 = vsub.s32 1, %v292
    %v294 = vrot.slane %v285, %v293
    %v313 = vunpack.c.l.b16 %v269
    %v314 = vunpack.c.h.b16 %v269
    %v315 = vunpack.c.l.b16 %v270
    %v316 = vunpack.c.h.b16 %v270
    %v317 = vunpack.c.l.b16 %v271
    %v318 = vunpack.c.h.b16 %v271
    %v319 = vunpack.c.l.b16 %v272
    %v320 = vunpack.c.h.b16 %v272
    %v321 = vunpack.c.l.b16 %v273
    %v322 = vunpack.c.h.b16 %v273
    %v323 = vunpack.c.l.b16 %v274
    %v324 = vunpack.c.h.b16 %v274
    %v325 = vunpack.c.l.b16 %v275
    %v326 = vunpack.c.h.b16 %v275
    %v327 = vunpack.c.l.b16 %v276
    %v328 = vunpack.c.h.b16 %v276
    %v329 = vunpack.c.l.b16 %v277
    %v330 = vunpack.c.h.b16 %v277
    %v331 = vunpack.c.l.b16 %v278
    %v332 = vunpack.c.h.b16 %v278
    %v333 = vunpack.c.l.b16 %v279
    %v334 = vunpack.c.h.b16 %v279
    %v335 = vunpack.c.l.b16 %v280
    %v336 = vunpack.c.h.b16 %v280
    %v337 = vunpack.c.l.b16 %v281
    %v338 = vunpack.c.h.b16 %v281
    %v339 = vunpack.c.l.b16 %v282
    %v340 = vunpack.c.h.b16 %v282
    %v341 = vunpack.c.l.b16 %v283
    %v342 = vunpack.c.h.b16 %v283
    %v343 = vunpack.c.l.b16 %v284
    %v344 = vunpack.c.h.b16 %v284
    %v345 = vpack.c.b16 %v315, %v313
    %v346 = vpack.c.b16 %v316, %v314
    %v347 = vpack.c.b16 %v319, %v317
    %v348 = vpack.c.b16 %v320, %v318
    %v349 = vpack.c.b16 %v323, %v321
    %v350 = vpack.c.b16 %v324, %v322
    %v351 = vpack.c.b16 %v327, %v325
    %v352 = vpack.c.b16 %v328, %v326
    %v353 = vpack.c.b16 %v331, %v329
    %v354 = vpack.c.b16 %v332, %v330
    %v355 = vpack.c.b16 %v335, %v333
    %v356 = vpack.c.b16 %v336, %v334
    %v357 = vpack.c.b16 %v339, %v337
    %v358 = vpack.c.b16 %v340, %v338
    %v359 = vpack.c.b16 %v343, %v341
    %v360 = vpack.c.b16 %v344, %v342
    %377 = vmatprep.subr.bf16.mxu0 %v360
    %378 = vmatpush1.bf16.msra.mxu0 %v359
    %379 = vmatprep.subr.bf16.mxu0 %v358
    %380 = vmatpush1.bf16.msra.mxu0 %v357
    %381 = vmatprep.subr.bf16.mxu0 %v356
    %382 = vmatpush1.bf16.msra.mxu0 %v355
    %383 = vmatprep.subr.bf16.mxu0 %v354
    %384 = vmatpush1.bf16.msra.mxu0 %v353
    %385 = vmatprep.subr.bf16.mxu0 %v352
    %386 = vmatpush1.bf16.msra.mxu0 %v351
    %387 = vmatprep.subr.bf16.mxu0 %v350
    %388 = vmatpush1.bf16.msra.mxu0 %v349
    %389 = vmatprep.subr.bf16.mxu0 %v348
    %390 = vmatpush1.bf16.msra.mxu0 %v347
    %391 = vmatprep.subr.bf16.mxu0 %v346
    %392 = vmatpush1.bf16.msra.mxu0 %v345
    %393 = vmatprep.subr.bf16.mxu0 0
    %394 = vmatpush2.bf16.msra.mxu0 0
    %395 = vmatprep.subr.bf16.mxu0 0
    %396 = vmatpush2.bf16.msra.mxu0 0
    %397 = vmatprep.subr.bf16.mxu0 0
    %398 = vmatpush2.bf16.msra.mxu0 0
    %399 = vmatprep.subr.bf16.mxu0 0
    %400 = vmatpush2.bf16.msra.mxu0 0
    %401 = vmatprep.subr.bf16.mxu0 0
    %402 = vmatpush2.bf16.msra.mxu0 0
    %403 = vmatprep.subr.bf16.mxu0 0
    %404 = vmatpush2.bf16.msra.mxu0 0
    %405 = vmatprep.subr.bf16.mxu0 0
    %406 = vmatpush2.bf16.msra.mxu0 0
    %407 = vmatprep.subr.bf16.mxu0 0
    %408 = vmatpush2.bf16.msra.mxu0 0
    %409 = vmatprep.mubr.bf16.mxu0 0
    %410 = vmatmul.mubr.bf16.gmra.mxu0 %v268
    %v411 = vpop.f32.mrf.mxu0
    %v412 = vadd.f32 %v290, %v411
    %v413 = vpop.f32.mrf.mxu0
    %v414 = vadd.f32 %v294, %v413
    %v415 = vpop.f32.mrf.mxu0
    %v416 = vadd.f32 %v290, %v415
    %v417 = vpop.f32.mrf.mxu0
    %v418 = vadd.f32 %v294, %v417
    %419 = vdwg.mxu0
    %v420 = vxor.u32 %v414, 2147483648
    %v421 = vxor.u32 %v418, 2147483648
    %v422 = vmul.f32 %v420, 1.442695
    %v423 = vpow.pop %v422
    %v424 = vmul.f32 %v421, 1.442695
    %v425 = vpow.pop %v424
    %v426 = vadd.f32 %v423, 1.0
    %v427 = vadd.f32 %v425, 1.0
    %v428 = vrcp.pop %v426
    %v429 = vmul.f32 1.0, %v428
    %v430 = vrcp.pop %v427
    %v431 = vmul.f32 1.0, %v430
    %v432 = vmul.f32 %v412, %v429
    %v433 = vmul.f32 %v416, %v431
    %v434 = vadd.f32 %v432, %v31
    %v435 = vadd.f32 %v433, %v32
    %436 = vadd.xlane.f32.xlu0 %v434
    %v437 = vpop.xlane.xlu0 %436
    %438 = vadd.xlane.f32.xlu0 %v435
    %v439 = vpop.xlane.xlu0 %438
    %v440 = vrcp.pop 128.0
    %v441 = vmul.f32 %v437, %v440
    %v442 = vmul.f32 %v439, %v440
    %v443 = vsub.f32 %v434, %v441
    %v444 = vsub.f32 %v435, %v442
    %v445 = vmul.f32 %v443, %v443
    %v446 = vmul.f32 %v444, %v444
    %447 = vadd.xlane.f32.xlu0 %v445
    %v448 = vpop.xlane.xlu0 %447
    %449 = vadd.xlane.f32.xlu0 %v446
    %v450 = vpop.xlane.xlu0 %449
    %v451 = vmul.f32 %v448, %v440
    %v452 = vmul.f32 %v450, %v440
    %v453 = vadd.f32 %v451, 1e-05
    %v454 = vadd.f32 %v452, 1e-05
    %v455 = vrsqrt.pop %v453
    %v456 = vrsqrt.pop %v454
    %v457 = vmul.f32 %v443, %v455
    %v458 = vmul.f32 %v444, %v456
    %v459 = vld [vmem:[%s4] sm:$0x1]
    %v461 = vlaneseq
    %v462 = vshrl.u32 %v461, 7
    %v463 = vsub.s32 0, %v462
    %v464 = vrot.slane %v459, %v463
    %v466 = vmul.f32 %v457, %v464
    %v467 = vmul.f32 %v458, %v464
    %v468 = vld [vmem:[%s5] sm:$0x1]
    %v470 = vlaneseq
    %v471 = vshrl.u32 %v470, 7
    %v472 = vsub.s32 0, %v471
    %v473 = vrot.slane %v468, %v472
    %v475 = vadd.f32 %v466, %v473
    %v476 = vadd.f32 %v467, %v473
    %s477 = scalar_lea.vmem %s1, 8
    %v478 = vld [vmem:[%s477] sm:$0xff]
    %v479 = vlaneseq
    %v480 = vshrl.u32 %v479, 7
    %v481 = vsub.s32 0, %v480
    %v482 = vrot.slane %v478, %v481
    %v483 = vmul.f32 %v475, %v482
    %v484 = vmul.f32 %v476, %v482
    %v485 = vrot.slane %v475, 7
    %v486 = vrot.slane %v476, 7
    %v487 = vsel %vm69, %v485, %v486
    %v488 = vsel %vm69, %v486, %v485
    %v489 = vsel %vm76, %v488, 0.0
    %v490 = vsel %vm77, %v487, 0.0
    %v491 = vlaneseq
    %v492 = vshrl.u32 %v491, 7
    %v493 = vsub.s32 1, %v492
    %v494 = vrot.slane %v478, %v493
    %v495 = vmul.f32 %v489, %v494
    %v496 = vmul.f32 %v490, %v494
    %v497 = vadd.f32 %v483, %v495
    %v498 = vadd.f32 %v484, %v496
    %v499 = vrot.slane %v475, 6
    %v500 = vrot.slane %v476, 6
    %v501 = vsel %vm90, %v499, %v500
    %v502 = vsel %vm90, %v500, %v499
    %v503 = vsel %vm97, %v502, 0.0
    %v504 = vsel %vm98, %v501, 0.0
    %v505 = vlaneseq
    %v506 = vshrl.u32 %v505, 7
    %v507 = vsub.s32 2, %v506
    %v508 = vrot.slane %v478, %v507
    %v509 = vmul.f32 %v503, %v508
    %v510 = vmul.f32 %v504, %v508
    %v511 = vadd.f32 %v497, %v509
    %v512 = vadd.f32 %v498, %v510
    %v513 = vrot.slane %v475, 5
    %v514 = vrot.slane %v476, 5
    %v515 = vsel %vm111, %v513, %v514
    %v516 = vsel %vm111, %v514, %v513
    %v517 = vsel %vm118, %v516, 0.0
    %v518 = vsel %vm119, %v515, 0.0
    %v519 = vlaneseq
    %v520 = vshrl.u32 %v519, 7
    %v521 = vsub.s32 3, %v520
    %v522 = vrot.slane %v478, %v521
    %v523 = vmul.f32 %v517, %v522
    %v524 = vmul.f32 %v518, %v522
    %v525 = vadd.f32 %v511, %v523
    %v526 = vadd.f32 %v512, %v524
    %v527 = vrot.slane %v475, 4
    %v528 = vrot.slane %v476, 4
    %v529 = vsel %vm132, %v527, %v528
    %v530 = vsel %vm132, %v528, %v527
    %v531 = vsel %vm139, %v530, 0.0
    %v532 = vsel %vm140, %v529, 0.0
    %v533 = vlaneseq
    %v534 = vshrl.u32 %v533, 7
    %v535 = vsub.s32 4, %v534
    %v536 = vrot.slane %v478, %v535
    %v537 = vmul.f32 %v531, %v536
    %v538 = vmul.f32 %v532, %v536
    %v539 = vadd.f32 %v525, %v537
    %v540 = vadd.f32 %v526, %v538
    %v541 = vrot.slane %v475, 3
    %v542 = vrot.slane %v476, 3
    %v543 = vsel %vm153, %v541, %v542
    %v544 = vsel %vm153, %v542, %v541
    %v545 = vsel %vm160, %v544, 0.0
    %v546 = vsel %vm161, %v543, 0.0
    %v547 = vlaneseq
    %v548 = vshrl.u32 %v547, 7
    %v549 = vsub.s32 5, %v548
    %v550 = vrot.slane %v478, %v549
    %v551 = vmul.f32 %v545, %v550
    %v552 = vmul.f32 %v546, %v550
    %v553 = vadd.f32 %v539, %v551
    %v554 = vadd.f32 %v540, %v552
    %v555 = vrot.slane %v475, 2
    %v556 = vrot.slane %v476, 2
    %v557 = vsel %vm174, %v555, %v556
    %v558 = vsel %vm174, %v556, %v555
    %v559 = vsel %vm181, %v558, 0.0
    %v560 = vsel %vm182, %v557, 0.0
    %v561 = vlaneseq
    %v562 = vshrl.u32 %v561, 7
    %v563 = vsub.s32 6, %v562
    %v564 = vrot.slane %v478, %v563
    %v565 = vmul.f32 %v559, %v564
    %v566 = vmul.f32 %v560, %v564
    %v567 = vadd.f32 %v553, %v565
    %v568 = vadd.f32 %v554, %v566
    %v569 = vrot.slane %v475, 1
    %v570 = vrot.slane %v476, 1
    %v571 = vsel %vm195, %v569, %v570
    %v572 = vsel %vm195, %v570, %v569
    %v573 = vsel %vm202, %v572, 0.0
    %v574 = vsel %vm203, %v571, 0.0
    %v575 = vlaneseq
    %v576 = vshrl.u32 %v575, 7
    %v577 = vsub.s32 7, %v576
    %v578 = vrot.slane %v478, %v577
    %v579 = vmul.f32 %v573, %v578
    %v580 = vmul.f32 %v574, %v578
    %v581 = vadd.f32 %v567, %v579
    %v582 = vadd.f32 %v568, %v580
    %v583 = vmul.f32 %v581, 0.5
    %v584 = vmul.f32 %v582, 0.5
    %v585 = vmul.f32 %v581, 0.70710677
    %v586 = vmul.f32 %v582, 0.70710677
    %vm587 = vcmp.ge.f32.partialorder %v585, 0.0
    %vm588 = vcmp.ge.f32.partialorder %v586, 0.0
    %v589 = vsel %vm587, 1.0, -1.0
    %v590 = vsel %vm588, 1.0, -1.0
    %v591 = vand.u32 2147483647, %v585
    %v592 = vand.u32 2147483647, %v586
    %v593 = vmul.f32 %v591, 0.3275911
    %v594 = vmul.f32 %v592, 0.3275911
    %v595 = vadd.f32 %v593, 1.0
    %v596 = vadd.f32 %v594, 1.0
    %v597 = vrcp.pop %v595
    %v598 = vmul.f32 1.0, %v597
    %v599 = vrcp.pop %v596
    %v600 = vmul.f32 1.0, %v599
    %v601 = vmul.f32 %v598, 1.0614054
    %v602 = vmul.f32 %v600, 1.0614054
    %v603 = vadd.f32 %v601, -1.4531521
    %v604 = vadd.f32 %v602, -1.4531521
    %v605 = vmul.f32 %v603, %v598
    %v606 = vmul.f32 %v604, %v600
    %v607 = vadd.f32 %v605, 1.4214138
    %v608 = vadd.f32 %v606, 1.4214138
    %v609 = vmul.f32 %v607, %v598
    %v610 = vmul.f32 %v608, %v600
    %v611 = vadd.f32 %v609, -0.28449672
    %v612 = vadd.f32 %v610, -0.28449672
    %v613 = vmul.f32 %v611, %v598
    %v614 = vmul.f32 %v612, %v600
    %v615 = vadd.f32 %v613, 0.2548296
    %v616 = vadd.f32 %v614, 0.2548296
    %v617 = vmul.f32 %v615, %v598
    %v618 = vmul.f32 %v616, %v600
    %v619 = vsub.f32 0.0, %v591
    %v620 = vsub.f32 0.0, %v592
    %v621 = vmul.f32 %v619, %v591
    %v622 = vmul.f32 %v620, %v592
    %v623 = vmul.f32 %v621, 1.442695
    %v624 = vpow.pop %v623
    %v625 = vmul.f32 %v622, 1.442695
    %v626 = vpow.pop %v625
    %v627 = vmul.f32 %v617, %v624
    %v628 = vmul.f32 %v618, %v626
    %v629 = vsub.f32 1.0, %v627
    %v630 = vsub.f32 1.0, %v628
    %v631 = vmul.f32 %v589, %v629
    %v632 = vmul.f32 %v590, %v630
    %v633 = vadd.f32 %v631, 1.0
    %v634 = vadd.f32 %v632, 1.0
    %v635 = vmul.f32 %v583, %v633
    %v636 = vmul.f32 %v584, %v634
    %v637 = vpack.c.bf16 %v636, %v635
    %s638 = scalar_lea.vmem %s2, 128
    %v639 = vld [vmem:[%s638] sm:$0xff]
    %v640 = vld [vmem:[%s638 + $0x8] sm:$0xff]
    %v641 = vld [vmem:[%s638 + $0x10] sm:$0xff]
    %v642 = vld [vmem:[%s638 + $0x18] sm:$0xff]
    %v643 = vld [vmem:[%s638 + $0x20] sm:$0xff]
    %v644 = vld [vmem:[%s638 + $0x28] sm:$0xff]
    %v645 = vld [vmem:[%s638 + $0x30] sm:$0xff]
    %v646 = vld [vmem:[%s638 + $0x38] sm:$0xff]
    %v647 = vld [vmem:[%s638 + $0x40] sm:$0xff]
    %v648 = vld [vmem:[%s638 + $0x48] sm:$0xff]
    %v649 = vld [vmem:[%s638 + $0x50] sm:$0xff]
    %v650 = vld [vmem:[%s638 + $0x58] sm:$0xff]
    %v651 = vld [vmem:[%s638 + $0x60] sm:$0xff]
    %v652 = vld [vmem:[%s638 + $0x68] sm:$0xff]
    %v653 = vld [vmem:[%s638 + $0x70] sm:$0xff]
    %v654 = vld [vmem:[%s638 + $0x78] sm:$0xff]
    %s655 = scalar_lea.vmem %s3, 2
    %v656 = vld [vmem:[%s655] sm:$0x3]
    %v658 = vlaneseq
    %v659 = vshrl.u32 %v658, 7
    %v660 = vsub.s32 0, %v659
    %v661 = vrot.slane %v656, %v660
    %v662 = vlaneseq
    %v663 = vshrl.u32 %v662, 7
    %v664 = vsub.s32 1, %v663
    %v665 = vrot.slane %v656, %v664
    %v684 = vunpack.c.l.b16 %v639
    %v685 = vunpack.c.h.b16 %v639
    %v686 = vunpack.c.l.b16 %v640
    %v687 = vunpack.c.h.b16 %v640
    %v688 = vunpack.c.l.b16 %v641
    %v689 = vunpack.c.h.b16 %v641
    %v690 = vunpack.c.l.b16 %v642
    %v691 = vunpack.c.h.b16 %v642
    %v692 = vunpack.c.l.b16 %v643
    %v693 = vunpack.c.h.b16 %v643
    %v694 = vunpack.c.l.b16 %v644
    %v695 = vunpack.c.h.b16 %v644
    %v696 = vunpack.c.l.b16 %v645
    %v697 = vunpack.c.h.b16 %v645
    %v698 = vunpack.c.l.b16 %v646
    %v699 = vunpack.c.h.b16 %v646
    %v700 = vunpack.c.l.b16 %v647
    %v701 = vunpack.c.h.b16 %v647
    %v702 = vunpack.c.l.b16 %v648
    %v703 = vunpack.c.h.b16 %v648
    %v704 = vunpack.c.l.b16 %v649
    %v705 = vunpack.c.h.b16 %v649
    %v706 = vunpack.c.l.b16 %v650
    %v707 = vunpack.c.h.b16 %v650
    %v708 = vunpack.c.l.b16 %v651
    %v709 = vunpack.c.h.b16 %v651
    %v710 = vunpack.c.l.b16 %v652
    %v711 = vunpack.c.h.b16 %v652
    %v712 = vunpack.c.l.b16 %v653
    %v713 = vunpack.c.h.b16 %v653
    %v714 = vunpack.c.l.b16 %v654
    %v715 = vunpack.c.h.b16 %v654
    %v716 = vpack.c.b16 %v686, %v684
    %v717 = vpack.c.b16 %v687, %v685
    %v718 = vpack.c.b16 %v690, %v688
    %v719 = vpack.c.b16 %v691, %v689
    %v720 = vpack.c.b16 %v694, %v692
    %v721 = vpack.c.b16 %v695, %v693
    %v722 = vpack.c.b16 %v698, %v696
    %v723 = vpack.c.b16 %v699, %v697
    %v724 = vpack.c.b16 %v702, %v700
    %v725 = vpack.c.b16 %v703, %v701
    %v726 = vpack.c.b16 %v706, %v704
    %v727 = vpack.c.b16 %v707, %v705
    %v728 = vpack.c.b16 %v710, %v708
    %v729 = vpack.c.b16 %v711, %v709
    %v730 = vpack.c.b16 %v714, %v712
    %v731 = vpack.c.b16 %v715, %v713
    %748 = vmatprep.subr.bf16.mxu0 %v731
    %749 = vmatpush1.bf16.msra.mxu0 %v730
    %750 = vmatprep.subr.bf16.mxu0 %v729
    %751 = vmatpush1.bf16.msra.mxu0 %v728
    %752 = vmatprep.subr.bf16.mxu0 %v727
    %753 = vmatpush1.bf16.msra.mxu0 %v726
    %754 = vmatprep.subr.bf16.mxu0 %v725
    %755 = vmatpush1.bf16.msra.mxu0 %v724
    %756 = vmatprep.subr.bf16.mxu0 %v723
    %757 = vmatpush1.bf16.msra.mxu0 %v722
    %758 = vmatprep.subr.bf16.mxu0 %v721
    %759 = vmatpush1.bf16.msra.mxu0 %v720
    %760 = vmatprep.subr.bf16.mxu0 %v719
    %761 = vmatpush1.bf16.msra.mxu0 %v718
    %762 = vmatprep.subr.bf16.mxu0 %v717
    %763 = vmatpush1.bf16.msra.mxu0 %v716
    %764 = vmatprep.subr.bf16.mxu0 0
    %765 = vmatpush2.bf16.msra.mxu0 0
    %766 = vmatprep.subr.bf16.mxu0 0
    %767 = vmatpush2.bf16.msra.mxu0 0
    %768 = vmatprep.subr.bf16.mxu0 0
    %769 = vmatpush2.bf16.msra.mxu0 0
    %770 = vmatprep.subr.bf16.mxu0 0
    %771 = vmatpush2.bf16.msra.mxu0 0
    %772 = vmatprep.subr.bf16.mxu0 0
    %773 = vmatpush2.bf16.msra.mxu0 0
    %774 = vmatprep.subr.bf16.mxu0 0
    %775 = vmatpush2.bf16.msra.mxu0 0
    %776 = vmatprep.subr.bf16.mxu0 0
    %777 = vmatpush2.bf16.msra.mxu0 0
    %778 = vmatprep.subr.bf16.mxu0 0
    %779 = vmatpush2.bf16.msra.mxu0 0
    %780 = vmatprep.mubr.bf16.mxu0 0
    %781 = vmatmul.mubr.bf16.gmra.mxu0 %v637
    %v782 = vpop.f32.mrf.mxu0
    %v783 = vadd.f32 %v661, %v782
    %v784 = vpop.f32.mrf.mxu0
    %v785 = vadd.f32 %v665, %v784
    %v786 = vpop.f32.mrf.mxu0
    %v787 = vadd.f32 %v661, %v786
    %v788 = vpop.f32.mrf.mxu0
    %v789 = vadd.f32 %v665, %v788
    %790 = vdwg.mxu0
    %v791 = vxor.u32 %v785, 2147483648
    %v792 = vxor.u32 %v789, 2147483648
    %v793 = vmul.f32 %v791, 1.442695
    %v794 = vpow.pop %v793
    %v795 = vmul.f32 %v792, 1.442695
    %v796 = vpow.pop %v795
    %v797 = vadd.f32 %v794, 1.0
    %v798 = vadd.f32 %v796, 1.0
    %v799 = vrcp.pop %v797
    %v800 = vmul.f32 1.0, %v799
    %v801 = vrcp.pop %v798
    %v802 = vmul.f32 1.0, %v801
    %v803 = vmul.f32 %v783, %v800
    %v804 = vmul.f32 %v787, %v802
    %v805 = vadd.f32 %v803, %v475
    %v806 = vadd.f32 %v804, %v476
    %807 = vadd.xlane.f32.xlu0 %v805
    %v808 = vpop.xlane.xlu0 %807
    %809 = vadd.xlane.f32.xlu0 %v806
    %v810 = vpop.xlane.xlu0 %809
    %v811 = vmul.f32 %v808, %v440
    %v812 = vmul.f32 %v810, %v440
    %v813 = vsub.f32 %v805, %v811
    %v814 = vsub.f32 %v806, %v812
    %v815 = vmul.f32 %v813, %v813
    %v816 = vmul.f32 %v814, %v814
    %817 = vadd.xlane.f32.xlu0 %v815
    %v818 = vpop.xlane.xlu0 %817
    %819 = vadd.xlane.f32.xlu0 %v816
    %v820 = vpop.xlane.xlu0 %819
    %v821 = vmul.f32 %v818, %v440
    %v822 = vmul.f32 %v820, %v440
    %v823 = vadd.f32 %v821, 1e-05
    %v824 = vadd.f32 %v822, 1e-05
    %v825 = vrsqrt.pop %v823
    %v826 = vrsqrt.pop %v824
    %v827 = vmul.f32 %v813, %v825
    %v828 = vmul.f32 %v814, %v826
    %s829 = scalar_lea.vmem %s4, 1
    %v830 = vld [vmem:[%s829] sm:$0x1]
    %v832 = vlaneseq
    %v833 = vshrl.u32 %v832, 7
    %v834 = vsub.s32 0, %v833
    %v835 = vrot.slane %v830, %v834
    %v837 = vmul.f32 %v827, %v835
    %v838 = vmul.f32 %v828, %v835
    %s839 = scalar_lea.vmem %s5, 1
    %v840 = vld [vmem:[%s839] sm:$0x1]
    %v842 = vlaneseq
    %v843 = vshrl.u32 %v842, 7
    %v844 = vsub.s32 0, %v843
    %v845 = vrot.slane %v840, %v844
    %v847 = vadd.f32 %v837, %v845
    %v848 = vadd.f32 %v838, %v845
    %s849 = scalar_lea.vmem %s1, 16
    %v850 = vld [vmem:[%s849] sm:$0xff]
    %v851 = vlaneseq
    %v852 = vshrl.u32 %v851, 7
    %v853 = vsub.s32 0, %v852
    %v854 = vrot.slane %v850, %v853
    %v855 = vmul.f32 %v847, %v854
    %v856 = vmul.f32 %v848, %v854
    %v857 = vrot.slane %v847, 7
    %v858 = vrot.slane %v848, 7
    %v859 = vsel %vm69, %v857, %v858
    %v860 = vsel %vm69, %v858, %v857
    %v861 = vsel %vm76, %v860, 0.0
    %v862 = vsel %vm77, %v859, 0.0
    %v863 = vlaneseq
    %v864 = vshrl.u32 %v863, 7
    %v865 = vsub.s32 1, %v864
    %v866 = vrot.slane %v850, %v865
    %v867 = vmul.f32 %v861, %v866
    %v868 = vmul.f32 %v862, %v866
    %v869 = vadd.f32 %v855, %v867
    %v870 = vadd.f32 %v856, %v868
    %v871 = vrot.slane %v847, 6
    %v872 = vrot.slane %v848, 6
    %v873 = vsel %vm90, %v871, %v872
    %v874 = vsel %vm90, %v872, %v871
    %v875 = vsel %vm97, %v874, 0.0
    %v876 = vsel %vm98, %v873, 0.0
    %v877 = vlaneseq
    %v878 = vshrl.u32 %v877, 7
    %v879 = vsub.s32 2, %v878
    %v880 = vrot.slane %v850, %v879
    %v881 = vmul.f32 %v875, %v880
    %v882 = vmul.f32 %v876, %v880
    %v883 = vadd.f32 %v869, %v881
    %v884 = vadd.f32 %v870, %v882
    %v885 = vrot.slane %v847, 5
    %v886 = vrot.slane %v848, 5
    %v887 = vsel %vm111, %v885, %v886
    %v888 = vsel %vm111, %v886, %v885
    %v889 = vsel %vm118, %v888, 0.0
    %v890 = vsel %vm119, %v887, 0.0
    %v891 = vlaneseq
    %v892 = vshrl.u32 %v891, 7
    %v893 = vsub.s32 3, %v892
    %v894 = vrot.slane %v850, %v893
    %v895 = vmul.f32 %v889, %v894
    %v896 = vmul.f32 %v890, %v894
    %v897 = vadd.f32 %v883, %v895
    %v898 = vadd.f32 %v884, %v896
    %v899 = vrot.slane %v847, 4
    %v900 = vrot.slane %v848, 4
    %v901 = vsel %vm132, %v899, %v900
    %v902 = vsel %vm132, %v900, %v899
    %v903 = vsel %vm139, %v902, 0.0
    %v904 = vsel %vm140, %v901, 0.0
    %v905 = vlaneseq
    %v906 = vshrl.u32 %v905, 7
    %v907 = vsub.s32 4, %v906
    %v908 = vrot.slane %v850, %v907
    %v909 = vmul.f32 %v903, %v908
    %v910 = vmul.f32 %v904, %v908
    %v911 = vadd.f32 %v897, %v909
    %v912 = vadd.f32 %v898, %v910
    %v913 = vrot.slane %v847, 3
    %v914 = vrot.slane %v848, 3
    %v915 = vsel %vm153, %v913, %v914
    %v916 = vsel %vm153, %v914, %v913
    %v917 = vsel %vm160, %v916, 0.0
    %v918 = vsel %vm161, %v915, 0.0
    %v919 = vlaneseq
    %v920 = vshrl.u32 %v919, 7
    %v921 = vsub.s32 5, %v920
    %v922 = vrot.slane %v850, %v921
    %v923 = vmul.f32 %v917, %v922
    %v924 = vmul.f32 %v918, %v922
    %v925 = vadd.f32 %v911, %v923
    %v926 = vadd.f32 %v912, %v924
    %v927 = vrot.slane %v847, 2
    %v928 = vrot.slane %v848, 2
    %v929 = vsel %vm174, %v927, %v928
    %v930 = vsel %vm174, %v928, %v927
    %v931 = vsel %vm181, %v930, 0.0
    %v932 = vsel %vm182, %v929, 0.0
    %v933 = vlaneseq
    %v934 = vshrl.u32 %v933, 7
    %v935 = vsub.s32 6, %v934
    %v936 = vrot.slane %v850, %v935
    %v937 = vmul.f32 %v931, %v936
    %v938 = vmul.f32 %v932, %v936
    %v939 = vadd.f32 %v925, %v937
    %v940 = vadd.f32 %v926, %v938
    %v941 = vrot.slane %v847, 1
    %v942 = vrot.slane %v848, 1
    %v943 = vsel %vm195, %v941, %v942
    %v944 = vsel %vm195, %v942, %v941
    %v945 = vsel %vm202, %v944, 0.0
    %v946 = vsel %vm203, %v943, 0.0
    %v947 = vlaneseq
    %v948 = vshrl.u32 %v947, 7
    %v949 = vsub.s32 7, %v948
    %v950 = vrot.slane %v850, %v949
    %v951 = vmul.f32 %v945, %v950
    %v952 = vmul.f32 %v946, %v950
    %v953 = vadd.f32 %v939, %v951
    %v954 = vadd.f32 %v940, %v952
    %v955 = vmul.f32 %v953, 0.5
    %v956 = vmul.f32 %v954, 0.5
    %v957 = vmul.f32 %v953, 0.70710677
    %v958 = vmul.f32 %v954, 0.70710677
    %vm959 = vcmp.ge.f32.partialorder %v957, 0.0
    %vm960 = vcmp.ge.f32.partialorder %v958, 0.0
    %v961 = vsel %vm959, 1.0, -1.0
    %v962 = vsel %vm960, 1.0, -1.0
    %v963 = vand.u32 2147483647, %v957
    %v964 = vand.u32 2147483647, %v958
    %v965 = vmul.f32 %v963, 0.3275911
    %v966 = vmul.f32 %v964, 0.3275911
    %v967 = vadd.f32 %v965, 1.0
    %v968 = vadd.f32 %v966, 1.0
    %v969 = vrcp.pop %v967
    %v970 = vmul.f32 1.0, %v969
    %v971 = vrcp.pop %v968
    %v972 = vmul.f32 1.0, %v971
    %v973 = vmul.f32 %v970, 1.0614054
    %v974 = vmul.f32 %v972, 1.0614054
    %v975 = vadd.f32 %v973, -1.4531521
    %v976 = vadd.f32 %v974, -1.4531521
    %v977 = vmul.f32 %v975, %v970
    %v978 = vmul.f32 %v976, %v972
    %v979 = vadd.f32 %v977, 1.4214138
    %v980 = vadd.f32 %v978, 1.4214138
    %v981 = vmul.f32 %v979, %v970
    %v982 = vmul.f32 %v980, %v972
    %v983 = vadd.f32 %v981, -0.28449672
    %v984 = vadd.f32 %v982, -0.28449672
    %v985 = vmul.f32 %v983, %v970
    %v986 = vmul.f32 %v984, %v972
    %v987 = vadd.f32 %v985, 0.2548296
    %v988 = vadd.f32 %v986, 0.2548296
    %v989 = vmul.f32 %v987, %v970
    %v990 = vmul.f32 %v988, %v972
    %v991 = vsub.f32 0.0, %v963
    %v992 = vsub.f32 0.0, %v964
    %v993 = vmul.f32 %v991, %v963
    %v994 = vmul.f32 %v992, %v964
    %v995 = vmul.f32 %v993, 1.442695
    %v996 = vpow.pop %v995
    %v997 = vmul.f32 %v994, 1.442695
    %v998 = vpow.pop %v997
    %v999 = vmul.f32 %v989, %v996
    %v1000 = vmul.f32 %v990, %v998
    %v1001 = vsub.f32 1.0, %v999
    %v1002 = vsub.f32 1.0, %v1000
    %v1003 = vmul.f32 %v961, %v1001
    %v1004 = vmul.f32 %v962, %v1002
    %v1005 = vadd.f32 %v1003, 1.0
    %v1006 = vadd.f32 %v1004, 1.0
    %v1007 = vmul.f32 %v955, %v1005
    %v1008 = vmul.f32 %v956, %v1006
    %v1009 = vpack.c.bf16 %v1008, %v1007
    %s1010 = scalar_lea.vmem %s2, 256
    %v1011 = vld [vmem:[%s1010] sm:$0xff]
    %v1012 = vld [vmem:[%s1010 + $0x8] sm:$0xff]
    %v1013 = vld [vmem:[%s1010 + $0x10] sm:$0xff]
    %v1014 = vld [vmem:[%s1010 + $0x18] sm:$0xff]
    %v1015 = vld [vmem:[%s1010 + $0x20] sm:$0xff]
    %v1016 = vld [vmem:[%s1010 + $0x28] sm:$0xff]
    %v1017 = vld [vmem:[%s1010 + $0x30] sm:$0xff]
    %v1018 = vld [vmem:[%s1010 + $0x38] sm:$0xff]
    %v1019 = vld [vmem:[%s1010 + $0x40] sm:$0xff]
    %v1020 = vld [vmem:[%s1010 + $0x48] sm:$0xff]
    %v1021 = vld [vmem:[%s1010 + $0x50] sm:$0xff]
    %v1022 = vld [vmem:[%s1010 + $0x58] sm:$0xff]
    %v1023 = vld [vmem:[%s1010 + $0x60] sm:$0xff]
    %v1024 = vld [vmem:[%s1010 + $0x68] sm:$0xff]
    %v1025 = vld [vmem:[%s1010 + $0x70] sm:$0xff]
    %v1026 = vld [vmem:[%s1010 + $0x78] sm:$0xff]
    %s1027 = scalar_lea.vmem %s3, 4
    %v1028 = vld [vmem:[%s1027] sm:$0x3]
    %v1030 = vlaneseq
    %v1031 = vshrl.u32 %v1030, 7
    %v1032 = vsub.s32 0, %v1031
    %v1033 = vrot.slane %v1028, %v1032
    %v1034 = vlaneseq
    %v1035 = vshrl.u32 %v1034, 7
    %v1036 = vsub.s32 1, %v1035
    %v1037 = vrot.slane %v1028, %v1036
    %v1056 = vunpack.c.l.b16 %v1011
    %v1057 = vunpack.c.h.b16 %v1011
    %v1058 = vunpack.c.l.b16 %v1012
    %v1059 = vunpack.c.h.b16 %v1012
    %v1060 = vunpack.c.l.b16 %v1013
    %v1061 = vunpack.c.h.b16 %v1013
    %v1062 = vunpack.c.l.b16 %v1014
    %v1063 = vunpack.c.h.b16 %v1014
    %v1064 = vunpack.c.l.b16 %v1015
    %v1065 = vunpack.c.h.b16 %v1015
    %v1066 = vunpack.c.l.b16 %v1016
    %v1067 = vunpack.c.h.b16 %v1016
    %v1068 = vunpack.c.l.b16 %v1017
    %v1069 = vunpack.c.h.b16 %v1017
    %v1070 = vunpack.c.l.b16 %v1018
    %v1071 = vunpack.c.h.b16 %v1018
    %v1072 = vunpack.c.l.b16 %v1019
    %v1073 = vunpack.c.h.b16 %v1019
    %v1074 = vunpack.c.l.b16 %v1020
    %v1075 = vunpack.c.h.b16 %v1020
    %v1076 = vunpack.c.l.b16 %v1021
    %v1077 = vunpack.c.h.b16 %v1021
    %v1078 = vunpack.c.l.b16 %v1022
    %v1079 = vunpack.c.h.b16 %v1022
    %v1080 = vunpack.c.l.b16 %v1023
    %v1081 = vunpack.c.h.b16 %v1023
    %v1082 = vunpack.c.l.b16 %v1024
    %v1083 = vunpack.c.h.b16 %v1024
    %v1084 = vunpack.c.l.b16 %v1025
    %v1085 = vunpack.c.h.b16 %v1025
    %v1086 = vunpack.c.l.b16 %v1026
    %v1087 = vunpack.c.h.b16 %v1026
    %v1088 = vpack.c.b16 %v1058, %v1056
    %v1089 = vpack.c.b16 %v1059, %v1057
    %v1090 = vpack.c.b16 %v1062, %v1060
    %v1091 = vpack.c.b16 %v1063, %v1061
    %v1092 = vpack.c.b16 %v1066, %v1064
    %v1093 = vpack.c.b16 %v1067, %v1065
    %v1094 = vpack.c.b16 %v1070, %v1068
    %v1095 = vpack.c.b16 %v1071, %v1069
    %v1096 = vpack.c.b16 %v1074, %v1072
    %v1097 = vpack.c.b16 %v1075, %v1073
    %v1098 = vpack.c.b16 %v1078, %v1076
    %v1099 = vpack.c.b16 %v1079, %v1077
    %v1100 = vpack.c.b16 %v1082, %v1080
    %v1101 = vpack.c.b16 %v1083, %v1081
    %v1102 = vpack.c.b16 %v1086, %v1084
    %v1103 = vpack.c.b16 %v1087, %v1085
    %1120 = vmatprep.subr.bf16.mxu0 %v1103
    %1121 = vmatpush1.bf16.msra.mxu0 %v1102
    %1122 = vmatprep.subr.bf16.mxu0 %v1101
    %1123 = vmatpush1.bf16.msra.mxu0 %v1100
    %1124 = vmatprep.subr.bf16.mxu0 %v1099
    %1125 = vmatpush1.bf16.msra.mxu0 %v1098
    %1126 = vmatprep.subr.bf16.mxu0 %v1097
    %1127 = vmatpush1.bf16.msra.mxu0 %v1096
    %1128 = vmatprep.subr.bf16.mxu0 %v1095
    %1129 = vmatpush1.bf16.msra.mxu0 %v1094
    %1130 = vmatprep.subr.bf16.mxu0 %v1093
    %1131 = vmatpush1.bf16.msra.mxu0 %v1092
    %1132 = vmatprep.subr.bf16.mxu0 %v1091
    %1133 = vmatpush1.bf16.msra.mxu0 %v1090
    %1134 = vmatprep.subr.bf16.mxu0 %v1089
    %1135 = vmatpush1.bf16.msra.mxu0 %v1088
    %1136 = vmatprep.subr.bf16.mxu0 0
    %1137 = vmatpush2.bf16.msra.mxu0 0
    %1138 = vmatprep.subr.bf16.mxu0 0
    %1139 = vmatpush2.bf16.msra.mxu0 0
    %1140 = vmatprep.subr.bf16.mxu0 0
    %1141 = vmatpush2.bf16.msra.mxu0 0
    %1142 = vmatprep.subr.bf16.mxu0 0
    %1143 = vmatpush2.bf16.msra.mxu0 0
    %1144 = vmatprep.subr.bf16.mxu0 0
    %1145 = vmatpush2.bf16.msra.mxu0 0
    %1146 = vmatprep.subr.bf16.mxu0 0
    %1147 = vmatpush2.bf16.msra.mxu0 0
    %1148 = vmatprep.subr.bf16.mxu0 0
    %1149 = vmatpush2.bf16.msra.mxu0 0
    %1150 = vmatprep.subr.bf16.mxu0 0
    %1151 = vmatpush2.bf16.msra.mxu0 0
    %1152 = vmatprep.mubr.bf16.mxu0 0
    %1153 = vmatmul.mubr.bf16.gmra.mxu0 %v1009
    %v1154 = vpop.f32.mrf.mxu0
    %v1155 = vadd.f32 %v1033, %v1154
    %v1156 = vpop.f32.mrf.mxu0
    %v1157 = vadd.f32 %v1037, %v1156
    %v1158 = vpop.f32.mrf.mxu0
    %v1159 = vadd.f32 %v1033, %v1158
    %v1160 = vpop.f32.mrf.mxu0
    %v1161 = vadd.f32 %v1037, %v1160
    %1162 = vdwg.mxu0
    %v1163 = vxor.u32 %v1157, 2147483648
    %v1164 = vxor.u32 %v1161, 2147483648
    %v1165 = vmul.f32 %v1163, 1.442695
    %v1166 = vpow.pop %v1165
    %v1167 = vmul.f32 %v1164, 1.442695
    %v1168 = vpow.pop %v1167
    %v1169 = vadd.f32 %v1166, 1.0
    %v1170 = vadd.f32 %v1168, 1.0
    %v1171 = vrcp.pop %v1169
    %v1172 = vmul.f32 1.0, %v1171
    %v1173 = vrcp.pop %v1170
    %v1174 = vmul.f32 1.0, %v1173
    %v1175 = vmul.f32 %v1155, %v1172
    %v1176 = vmul.f32 %v1159, %v1174
    %v1177 = vadd.f32 %v1175, %v847
    %v1178 = vadd.f32 %v1176, %v848
    %1179 = vadd.xlane.f32.xlu0 %v1177
    %v1180 = vpop.xlane.xlu0 %1179
    %1181 = vadd.xlane.f32.xlu0 %v1178
    %v1182 = vpop.xlane.xlu0 %1181
    %v1183 = vmul.f32 %v1180, %v440
    %v1184 = vmul.f32 %v1182, %v440
    %v1185 = vsub.f32 %v1177, %v1183
    %v1186 = vsub.f32 %v1178, %v1184
    %v1187 = vmul.f32 %v1185, %v1185
    %v1188 = vmul.f32 %v1186, %v1186
    %1189 = vadd.xlane.f32.xlu0 %v1187
    %v1190 = vpop.xlane.xlu0 %1189
    %1191 = vadd.xlane.f32.xlu0 %v1188
    %v1192 = vpop.xlane.xlu0 %1191
    %v1193 = vmul.f32 %v1190, %v440
    %v1194 = vmul.f32 %v1192, %v440
    %v1195 = vadd.f32 %v1193, 1e-05
    %v1196 = vadd.f32 %v1194, 1e-05
    %v1197 = vrsqrt.pop %v1195
    %v1198 = vrsqrt.pop %v1196
    %v1199 = vmul.f32 %v1185, %v1197
    %v1200 = vmul.f32 %v1186, %v1198
    %s1201 = scalar_lea.vmem %s4, 2
    %v1202 = vld [vmem:[%s1201] sm:$0x1]
    %v1204 = vlaneseq
    %v1205 = vshrl.u32 %v1204, 7
    %v1206 = vsub.s32 0, %v1205
    %v1207 = vrot.slane %v1202, %v1206
    %v1209 = vmul.f32 %v1199, %v1207
    %v1210 = vmul.f32 %v1200, %v1207
    %s1211 = scalar_lea.vmem %s5, 2
    %v1212 = vld [vmem:[%s1211] sm:$0x1]
    %v1214 = vlaneseq
    %v1215 = vshrl.u32 %v1214, 7
    %v1216 = vsub.s32 0, %v1215
    %v1217 = vrot.slane %v1212, %v1216
    %v1219 = vadd.f32 %v1209, %v1217
    %v1220 = vadd.f32 %v1210, %v1217
    %s1221 = scalar_lea.vmem %s1, 24
    %v1222 = vld [vmem:[%s1221] sm:$0xff]
    %v1223 = vlaneseq
    %v1224 = vshrl.u32 %v1223, 7
    %v1225 = vsub.s32 0, %v1224
    %v1226 = vrot.slane %v1222, %v1225
    %v1227 = vmul.f32 %v1219, %v1226
    %v1228 = vmul.f32 %v1220, %v1226
    %v1229 = vrot.slane %v1219, 7
    %v1230 = vrot.slane %v1220, 7
    %v1231 = vsel %vm69, %v1229, %v1230
    %v1232 = vsel %vm69, %v1230, %v1229
    %v1233 = vsel %vm76, %v1232, 0.0
    %v1234 = vsel %vm77, %v1231, 0.0
    %v1235 = vlaneseq
    %v1236 = vshrl.u32 %v1235, 7
    %v1237 = vsub.s32 1, %v1236
    %v1238 = vrot.slane %v1222, %v1237
    %v1239 = vmul.f32 %v1233, %v1238
    %v1240 = vmul.f32 %v1234, %v1238
    %v1241 = vadd.f32 %v1227, %v1239
    %v1242 = vadd.f32 %v1228, %v1240
    %v1243 = vrot.slane %v1219, 6
    %v1244 = vrot.slane %v1220, 6
    %v1245 = vsel %vm90, %v1243, %v1244
    %v1246 = vsel %vm90, %v1244, %v1243
    %v1247 = vsel %vm97, %v1246, 0.0
    %v1248 = vsel %vm98, %v1245, 0.0
    %v1249 = vlaneseq
    %v1250 = vshrl.u32 %v1249, 7
    %v1251 = vsub.s32 2, %v1250
    %v1252 = vrot.slane %v1222, %v1251
    %v1253 = vmul.f32 %v1247, %v1252
    %v1254 = vmul.f32 %v1248, %v1252
    %v1255 = vadd.f32 %v1241, %v1253
    %v1256 = vadd.f32 %v1242, %v1254
    %v1257 = vrot.slane %v1219, 5
    %v1258 = vrot.slane %v1220, 5
    %v1259 = vsel %vm111, %v1257, %v1258
    %v1260 = vsel %vm111, %v1258, %v1257
    %v1261 = vsel %vm118, %v1260, 0.0
    %v1262 = vsel %vm119, %v1259, 0.0
    %v1263 = vlaneseq
    %v1264 = vshrl.u32 %v1263, 7
    %v1265 = vsub.s32 3, %v1264
    %v1266 = vrot.slane %v1222, %v1265
    %v1267 = vmul.f32 %v1261, %v1266
    %v1268 = vmul.f32 %v1262, %v1266
    %v1269 = vadd.f32 %v1255, %v1267
    %v1270 = vadd.f32 %v1256, %v1268
    %v1271 = vrot.slane %v1219, 4
    %v1272 = vrot.slane %v1220, 4
    %v1273 = vsel %vm132, %v1271, %v1272
    %v1274 = vsel %vm132, %v1272, %v1271
    %v1275 = vsel %vm139, %v1274, 0.0
    %v1276 = vsel %vm140, %v1273, 0.0
    %v1277 = vlaneseq
    %v1278 = vshrl.u32 %v1277, 7
    %v1279 = vsub.s32 4, %v1278
    %v1280 = vrot.slane %v1222, %v1279
    %v1281 = vmul.f32 %v1275, %v1280
    %v1282 = vmul.f32 %v1276, %v1280
    %v1283 = vadd.f32 %v1269, %v1281
    %v1284 = vadd.f32 %v1270, %v1282
    %v1285 = vrot.slane %v1219, 3
    %v1286 = vrot.slane %v1220, 3
    %v1287 = vsel %vm153, %v1285, %v1286
    %v1288 = vsel %vm153, %v1286, %v1285
    %v1289 = vsel %vm160, %v1288, 0.0
    %v1290 = vsel %vm161, %v1287, 0.0
    %v1291 = vlaneseq
    %v1292 = vshrl.u32 %v1291, 7
    %v1293 = vsub.s32 5, %v1292
    %v1294 = vrot.slane %v1222, %v1293
    %v1295 = vmul.f32 %v1289, %v1294
    %v1296 = vmul.f32 %v1290, %v1294
    %v1297 = vadd.f32 %v1283, %v1295
    %v1298 = vadd.f32 %v1284, %v1296
    %v1299 = vrot.slane %v1219, 2
    %v1300 = vrot.slane %v1220, 2
    %v1301 = vsel %vm174, %v1299, %v1300
    %v1302 = vsel %vm174, %v1300, %v1299
    %v1303 = vsel %vm181, %v1302, 0.0
    %v1304 = vsel %vm182, %v1301, 0.0
    %v1305 = vlaneseq
    %v1306 = vshrl.u32 %v1305, 7
    %v1307 = vsub.s32 6, %v1306
    %v1308 = vrot.slane %v1222, %v1307
    %v1309 = vmul.f32 %v1303, %v1308
    %v1310 = vmul.f32 %v1304, %v1308
    %v1311 = vadd.f32 %v1297, %v1309
    %v1312 = vadd.f32 %v1298, %v1310
    %v1313 = vrot.slane %v1219, 1
    %v1314 = vrot.slane %v1220, 1
    %v1315 = vsel %vm195, %v1313, %v1314
    %v1316 = vsel %vm195, %v1314, %v1313
    %v1317 = vsel %vm202, %v1316, 0.0
    %v1318 = vsel %vm203, %v1315, 0.0
    %v1319 = vlaneseq
    %v1320 = vshrl.u32 %v1319, 7
    %v1321 = vsub.s32 7, %v1320
    %v1322 = vrot.slane %v1222, %v1321
    %v1323 = vmul.f32 %v1317, %v1322
    %v1324 = vmul.f32 %v1318, %v1322
    %v1325 = vadd.f32 %v1311, %v1323
    %v1326 = vadd.f32 %v1312, %v1324
    %v1327 = vmul.f32 %v1325, 0.5
    %v1328 = vmul.f32 %v1326, 0.5
    %v1329 = vmul.f32 %v1325, 0.70710677
    %v1330 = vmul.f32 %v1326, 0.70710677
    %vm1331 = vcmp.ge.f32.partialorder %v1329, 0.0
    %vm1332 = vcmp.ge.f32.partialorder %v1330, 0.0
    %v1333 = vsel %vm1331, 1.0, -1.0
    %v1334 = vsel %vm1332, 1.0, -1.0
    %v1335 = vand.u32 2147483647, %v1329
    %v1336 = vand.u32 2147483647, %v1330
    %v1337 = vmul.f32 %v1335, 0.3275911
    %v1338 = vmul.f32 %v1336, 0.3275911
    %v1339 = vadd.f32 %v1337, 1.0
    %v1340 = vadd.f32 %v1338, 1.0
    %v1341 = vrcp.pop %v1339
    %v1342 = vmul.f32 1.0, %v1341
    %v1343 = vrcp.pop %v1340
    %v1344 = vmul.f32 1.0, %v1343
    %v1345 = vmul.f32 %v1342, 1.0614054
    %v1346 = vmul.f32 %v1344, 1.0614054
    %v1347 = vadd.f32 %v1345, -1.4531521
    %v1348 = vadd.f32 %v1346, -1.4531521
    %v1349 = vmul.f32 %v1347, %v1342
    %v1350 = vmul.f32 %v1348, %v1344
    %v1351 = vadd.f32 %v1349, 1.4214138
    %v1352 = vadd.f32 %v1350, 1.4214138
    %v1353 = vmul.f32 %v1351, %v1342
    %v1354 = vmul.f32 %v1352, %v1344
    %v1355 = vadd.f32 %v1353, -0.28449672
    %v1356 = vadd.f32 %v1354, -0.28449672
    %v1357 = vmul.f32 %v1355, %v1342
    %v1358 = vmul.f32 %v1356, %v1344
    %v1359 = vadd.f32 %v1357, 0.2548296
    %v1360 = vadd.f32 %v1358, 0.2548296
    %v1361 = vmul.f32 %v1359, %v1342
    %v1362 = vmul.f32 %v1360, %v1344
    %v1363 = vsub.f32 0.0, %v1335
    %v1364 = vsub.f32 0.0, %v1336
    %v1365 = vmul.f32 %v1363, %v1335
    %v1366 = vmul.f32 %v1364, %v1336
    %v1367 = vmul.f32 %v1365, 1.442695
    %v1368 = vpow.pop %v1367
    %v1369 = vmul.f32 %v1366, 1.442695
    %v1370 = vpow.pop %v1369
    %v1371 = vmul.f32 %v1361, %v1368
    %v1372 = vmul.f32 %v1362, %v1370
    %v1373 = vsub.f32 1.0, %v1371
    %v1374 = vsub.f32 1.0, %v1372
    %v1375 = vmul.f32 %v1333, %v1373
    %v1376 = vmul.f32 %v1334, %v1374
    %v1377 = vadd.f32 %v1375, 1.0
    %v1378 = vadd.f32 %v1376, 1.0
    %v1379 = vmul.f32 %v1327, %v1377
    %v1380 = vmul.f32 %v1328, %v1378
    %v1381 = vpack.c.bf16 %v1380, %v1379
    %s1382 = scalar_lea.vmem %s2, 384
    %v1383 = vld [vmem:[%s1382] sm:$0xff]
    %v1384 = vld [vmem:[%s1382 + $0x8] sm:$0xff]
    %v1385 = vld [vmem:[%s1382 + $0x10] sm:$0xff]
    %v1386 = vld [vmem:[%s1382 + $0x18] sm:$0xff]
    %v1387 = vld [vmem:[%s1382 + $0x20] sm:$0xff]
    %v1388 = vld [vmem:[%s1382 + $0x28] sm:$0xff]
    %v1389 = vld [vmem:[%s1382 + $0x30] sm:$0xff]
    %v1390 = vld [vmem:[%s1382 + $0x38] sm:$0xff]
    %v1391 = vld [vmem:[%s1382 + $0x40] sm:$0xff]
    %v1392 = vld [vmem:[%s1382 + $0x48] sm:$0xff]
    %v1393 = vld [vmem:[%s1382 + $0x50] sm:$0xff]
    %v1394 = vld [vmem:[%s1382 + $0x58] sm:$0xff]
    %v1395 = vld [vmem:[%s1382 + $0x60] sm:$0xff]
    %v1396 = vld [vmem:[%s1382 + $0x68] sm:$0xff]
    %v1397 = vld [vmem:[%s1382 + $0x70] sm:$0xff]
    %v1398 = vld [vmem:[%s1382 + $0x78] sm:$0xff]
    %s1399 = scalar_lea.vmem %s3, 6
    %v1400 = vld [vmem:[%s1399] sm:$0x3]
    %v1402 = vlaneseq
    %v1403 = vshrl.u32 %v1402, 7
    %v1404 = vsub.s32 0, %v1403
    %v1405 = vrot.slane %v1400, %v1404
    %v1406 = vlaneseq
    %v1407 = vshrl.u32 %v1406, 7
    %v1408 = vsub.s32 1, %v1407
    %v1409 = vrot.slane %v1400, %v1408
    %v1428 = vunpack.c.l.b16 %v1383
    %v1429 = vunpack.c.h.b16 %v1383
    %v1430 = vunpack.c.l.b16 %v1384
    %v1431 = vunpack.c.h.b16 %v1384
    %v1432 = vunpack.c.l.b16 %v1385
    %v1433 = vunpack.c.h.b16 %v1385
    %v1434 = vunpack.c.l.b16 %v1386
    %v1435 = vunpack.c.h.b16 %v1386
    %v1436 = vunpack.c.l.b16 %v1387
    %v1437 = vunpack.c.h.b16 %v1387
    %v1438 = vunpack.c.l.b16 %v1388
    %v1439 = vunpack.c.h.b16 %v1388
    %v1440 = vunpack.c.l.b16 %v1389
    %v1441 = vunpack.c.h.b16 %v1389
    %v1442 = vunpack.c.l.b16 %v1390
    %v1443 = vunpack.c.h.b16 %v1390
    %v1444 = vunpack.c.l.b16 %v1391
    %v1445 = vunpack.c.h.b16 %v1391
    %v1446 = vunpack.c.l.b16 %v1392
    %v1447 = vunpack.c.h.b16 %v1392
    %v1448 = vunpack.c.l.b16 %v1393
    %v1449 = vunpack.c.h.b16 %v1393
    %v1450 = vunpack.c.l.b16 %v1394
    %v1451 = vunpack.c.h.b16 %v1394
    %v1452 = vunpack.c.l.b16 %v1395
    %v1453 = vunpack.c.h.b16 %v1395
    %v1454 = vunpack.c.l.b16 %v1396
    %v1455 = vunpack.c.h.b16 %v1396
    %v1456 = vunpack.c.l.b16 %v1397
    %v1457 = vunpack.c.h.b16 %v1397
    %v1458 = vunpack.c.l.b16 %v1398
    %v1459 = vunpack.c.h.b16 %v1398
    %v1460 = vpack.c.b16 %v1430, %v1428
    %v1461 = vpack.c.b16 %v1431, %v1429
    %v1462 = vpack.c.b16 %v1434, %v1432
    %v1463 = vpack.c.b16 %v1435, %v1433
    %v1464 = vpack.c.b16 %v1438, %v1436
    %v1465 = vpack.c.b16 %v1439, %v1437
    %v1466 = vpack.c.b16 %v1442, %v1440
    %v1467 = vpack.c.b16 %v1443, %v1441
    %v1468 = vpack.c.b16 %v1446, %v1444
    %v1469 = vpack.c.b16 %v1447, %v1445
    %v1470 = vpack.c.b16 %v1450, %v1448
    %v1471 = vpack.c.b16 %v1451, %v1449
    %v1472 = vpack.c.b16 %v1454, %v1452
    %v1473 = vpack.c.b16 %v1455, %v1453
    %v1474 = vpack.c.b16 %v1458, %v1456
    %v1475 = vpack.c.b16 %v1459, %v1457
    %1492 = vmatprep.subr.bf16.mxu0 %v1475
    %1493 = vmatpush1.bf16.msra.mxu0 %v1474
    %1494 = vmatprep.subr.bf16.mxu0 %v1473
    %1495 = vmatpush1.bf16.msra.mxu0 %v1472
    %1496 = vmatprep.subr.bf16.mxu0 %v1471
    %1497 = vmatpush1.bf16.msra.mxu0 %v1470
    %1498 = vmatprep.subr.bf16.mxu0 %v1469
    %1499 = vmatpush1.bf16.msra.mxu0 %v1468
    %1500 = vmatprep.subr.bf16.mxu0 %v1467
    %1501 = vmatpush1.bf16.msra.mxu0 %v1466
    %1502 = vmatprep.subr.bf16.mxu0 %v1465
    %1503 = vmatpush1.bf16.msra.mxu0 %v1464
    %1504 = vmatprep.subr.bf16.mxu0 %v1463
    %1505 = vmatpush1.bf16.msra.mxu0 %v1462
    %1506 = vmatprep.subr.bf16.mxu0 %v1461
    %1507 = vmatpush1.bf16.msra.mxu0 %v1460
    %1508 = vmatprep.subr.bf16.mxu0 0
    %1509 = vmatpush2.bf16.msra.mxu0 0
    %1510 = vmatprep.subr.bf16.mxu0 0
    %1511 = vmatpush2.bf16.msra.mxu0 0
    %1512 = vmatprep.subr.bf16.mxu0 0
    %1513 = vmatpush2.bf16.msra.mxu0 0
    %1514 = vmatprep.subr.bf16.mxu0 0
    %1515 = vmatpush2.bf16.msra.mxu0 0
    %1516 = vmatprep.subr.bf16.mxu0 0
    %1517 = vmatpush2.bf16.msra.mxu0 0
    %1518 = vmatprep.subr.bf16.mxu0 0
    %1519 = vmatpush2.bf16.msra.mxu0 0
    %1520 = vmatprep.subr.bf16.mxu0 0
    %1521 = vmatpush2.bf16.msra.mxu0 0
    %1522 = vmatprep.subr.bf16.mxu0 0
    %1523 = vmatpush2.bf16.msra.mxu0 0
    %1524 = vmatprep.mubr.bf16.mxu0 0
    %1525 = vmatmul.mubr.bf16.gmra.mxu0 %v1381
    %v1526 = vpop.f32.mrf.mxu0
    %v1527 = vadd.f32 %v1405, %v1526
    %v1528 = vpop.f32.mrf.mxu0
    %v1529 = vadd.f32 %v1409, %v1528
    %v1530 = vpop.f32.mrf.mxu0
    %v1531 = vadd.f32 %v1405, %v1530
    %v1532 = vpop.f32.mrf.mxu0
    %v1533 = vadd.f32 %v1409, %v1532
    %1534 = vdwg.mxu0
    %v1535 = vxor.u32 %v1529, 2147483648
    %v1536 = vxor.u32 %v1533, 2147483648
    %v1537 = vmul.f32 %v1535, 1.442695
    %v1538 = vpow.pop %v1537
    %v1539 = vmul.f32 %v1536, 1.442695
    %v1540 = vpow.pop %v1539
    %v1541 = vadd.f32 %v1538, 1.0
    %v1542 = vadd.f32 %v1540, 1.0
    %v1543 = vrcp.pop %v1541
    %v1544 = vmul.f32 1.0, %v1543
    %v1545 = vrcp.pop %v1542
    %v1546 = vmul.f32 1.0, %v1545
    %v1547 = vmul.f32 %v1527, %v1544
    %v1548 = vmul.f32 %v1531, %v1546
    %v1549 = vadd.f32 %v1547, %v1219
    %v1550 = vadd.f32 %v1548, %v1220
    %1551 = vadd.xlane.f32.xlu0 %v1549
    %v1552 = vpop.xlane.xlu0 %1551
    %1553 = vadd.xlane.f32.xlu0 %v1550
    %v1554 = vpop.xlane.xlu0 %1553
    %v1555 = vmul.f32 %v1552, %v440
    %v1556 = vmul.f32 %v1554, %v440
    %v1557 = vsub.f32 %v1549, %v1555
    %v1558 = vsub.f32 %v1550, %v1556
    %v1559 = vmul.f32 %v1557, %v1557
    %v1560 = vmul.f32 %v1558, %v1558
    %1561 = vadd.xlane.f32.xlu0 %v1559
    %v1562 = vpop.xlane.xlu0 %1561
    %1563 = vadd.xlane.f32.xlu0 %v1560
    %v1564 = vpop.xlane.xlu0 %1563
    %v1565 = vmul.f32 %v1562, %v440
    %v1566 = vmul.f32 %v1564, %v440
    %v1567 = vadd.f32 %v1565, 1e-05
    %v1568 = vadd.f32 %v1566, 1e-05
    %v1569 = vrsqrt.pop %v1567
    %v1570 = vrsqrt.pop %v1568
    %v1571 = vmul.f32 %v1557, %v1569
    %v1572 = vmul.f32 %v1558, %v1570
    %s1573 = scalar_lea.vmem %s4, 3
    %v1574 = vld [vmem:[%s1573] sm:$0x1]
    %v1576 = vlaneseq
    %v1577 = vshrl.u32 %v1576, 7
    %v1578 = vsub.s32 0, %v1577
    %v1579 = vrot.slane %v1574, %v1578
    %v1581 = vmul.f32 %v1571, %v1579
    %v1582 = vmul.f32 %v1572, %v1579
    %s1583 = scalar_lea.vmem %s5, 3
    %v1584 = vld [vmem:[%s1583] sm:$0x1]
    %v1586 = vlaneseq
    %v1587 = vshrl.u32 %v1586, 7
    %v1588 = vsub.s32 0, %v1587
    %v1589 = vrot.slane %v1584, %v1588
    %v1591 = vadd.f32 %v1581, %v1589
    %v1592 = vadd.f32 %v1582, %v1589
    %v1593 = vrot.slane %v1591, 4
    %v1594 = vadd.f32 %v1591, %v1593
    %v1595 = vrot.slane %v1594, 2
    %v1596 = vadd.f32 %v1594, %v1595
    %v1597 = vrot.slane %v1596, 1
    %v1598 = vadd.f32 %v1596, %v1597
    %v1599 = vrcp.pop 8.0
    %v1600 = vmul.f32 %v1598, %v1599
    %v1601 = vrot.slane %v1592, 4
    %v1602 = vadd.f32 %v1592, %v1601
    %v1603 = vrot.slane %v1602, 2
    %v1604 = vadd.f32 %v1602, %v1603
    %v1605 = vrot.slane %v1604, 1
    %v1606 = vadd.f32 %v1604, %v1605
    %v1607 = vmul.f32 %v1606, %v1599
    %vm1608 = vcmask 1040384
    %v1609 = vsel %vm1608, %v1600, %v1607
    %v1610 = vld [vmem:[%s6] sm:$0xff]
    %v1611 = vld [vmem:[%s6 + $0x8] sm:$0xff]
    %v1612 = vld [vmem:[%s6 + $0x10] sm:$0xff]
    %v1613 = vld [vmem:[%s6 + $0x18] sm:$0xff]
    %v1614 = vld [vmem:[%s6 + $0x20] sm:$0xff]
    %v1615 = vld [vmem:[%s6 + $0x28] sm:$0xff]
    %v1616 = vld [vmem:[%s6 + $0x30] sm:$0xff]
    %v1617 = vld [vmem:[%s6 + $0x38] sm:$0xff]
    %v1618 = vld [vmem:[%s6 + $0x40] sm:$0xff]
    %v1619 = vld [vmem:[%s6 + $0x48] sm:$0xff]
    %v1620 = vld [vmem:[%s6 + $0x50] sm:$0xff]
    %v1621 = vld [vmem:[%s6 + $0x58] sm:$0xff]
    %v1622 = vld [vmem:[%s6 + $0x60] sm:$0xff]
    %v1623 = vld [vmem:[%s6 + $0x68] sm:$0xff]
    %v1624 = vld [vmem:[%s6 + $0x70] sm:$0xff]
    %v1625 = vld [vmem:[%s6 + $0x78] sm:$0xff]
    %v1626 = vld [vmem:[%s7] sm:$0x1]
    %v1628 = vlaneseq
    %v1629 = vshrl.u32 %v1628, 7
    %v1630 = vsub.s32 0, %v1629
    %v1631 = vrot.slane %v1626, %v1630
    %1633 = vmatprep.subr.mxu0 0.0
    %1634 = vmatpush1.msra.mxu0 %v1625
    %1635 = vmatprep.subr.mxu0 0.0
    %1636 = vmatpush1.msra.mxu0 %v1624
    %1637 = vmatprep.subr.mxu0 0.0
    %1638 = vmatpush1.msra.mxu0 %v1623
    %1639 = vmatprep.subr.mxu0 0.0
    %1640 = vmatpush1.msra.mxu0 %v1622
    %1641 = vmatprep.subr.mxu0 0.0
    %1642 = vmatpush1.msra.mxu0 %v1621
    %1643 = vmatprep.subr.mxu0 0.0
    %1644 = vmatpush1.msra.mxu0 %v1620
    %1645 = vmatprep.subr.mxu0 0.0
    %1646 = vmatpush1.msra.mxu0 %v1619
    %1647 = vmatprep.subr.mxu0 0.0
    %1648 = vmatpush1.msra.mxu0 %v1618
    %1649 = vmatprep.subr.mxu0 0.0
    %1650 = vmatpush1.msra.mxu0 %v1617
    %1651 = vmatprep.subr.mxu0 0.0
    %1652 = vmatpush1.msra.mxu0 %v1616
    %1653 = vmatprep.subr.mxu0 0.0
    %1654 = vmatpush1.msra.mxu0 %v1615
    %1655 = vmatprep.subr.mxu0 0.0
    %1656 = vmatpush1.msra.mxu0 %v1614
    %1657 = vmatprep.subr.mxu0 0.0
    %1658 = vmatpush1.msra.mxu0 %v1613
    %1659 = vmatprep.subr.mxu0 0.0
    %1660 = vmatpush1.msra.mxu0 %v1612
    %1661 = vmatprep.subr.mxu0 0.0
    %1662 = vmatpush1.msra.mxu0 %v1611
    %1663 = vmatprep.subr.mxu0 0.0
    %1664 = vmatpush1.msra.mxu0 %v1610
    %1665 = vmatprep.subr.mxu0 0.0
    %1666 = vmatpush2.msra.mxu0 0.0
    %1667 = vmatprep.subr.mxu0 0.0
    %1668 = vmatpush2.msra.mxu0 0.0
    %1669 = vmatprep.subr.mxu0 0.0
    %1670 = vmatpush2.msra.mxu0 0.0
    %1671 = vmatprep.subr.mxu0 0.0
    %1672 = vmatpush2.msra.mxu0 0.0
    %1673 = vmatprep.subr.mxu0 0.0
    %1674 = vmatpush2.msra.mxu0 0.0
    %1675 = vmatprep.subr.mxu0 0.0
    %1676 = vmatpush2.msra.mxu0 0.0
    %1677 = vmatprep.subr.mxu0 0.0
    %1678 = vmatpush2.msra.mxu0 0.0
    %1679 = vmatprep.subr.mxu0 0.0
    %1680 = vmatpush2.msra.mxu0 0.0
    %1681 = vmatprep.subr.mxu0 0.0
    %1682 = vmatpush2.msra.mxu0 0.0
    %1683 = vmatprep.subr.mxu0 0.0
    %1684 = vmatpush2.msra.mxu0 0.0
    %1685 = vmatprep.subr.mxu0 0.0
    %1686 = vmatpush2.msra.mxu0 0.0
    %1687 = vmatprep.subr.mxu0 0.0
    %1688 = vmatpush2.msra.mxu0 0.0
    %1689 = vmatprep.subr.mxu0 0.0
    %1690 = vmatpush2.msra.mxu0 0.0
    %1691 = vmatprep.subr.mxu0 0.0
    %1692 = vmatpush2.msra.mxu0 0.0
    %1693 = vmatprep.subr.mxu0 0.0
    %1694 = vmatpush2.msra.mxu0 0.0
    %1695 = vmatprep.subr.mxu0 0.0
    %1696 = vmatpush2.msra.mxu0 0.0
    %1697 = vmatprep.mubr.f32.mxu0 0.0
    %1698 = vmatmul.mubr.f32.gmra.mxu0 %v1609
    %v1699 = vpop.f32.mrf.mxu0
    %v1700 = vadd.f32 %v1631, %v1699
    %v1701 = vpop.f32.mrf.mxu0
    %1702 = vdwg.mxu0
    %vm1703 = vcmask 74752
    %1704 = vst.msk [vmem:[#allocation2] sm:$0x3] %vm1703, %v1700
    // Predicated region
    $region34: #{s4model_forward.5} parent=1 // pred_check
      _
    $region35: #{s4model_forward.5} parent=1 // pred_check_branch
      %1706 = sbr.rel (0) target = $region37
    $region36: #{s4model_forward.5} parent=1 // pred_region
      %s1708 = ssub.s32 32, 32
      %1709 = vsyncadd [#allocation3], %s1708
      %s1711 = sshll.u32 [#allocation2], 4
      %s1712 = int_to_ptr.vmem [resolvable:$true] %s1711
      %1714 = dma.vmem_to_hbm [thread:$0]  %s1712, 32, %s8, [#allocation3]
    $region37: #{s4model_forward.5} parent=1 // pred_fallthru
      _
    // Predicated region
    $region38: #{s4model_forward.5} parent=1 // pred_check
      _
    $region39: #{s4model_forward.5} parent=1 // pred_check_branch
      %1716 = sbr.rel (0) target = $region41
    $region40: #{s4model_forward.5} parent=1 // pred_region
      %1717 = dma.done [#allocation3], 32
    $region41: #{s4model_forward.5} parent=1 // pred_fallthru
      _
    %1718 = vsyncpa [#allocation3], 1

</llo_original>
